<compile_context>
chip_gen: v5e
topology: v5e:2x2
jax: 0.10.0
libtpu: 0.0.40
codegen_flags: <defaults>
</compile_context>

<pallas_src>
import numpy as np
import jax
import jax.numpy as jnp
from jax.experimental import pallas as pl
from jax.experimental.pallas import tpu as pltpu

INPUT_SIZE = 14      # len(features)
HIDDEN_SIZE = 128
NUM_LAYERS = 2
NUM_CLASSES = 2
MAX_BATCH_TILE = 256  # rows per grid step / per MXU push for large batches


def gru_kernel(gi0_ref,   # (T, BT, 3H) f32  precomputed x @ Wih0^T + (b_ih0 + b_hh0[r,z])
               wbig_ref,  # (H, 7H)     bf16 skew-fused RHS: [whh0^T | w1f_h0rows]
               w1h1_ref,  # (H, 4H)     bf16 w1f_h1rows
               bhn0_ref,  # (1, H)      f32  b_hh0_n
               b1_ref,    # (1, 4H)     f32  [bih1+bhh1 (r,z), bih1_n, bhh1_n]
               h1_ref):   # (BT, H)     f32  layer-1 hidden state at the last timestep
    H = HIDDEN_SIZE
    T = gi0_ref.shape[0]
    BT = h1_ref.shape[0]
    bf16 = jnp.bfloat16

    # Tiny biases hoisted once (a few vregs); big weights read at point of use.
    bhn0 = bhn0_ref[...]          # (1, H)
    b1 = b1_ref[...]              # (1, 4H)

    def step(t, carry):
        h0_prev, h1_prev, gh0_t = carry

        # ---------------- layer 0, step t (elementwise only; gi0 precomputed) ------------
        gi0_t = gi0_ref[t]                                              # (BT, 3H) f32
        r0 = jax.nn.sigmoid(gi0_t[:, 0:H] + gh0_t[:, 0:H])
        z0 = jax.nn.sigmoid(gi0_t[:, H:2 * H] + gh0_t[:, H:2 * H])
        n0 = jnp.tanh(gi0_t[:, 2 * H:3 * H] + r0 * (gh0_t[:, 2 * H:3 * H] + bhn0))
        h0_t = (1.0 - z0) * n0 + z0 * h0_prev                           # (BT, H) f32

        # ------------- skew-fused MXU push: the ONLY matmul on the h0 chain --------------
        # cols [0:3H]  -> gh0(t+1) = h0(t) @ whh0^T
        # cols [3H:7H] -> layer-1 h0-contribution to g1(t)  ([r|z|gi_n|0] layout)
        p0 = jnp.dot(h0_t.astype(bf16), wbig_ref[...],
                     preferred_element_type=jnp.float32)                # (BT, 7H) f32
        # layer-1 h1-contribution: depends only on h1(t-1) -> off the h0 critical chain.
        p1 = jnp.dot(h1_prev.astype(bf16), w1h1_ref[...],
                     preferred_element_type=jnp.float32)                # (BT, 4H) f32

        gh0_next = p0[:, 0:3 * H]                                       # lane-aligned slice
        g1 = p0[:, 3 * H:7 * H] + p1 + b1                               # (BT, 4H) f32

        # ---------------- layer 1, step t (elementwise) ----------------
        # g1 columns: [0:2H] = r/z pre-acts (gi+gh+b), [2H:3H] = gi_n+b_in, [3H:4H] = gh_n+b_hn
        r1 = jax.nn.sigmoid(g1[:, 0:H])
        z1 = jax.nn.sigmoid(g1[:, H:2 * H])
        n1 = jnp.tanh(g1[:, 2 * H:3 * H] + r1 * g1[:, 3 * H:4 * H])
        h1_t = (1.0 - z1) * n1 + z1 * h1_prev                           # (BT, H) f32

        return (h0_t, h1_t, gh0_next)

    zeros_h = jnp.zeros((BT, H), jnp.float32)
    # h0_init = 0  =>  gh0(0) = 0: no prologue matmul needed.
    carry0 = (zeros_h, zeros_h, jnp.zeros((BT, 3 * H), jnp.float32))
    # T is static (=8): fully unroll so the scheduler overlaps p1 / EUP / VPU with the MXU chain.
    _, h1_last, _ = jax.lax.fori_loop(0, T, step, carry0, unroll=True)

    h1_ref[...] = h1_last


def init_params(key):
    """Deterministic PyTorch-style init: U(-1/sqrt(H), 1/sqrt(H))."""
    H, I, C = HIDDEN_SIZE, INPUT_SIZE, NUM_CLASSES
    bound = 1.0 / float(H) ** 0.5
    keys = jax.random.split(key, 10)

    def u(k, shape):
        return jax.random.uniform(k, shape, jnp.float32, -bound, bound)

    wih0 = u(keys[0], (3 * H, I))
    whh0 = u(keys[1], (3 * H, H))
    bih0 = u(keys[2], (3 * H,))
    bhh0 = u(keys[3], (3 * H,))
    wih1 = u(keys[4], (3 * H, H))
    whh1 = u(keys[5], (3 * H, H))
    bih1 = u(keys[6], (3 * H,))
    bhh1 = u(keys[7], (3 * H,))
    fcw = u(keys[8], (C, H))
    fcb = u(keys[9], (C,))
    return (wih0, whh0, bih0, bhh0, wih1, whh1, bih1, bhh1, fcw, fcb)


def gru_model_forward(x, params):
    """x: (B, T, INPUT_SIZE) batch_first, like the PyTorch module. Returns (B, NUM_CLASSES)."""
    B, T, I = x.shape
    assert I == INPUT_SIZE
    H, C = HIDDEN_SIZE, NUM_CLASSES
    f32, bf16 = jnp.float32, jnp.bfloat16
    hp = jax.lax.Precision.HIGHEST

    (wih0, whh0, bih0, bhh0, wih1, whh1, bih1, bhh1, fcw, fcb) = params

    # --- batch tiling: pad B to the f32 sublane tile (8); cap a tile at MAX_BATCH_TILE rows ---
    if B <= MAX_BATCH_TILE:
        BP = ((B + 7) // 8) * 8
        BT = BP
    else:
        BT = MAX_BATCH_TILE
        BP = ((B + BT - 1) // BT) * BT
    num_tiles = BP // BT

    # --- layer-0 input projection in the wrapper (off the recurrent critical path, K=14) ---
    b0 = bih0 + jnp.concatenate([bhh0[:2 * H], jnp.zeros((H,), f32)])   # fold b_hh0 r/z thirds
    x_tm = jnp.transpose(x, (1, 0, 2)).astype(f32)                      # (T, B, I) time-major
    x_tm = jnp.pad(x_tm, ((0, 0), (0, BP - B), (0, 0)))                 # (T, BP, I)
    gi0 = jnp.dot(x_tm, wih0.T, precision=hp) + b0                      # (T, BP, 3H) f32

    bhn0 = bhh0[2 * H:][None, :].astype(f32)                            # (1, H)

    # --- layer-1 fused weight split into row halves (h0 rows / h1 rows).  The n-gate uses a
    # block-diagonal column layout so gi_n and gh_n stay separate, as required by PyTorch's
    # n = tanh(gi_n + b_in + r * (gh_n + b_hn)). ---
    wih1_T = wih1.T.astype(f32)                                         # (H, 3H)
    whh1_T = whh1.T.astype(f32)                                         # (H, 3H)
    zeros_hh = jnp.zeros((H, H), f32)
    w1f_h0 = jnp.concatenate([wih1_T[:, :2 * H], wih1_T[:, 2 * H:], zeros_hh], axis=1)  # (H, 4H)
    w1f_h1 = jnp.concatenate([whh1_T[:, :2 * H], zeros_hh, whh1_T[:, 2 * H:]], axis=1)  # (H, 4H)

    # --- skew-fused RHS: one push yields gh0(t+1) AND layer-1's h0 contribution to g1(t) ---
    wbig = jnp.concatenate([whh0.T.astype(f32), w1f_h0], axis=1).astype(bf16)   # (H, 7H) = (128, 896)
    w1h1 = w1f_h1.astype(bf16)                                                   # (H, 4H) = (128, 512)

    b1 = jnp.concatenate([(bih1 + bhh1)[:2 * H], bih1[2 * H:], bhh1[2 * H:]])[None, :]  # (1, 4H)

    h1_last = pl.pallas_call(
        gru_kernel,
        out_shape=jax.ShapeDtypeStruct((BP, H), jnp.float32),
        grid=(num_tiles,),
        in_specs=[
            pl.BlockSpec((T, BT, 3 * H), lambda b: (0, b, 0)),   # per-tile activations
            pl.BlockSpec((H, 7 * H), lambda b: (0, 0)),          # weights resident across tiles
            pl.BlockSpec((H, 4 * H), lambda b: (0, 0)),
            pl.BlockSpec((1, H), lambda b: (0, 0)),
            pl.BlockSpec((1, 4 * H), lambda b: (0, 0)),
        ],
        out_specs=pl.BlockSpec((BT, H), lambda b: (b, 0)),       # lane-dense (BT, 128) store
        compiler_params=pltpu.CompilerParams(
            dimension_semantics=("parallel",)),                  # v7x: both TCs on batch tiles
    )(gi0, wbig, w1h1, bhn0, b1)

    # --- FC head on the last timestep's top-layer hidden state (in XLA; 2 output lanes) ---
    return jnp.dot(h1_last[:B], fcw.T, precision=hp) + fcb


def gru_model_reference(x, params):
    """Pure-JAX f32 reference with PyTorch GRU semantics (gate order [r, z, n])."""
    (wih0, whh0, bih0, bhh0, wih1, whh1, bih1, bhh1, fcw, fcb) = params
    B, T, _ = x.shape
    H = HIDDEN_SIZE
    hp = jax.lax.Precision.HIGHEST

    def cell(x_t, h, wih, whh, bih, bhh):
        gi = jnp.dot(x_t, wih.T, precision=hp) + bih
        gh = jnp.dot(h, whh.T, precision=hp) + bhh
        r = jax.nn.sigmoid(gi[:, :H] + gh[:, :H])
        z = jax.nn.sigmoid(gi[:, H:2 * H] + gh[:, H:2 * H])
        n = jnp.tanh(gi[:, 2 * H:] + r * gh[:, 2 * H:])
        return (1.0 - z) * n + z * h

    h0 = jnp.zeros((B, H), jnp.float32)
    h1 = jnp.zeros((B, H), jnp.float32)
    for t in range(T):
        h0 = cell(x[:, t, :], h0, wih0, whh0, bih0, bhh0)
        h1 = cell(h0, h1, wih1, whh1, bih1, bhh1)
    return jnp.dot(h1, fcw.T, precision=hp) + fcb


if __name__ == "__main__":
    key = jax.random.PRNGKey(0)
    pkey, xkey = jax.random.split(key)

    params = init_params(pkey)

    B, T = 2, 8
    x = jax.random.normal(xkey, (B, T, INPUT_SIZE), jnp.float32)

    out = gru_model_forward(x, params)
    jax.block_until_ready(out)

    assert out.shape == (B, NUM_CLASSES)
    assert out.dtype == jnp.float32

    # Numerical check vs. pure-JAX f32 reference (tolerance covers bf16 MXU operands).
    ref = gru_model_reference(x, params)
    np.testing.assert_allclose(np.asarray(out), np.asarray(ref), atol=5e-2, rtol=5e-2)

    print("KERNEL_OK")
</pallas_src>

<mosaic_0001>
module attributes {stable_mosaic.version = 11 : i64} {
  func.func @gru_kernel(%arg0: i32, %arg1: memref<8x8x384xf32, #tpu.memory_space<vmem>>, %arg2: memref<128x896xbf16, #tpu.memory_space<vmem>>, %arg3: memref<128x512xbf16, #tpu.memory_space<vmem>>, %arg4: memref<1x128xf32, #tpu.memory_space<vmem>>, %arg5: memref<1x512xf32, #tpu.memory_space<vmem>>, %arg6: memref<8x128xf32, #tpu.memory_space<vmem>>) attributes {dimension_semantics = [#tpu.dimension_semantics<parallel>], iteration_bounds = array<i64: 1>, scalar_prefetch = 0 : i64, scratch_operands = 0 : i64, tpu.core_type = #tpu.core_type<tc>, window_params = [{transform_indices = @transform_0, window_bounds = array<i64: 8, 8, 384>}, {pipeline_mode = #tpu.pipeline_mode<synchronous>, transform_indices = @transform_1, window_bounds = array<i64: 128, 896>}, {pipeline_mode = #tpu.pipeline_mode<synchronous>, transform_indices = @transform_2, window_bounds = array<i64: 128, 512>}, {pipeline_mode = #tpu.pipeline_mode<synchronous>, transform_indices = @transform_3, window_bounds = array<i64: 1, 128>}, {pipeline_mode = #tpu.pipeline_mode<synchronous>, transform_indices = @transform_4, window_bounds = array<i64: 1, 512>}, {transform_indices = @transform_5, window_bounds = array<i64: 8, 128>}]} {
    %c0 = arith.constant 0 : index
    %c0_0 = arith.constant 0 : index
    %0 = vector.load %arg4[%c0, %c0_0] : memref<1x128xf32, #tpu.memory_space<vmem>>, vector<1x128xf32>
    %c0_1 = arith.constant 0 : index
    %c0_2 = arith.constant 0 : index
    %1 = vector.load %arg5[%c0_1, %c0_2] : memref<1x512xf32, #tpu.memory_space<vmem>>, vector<1x512xf32>
    %cst = arith.constant 0.000000e+00 : f32
    %2 = vector.broadcast %cst : f32 to vector<8x128xf32>
    %cst_3 = arith.constant 0.000000e+00 : f32
    %3 = vector.broadcast %cst_3 : f32 to vector<8x384xf32>
    %c0_i32 = arith.constant 0 : i32
    %4 = arith.index_cast %c0_i32 : i32 to index
    %c0_4 = arith.constant 0 : index
    %c0_5 = arith.constant 0 : index
    %5 = vector.load %arg1[%4, %c0_4, %c0_5] : memref<8x8x384xf32, #tpu.memory_space<vmem>>, vector<1x8x384xf32>
    %6 = vector.shape_cast %5 : vector<1x8x384xf32> to vector<8x384xf32>
    %7 = vector.extract_strided_slice %6 {offsets = [0, 0], sizes = [8, 128], strides = [1, 1]} : vector<8x384xf32> to vector<8x128xf32>
    %8 = vector.extract_strided_slice %3 {offsets = [0, 0], sizes = [8, 128], strides = [1, 1]} : vector<8x384xf32> to vector<8x128xf32>
    %9 = arith.addf %7, %8 : vector<8x128xf32>
    %10 = arith.negf %9 : vector<8x128xf32>
    %11 = math.exp %10 : vector<8x128xf32>
    %cst_6 = arith.constant 1.000000e+00 : f32
    %12 = vector.broadcast %cst_6 : f32 to vector<8x128xf32>
    %13 = arith.addf %12, %11 : vector<8x128xf32>
    %14 = arith.divf %12, %13 : vector<8x128xf32>
    %15 = vector.extract_strided_slice %6 {offsets = [0, 128], sizes = [8, 128], strides = [1, 1]} : vector<8x384xf32> to vector<8x128xf32>
    %16 = vector.extract_strided_slice %3 {offsets = [0, 128], sizes = [8, 128], strides = [1, 1]} : vector<8x384xf32> to vector<8x128xf32>
    %17 = arith.addf %15, %16 : vector<8x128xf32>
    %18 = arith.negf %17 : vector<8x128xf32>
    %19 = math.exp %18 : vector<8x128xf32>
    %cst_7 = arith.constant 1.000000e+00 : f32
    %20 = vector.broadcast %cst_7 : f32 to vector<8x128xf32>
    %21 = arith.addf %20, %19 : vector<8x128xf32>
    %22 = arith.divf %20, %21 : vector<8x128xf32>
    %23 = vector.extract_strided_slice %6 {offsets = [0, 256], sizes = [8, 128], strides = [1, 1]} : vector<8x384xf32> to vector<8x128xf32>
    %24 = vector.extract_strided_slice %3 {offsets = [0, 256], sizes = [8, 128], strides = [1, 1]} : vector<8x384xf32> to vector<8x128xf32>
    %25 = vector.broadcast %0 : vector<1x128xf32> to vector<8x128xf32>
    %26 = arith.addf %24, %25 : vector<8x128xf32>
    %27 = arith.mulf %14, %26 : vector<8x128xf32>
    %28 = arith.addf %23, %27 : vector<8x128xf32>
    %29 = math.tanh %28 : vector<8x128xf32>
    %cst_8 = arith.constant 1.000000e+00 : f32
    %30 = vector.broadcast %cst_8 : f32 to vector<8x128xf32>
    %31 = arith.subf %30, %22 : vector<8x128xf32>
    %32 = arith.mulf %31, %29 : vector<8x128xf32>
    %33 = arith.mulf %22, %2 : vector<8x128xf32>
    %34 = arith.addf %32, %33 : vector<8x128xf32>
    %35 = arith.truncf %34 : vector<8x128xf32> to vector<8x128xbf16>
    %c0_9 = arith.constant 0 : index
    %c0_10 = arith.constant 0 : index
    %36 = vector.load %arg2[%c0_9, %c0_10] : memref<128x896xbf16, #tpu.memory_space<vmem>>, vector<128x896xbf16>
    %cst_11 = arith.constant dense<0.000000e+00> : vector<8x896xf32>
    %37 = tpu.matmul %35, %36, %cst_11 {dimension_numbers = #tpu.dot_dimension_numbers<[1], [0], [0], [1], [0, 0, 1, 1], [], []>} : vector<8x128xbf16>, vector<128x896xbf16>, vector<8x896xf32> -> vector<8x896xf32>
    %38 = arith.truncf %2 : vector<8x128xf32> to vector<8x128xbf16>
    %c0_12 = arith.constant 0 : index
    %c0_13 = arith.constant 0 : index
    %39 = vector.load %arg3[%c0_12, %c0_13] : memref<128x512xbf16, #tpu.memory_space<vmem>>, vector<128x512xbf16>
    %cst_14 = arith.constant dense<0.000000e+00> : vector<8x512xf32>
    %40 = tpu.matmul %38, %39, %cst_14 {dimension_numbers = #tpu.dot_dimension_numbers<[1], [0], [0], [1], [0, 0, 1, 1], [], []>} : vector<8x128xbf16>, vector<128x512xbf16>, vector<8x512xf32> -> vector<8x512xf32>
    %41 = vector.extract_strided_slice %37 {offsets = [0, 0], sizes = [8, 384], strides = [1, 1]} : vector<8x896xf32> to vector<8x384xf32>
    %42 = vector.extract_strided_slice %37 {offsets = [0, 384], sizes = [8, 512], strides = [1, 1]} : vector<8x896xf32> to vector<8x512xf32>
    %43 = arith.addf %42, %40 : vector<8x512xf32>
    %44 = vector.broadcast %1 : vector<1x512xf32> to vector<8x512xf32>
    %45 = arith.addf %43, %44 : vector<8x512xf32>
    %46 = vector.extract_strided_slice %45 {offsets = [0, 0], sizes = [8, 128], strides = [1, 1]} : vector<8x512xf32> to vector<8x128xf32>
    %47 = arith.negf %46 : vector<8x128xf32>
    %48 = math.exp %47 : vector<8x128xf32>
    %cst_15 = arith.constant 1.000000e+00 : f32
    %49 = vector.broadcast %cst_15 : f32 to vector<8x128xf32>
    %50 = arith.addf %49, %48 : vector<8x128xf32>
    %51 = arith.divf %49, %50 : vector<8x128xf32>
    %52 = vector.extract_strided_slice %45 {offsets = [0, 128], sizes = [8, 128], strides = [1, 1]} : vector<8x512xf32> to vector<8x128xf32>
    %53 = arith.negf %52 : vector<8x128xf32>
    %54 = math.exp %53 : vector<8x128xf32>
    %cst_16 = arith.constant 1.000000e+00 : f32
    %55 = vector.broadcast %cst_16 : f32 to vector<8x128xf32>
    %56 = arith.addf %55, %54 : vector<8x128xf32>
    %57 = arith.divf %55, %56 : vector<8x128xf32>
    %58 = vector.extract_strided_slice %45 {offsets = [0, 256], sizes = [8, 128], strides = [1, 1]} : vector<8x512xf32> to vector<8x128xf32>
    %59 = vector.extract_strided_slice %45 {offsets = [0, 384], sizes = [8, 128], strides = [1, 1]} : vector<8x512xf32> to vector<8x128xf32>
    %60 = arith.mulf %51, %59 : vector<8x128xf32>
    %61 = arith.addf %58, %60 : vector<8x128xf32>
    %62 = math.tanh %61 : vector<8x128xf32>
    %cst_17 = arith.constant 1.000000e+00 : f32
    %63 = vector.broadcast %cst_17 : f32 to vector<8x128xf32>
    %64 = arith.subf %63, %57 : vector<8x128xf32>
    %65 = arith.mulf %64, %62 : vector<8x128xf32>
    %66 = arith.mulf %57, %2 : vector<8x128xf32>
    %67 = arith.addf %65, %66 : vector<8x128xf32>
    %c1_i32 = arith.constant 1 : i32
    %68 = arith.index_cast %c1_i32 : i32 to index
    %c0_18 = arith.constant 0 : index
    %c0_19 = arith.constant 0 : index
    %69 = vector.load %arg1[%68, %c0_18, %c0_19] : memref<8x8x384xf32, #tpu.memory_space<vmem>>, vector<1x8x384xf32>
    %70 = vector.shape_cast %69 : vector<1x8x384xf32> to vector<8x384xf32>
    %71 = vector.extract_strided_slice %70 {offsets = [0, 0], sizes = [8, 128], strides = [1, 1]} : vector<8x384xf32> to vector<8x128xf32>
    %72 = vector.extract_strided_slice %41 {offsets = [0, 0], sizes = [8, 128], strides = [1, 1]} : vector<8x384xf32> to vector<8x128xf32>
    %73 = arith.addf %71, %72 : vector<8x128xf32>
    %74 = arith.negf %73 : vector<8x128xf32>
    %75 = math.exp %74 : vector<8x128xf32>
    %cst_20 = arith.constant 1.000000e+00 : f32
    %76 = vector.broadcast %cst_20 : f32 to vector<8x128xf32>
    %77 = arith.addf %76, %75 : vector<8x128xf32>
    %78 = arith.divf %76, %77 : vector<8x128xf32>
    %79 = vector.extract_strided_slice %70 {offsets = [0, 128], sizes = [8, 128], strides = [1, 1]} : vector<8x384xf32> to vector<8x128xf32>
    %80 = vector.extract_strided_slice %41 {offsets = [0, 128], sizes = [8, 128], strides = [1, 1]} : vector<8x384xf32> to vector<8x128xf32>
    %81 = arith.addf %79, %80 : vector<8x128xf32>
    %82 = arith.negf %81 : vector<8x128xf32>
    %83 = math.exp %82 : vector<8x128xf32>
    %cst_21 = arith.constant 1.000000e+00 : f32
    %84 = vector.broadcast %cst_21 : f32 to vector<8x128xf32>
    %85 = arith.addf %84, %83 : vector<8x128xf32>
    %86 = arith.divf %84, %85 : vector<8x128xf32>
    %87 = vector.extract_strided_slice %70 {offsets = [0, 256], sizes = [8, 128], strides = [1, 1]} : vector<8x384xf32> to vector<8x128xf32>
    %88 = vector.extract_strided_slice %41 {offsets = [0, 256], sizes = [8, 128], strides = [1, 1]} : vector<8x384xf32> to vector<8x128xf32>
    %89 = vector.broadcast %0 : vector<1x128xf32> to vector<8x128xf32>
    %90 = arith.addf %88, %89 : vector<8x128xf32>
    %91 = arith.mulf %78, %90 : vector<8x128xf32>
    %92 = arith.addf %87, %91 : vector<8x128xf32>
    %93 = math.tanh %92 : vector<8x128xf32>
    %cst_22 = arith.constant 1.000000e+00 : f32
    %94 = vector.broadcast %cst_22 : f32 to vector<8x128xf32>
    %95 = arith.subf %94, %86 : vector<8x128xf32>
    %96 = arith.mulf %95, %93 : vector<8x128xf32>
    %97 = arith.mulf %86, %34 : vector<8x128xf32>
    %98 = arith.addf %96, %97 : vector<8x128xf32>
    %99 = arith.truncf %98 : vector<8x128xf32> to vector<8x128xbf16>
    %c0_23 = arith.constant 0 : index
    %c0_24 = arith.constant 0 : index
    %100 = vector.load %arg2[%c0_23, %c0_24] : memref<128x896xbf16, #tpu.memory_space<vmem>>, vector<128x896xbf16>
    %cst_25 = arith.constant dense<0.000000e+00> : vector<8x896xf32>
    %101 = tpu.matmul %99, %100, %cst_25 {dimension_numbers = #tpu.dot_dimension_numbers<[1], [0], [0], [1], [0, 0, 1, 1], [], []>} : vector<8x128xbf16>, vector<128x896xbf16>, vector<8x896xf32> -> vector<8x896xf32>
    %102 = arith.truncf %67 : vector<8x128xf32> to vector<8x128xbf16>
    %c0_26 = arith.constant 0 : index
    %c0_27 = arith.constant 0 : index
    %103 = vector.load %arg3[%c0_26, %c0_27] : memref<128x512xbf16, #tpu.memory_space<vmem>>, vector<128x512xbf16>
    %cst_28 = arith.constant dense<0.000000e+00> : vector<8x512xf32>
    %104 = tpu.matmul %102, %103, %cst_28 {dimension_numbers = #tpu.dot_dimension_numbers<[1], [0], [0], [1], [0, 0, 1, 1], [], []>} : vector<8x128xbf16>, vector<128x512xbf16>, vector<8x512xf32> -> vector<8x512xf32>
    %105 = vector.extract_strided_slice %101 {offsets = [0, 0], sizes = [8, 384], strides = [1, 1]} : vector<8x896xf32> to vector<8x384xf32>
    %106 = vector.extract_strided_slice %101 {offsets = [0, 384], sizes = [8, 512], strides = [1, 1]} : vector<8x896xf32> to vector<8x512xf32>
    %107 = arith.addf %106, %104 : vector<8x512xf32>
    %108 = vector.broadcast %1 : vector<1x512xf32> to vector<8x512xf32>
    %109 = arith.addf %107, %108 : vector<8x512xf32>
    %110 = vector.extract_strided_slice %109 {offsets = [0, 0], sizes = [8, 128], strides = [1, 1]} : vector<8x512xf32> to vector<8x128xf32>
    %111 = arith.negf %110 : vector<8x128xf32>
    %112 = math.exp %111 : vector<8x128xf32>
    %cst_29 = arith.constant 1.000000e+00 : f32
    %113 = vector.broadcast %cst_29 : f32 to vector<8x128xf32>
    %114 = arith.addf %113, %112 : vector<8x128xf32>
    %115 = arith.divf %113, %114 : vector<8x128xf32>
    %116 = vector.extract_strided_slice %109 {offsets = [0, 128], sizes = [8, 128], strides = [1, 1]} : vector<8x512xf32> to vector<8x128xf32>
    %117 = arith.negf %116 : vector<8x128xf32>
    %118 = math.exp %117 : vector<8x128xf32>
    %cst_30 = arith.constant 1.000000e+00 : f32
    %119 = vector.broadcast %cst_30 : f32 to vector<8x128xf32>
    %120 = arith.addf %119, %118 : vector<8x128xf32>
    %121 = arith.divf %119, %120 : vector<8x128xf32>
    %122 = vector.extract_strided_slice %109 {offsets = [0, 256], sizes = [8, 128], strides = [1, 1]} : vector<8x512xf32> to vector<8x128xf32>
    %123 = vector.extract_strided_slice %109 {offsets = [0, 384], sizes = [8, 128], strides = [1, 1]} : vector<8x512xf32> to vector<8x128xf32>
    %124 = arith.mulf %115, %123 : vector<8x128xf32>
    %125 = arith.addf %122, %124 : vector<8x128xf32>
    %126 = math.tanh %125 : vector<8x128xf32>
    %cst_31 = arith.constant 1.000000e+00 : f32
    %127 = vector.broadcast %cst_31 : f32 to vector<8x128xf32>
    %128 = arith.subf %127, %121 : vector<8x128xf32>
    %129 = arith.mulf %128, %126 : vector<8x128xf32>
    %130 = arith.mulf %121, %67 : vector<8x128xf32>
    %131 = arith.addf %129, %130 : vector<8x128xf32>
    %c2_i32 = arith.constant 2 : i32
    %132 = arith.index_cast %c2_i32 : i32 to index
    %c0_32 = arith.constant 0 : index
    %c0_33 = arith.constant 0 : index
    %133 = vector.load %arg1[%132, %c0_32, %c0_33] : memref<8x8x384xf32, #tpu.memory_space<vmem>>, vector<1x8x384xf32>
    %134 = vector.shape_cast %133 : vector<1x8x384xf32> to vector<8x384xf32>
    %135 = vector.extract_strided_slice %134 {offsets = [0, 0], sizes = [8, 128], strides = [1, 1]} : vector<8x384xf32> to vector<8x128xf32>
    %136 = vector.extract_strided_slice %105 {offsets = [0, 0], sizes = [8, 128], strides = [1, 1]} : vector<8x384xf32> to vector<8x128xf32>
    %137 = arith.addf %135, %136 : vector<8x128xf32>
    %138 = arith.negf %137 : vector<8x128xf32>
    %139 = math.exp %138 : vector<8x128xf32>
    %cst_34 = arith.constant 1.000000e+00 : f32
    %140 = vector.broadcast %cst_34 : f32 to vector<8x128xf32>
    %141 = arith.addf %140, %139 : vector<8x128xf32>
    %142 = arith.divf %140, %141 : vector<8x128xf32>
    %143 = vector.extract_strided_slice %134 {offsets = [0, 128], sizes = [8, 128], strides = [1, 1]} : vector<8x384xf32> to vector<8x128xf32>
    %144 = vector.extract_strided_slice %105 {offsets = [0, 128], sizes = [8, 128], strides = [1, 1]} : vector<8x384xf32> to vector<8x128xf32>
    %145 = arith.addf %143, %144 : vector<8x128xf32>
    %146 = arith.negf %145 : vector<8x128xf32>
    %147 = math.exp %146 : vector<8x128xf32>
    %cst_35 = arith.constant 1.000000e+00 : f32
    %148 = vector.broadcast %cst_35 : f32 to vector<8x128xf32>
    %149 = arith.addf %148, %147 : vector<8x128xf32>
    %150 = arith.divf %148, %149 : vector<8x128xf32>
    %151 = vector.extract_strided_slice %134 {offsets = [0, 256], sizes = [8, 128], strides = [1, 1]} : vector<8x384xf32> to vector<8x128xf32>
    %152 = vector.extract_strided_slice %105 {offsets = [0, 256], sizes = [8, 128], strides = [1, 1]} : vector<8x384xf32> to vector<8x128xf32>
    %153 = vector.broadcast %0 : vector<1x128xf32> to vector<8x128xf32>
    %154 = arith.addf %152, %153 : vector<8x128xf32>
    %155 = arith.mulf %142, %154 : vector<8x128xf32>
    %156 = arith.addf %151, %155 : vector<8x128xf32>
    %157 = math.tanh %156 : vector<8x128xf32>
    %cst_36 = arith.constant 1.000000e+00 : f32
    %158 = vector.broadcast %cst_36 : f32 to vector<8x128xf32>
    %159 = arith.subf %158, %150 : vector<8x128xf32>
    %160 = arith.mulf %159, %157 : vector<8x128xf32>
    %161 = arith.mulf %150, %98 : vector<8x128xf32>
    %162 = arith.addf %160, %161 : vector<8x128xf32>
    %163 = arith.truncf %162 : vector<8x128xf32> to vector<8x128xbf16>
    %c0_37 = arith.constant 0 : index
    %c0_38 = arith.constant 0 : index
    %164 = vector.load %arg2[%c0_37, %c0_38] : memref<128x896xbf16, #tpu.memory_space<vmem>>, vector<128x896xbf16>
    %cst_39 = arith.constant dense<0.000000e+00> : vector<8x896xf32>
    %165 = tpu.matmul %163, %164, %cst_39 {dimension_numbers = #tpu.dot_dimension_numbers<[1], [0], [0], [1], [0, 0, 1, 1], [], []>} : vector<8x128xbf16>, vector<128x896xbf16>, vector<8x896xf32> -> vector<8x896xf32>
    %166 = arith.truncf %131 : vector<8x128xf32> to vector<8x128xbf16>
    %c0_40 = arith.constant 0 : index
    %c0_41 = arith.constant 0 : index
    %167 = vector.load %arg3[%c0_40, %c0_41] : memref<128x512xbf16, #tpu.memory_space<vmem>>, vector<128x512xbf16>
    %cst_42 = arith.constant dense<0.000000e+00> : vector<8x512xf32>
    %168 = tpu.matmul %166, %167, %cst_42 {dimension_numbers = #tpu.dot_dimension_numbers<[1], [0], [0], [1], [0, 0, 1, 1], [], []>} : vector<8x128xbf16>, vector<128x512xbf16>, vector<8x512xf32> -> vector<8x512xf32>
    %169 = vector.extract_strided_slice %165 {offsets = [0, 0], sizes = [8, 384], strides = [1, 1]} : vector<8x896xf32> to vector<8x384xf32>
    %170 = vector.extract_strided_slice %165 {offsets = [0, 384], sizes = [8, 512], strides = [1, 1]} : vector<8x896xf32> to vector<8x512xf32>
    %171 = arith.addf %170, %168 : vector<8x512xf32>
    %172 = vector.broadcast %1 : vector<1x512xf32> to vector<8x512xf32>
    %173 = arith.addf %171, %172 : vector<8x512xf32>
    %174 = vector.extract_strided_slice %173 {offsets = [0, 0], sizes = [8, 128], strides = [1, 1]} : vector<8x512xf32> to vector<8x128xf32>
    %175 = arith.negf %174 : vector<8x128xf32>
    %176 = math.exp %175 : vector<8x128xf32>
    %cst_43 = arith.constant 1.000000e+00 : f32
    %177 = vector.broadcast %cst_43 : f32 to vector<8x128xf32>
    %178 = arith.addf %177, %176 : vector<8x128xf32>
    %179 = arith.divf %177, %178 : vector<8x128xf32>
    %180 = vector.extract_strided_slice %173 {offsets = [0, 128], sizes = [8, 128], strides = [1, 1]} : vector<8x512xf32> to vector<8x128xf32>
    %181 = arith.negf %180 : vector<8x128xf32>
    %182 = math.exp %181 : vector<8x128xf32>
    %cst_44 = arith.constant 1.000000e+00 : f32
    %183 = vector.broadcast %cst_44 : f32 to vector<8x128xf32>
    %184 = arith.addf %183, %182 : vector<8x128xf32>
    %185 = arith.divf %183, %184 : vector<8x128xf32>
    %186 = vector.extract_strided_slice %173 {offsets = [0, 256], sizes = [8, 128], strides = [1, 1]} : vector<8x512xf32> to vector<8x128xf32>
    %187 = vector.extract_strided_slice %173 {offsets = [0, 384], sizes = [8, 128], strides = [1, 1]} : vector<8x512xf32> to vector<8x128xf32>
    %188 = arith.mulf %179, %187 : vector<8x128xf32>
    %189 = arith.addf %186, %188 : vector<8x128xf32>
    %190 = math.tanh %189 : vector<8x128xf32>
    %cst_45 = arith.constant 1.000000e+00 : f32
    %191 = vector.broadcast %cst_45 : f32 to vector<8x128xf32>
    %192 = arith.subf %191, %185 : vector<8x128xf32>
    %193 = arith.mulf %192, %190 : vector<8x128xf32>
    %194 = arith.mulf %185, %131 : vector<8x128xf32>
    %195 = arith.addf %193, %194 : vector<8x128xf32>
    %c3_i32 = arith.constant 3 : i32
    %196 = arith.index_cast %c3_i32 : i32 to index
    %c0_46 = arith.constant 0 : index
    %c0_47 = arith.constant 0 : index
    %197 = vector.load %arg1[%196, %c0_46, %c0_47] : memref<8x8x384xf32, #tpu.memory_space<vmem>>, vector<1x8x384xf32>
    %198 = vector.shape_cast %197 : vector<1x8x384xf32> to vector<8x384xf32>
    %199 = vector.extract_strided_slice %198 {offsets = [0, 0], sizes = [8, 128], strides = [1, 1]} : vector<8x384xf32> to vector<8x128xf32>
    %200 = vector.extract_strided_slice %169 {offsets = [0, 0], sizes = [8, 128], strides = [1, 1]} : vector<8x384xf32> to vector<8x128xf32>
    %201 = arith.addf %199, %200 : vector<8x128xf32>
    %202 = arith.negf %201 : vector<8x128xf32>
    %203 = math.exp %202 : vector<8x128xf32>
    %cst_48 = arith.constant 1.000000e+00 : f32
    %204 = vector.broadcast %cst_48 : f32 to vector<8x128xf32>
    %205 = arith.addf %204, %203 : vector<8x128xf32>
    %206 = arith.divf %204, %205 : vector<8x128xf32>
    %207 = vector.extract_strided_slice %198 {offsets = [0, 128], sizes = [8, 128], strides = [1, 1]} : vector<8x384xf32> to vector<8x128xf32>
    %208 = vector.extract_strided_slice %169 {offsets = [0, 128], sizes = [8, 128], strides = [1, 1]} : vector<8x384xf32> to vector<8x128xf32>
    %209 = arith.addf %207, %208 : vector<8x128xf32>
    %210 = arith.negf %209 : vector<8x128xf32>
    %211 = math.exp %210 : vector<8x128xf32>
    %cst_49 = arith.constant 1.000000e+00 : f32
    %212 = vector.broadcast %cst_49 : f32 to vector<8x128xf32>
    %213 = arith.addf %212, %211 : vector<8x128xf32>
    %214 = arith.divf %212, %213 : vector<8x128xf32>
    %215 = vector.extract_strided_slice %198 {offsets = [0, 256], sizes = [8, 128], strides = [1, 1]} : vector<8x384xf32> to vector<8x128xf32>
    %216 = vector.extract_strided_slice %169 {offsets = [0, 256], sizes = [8, 128], strides = [1, 1]} : vector<8x384xf32> to vector<8x128xf32>
    %217 = vector.broadcast %0 : vector<1x128xf32> to vector<8x128xf32>
    %218 = arith.addf %216, %217 : vector<8x128xf32>
    %219 = arith.mulf %206, %218 : vector<8x128xf32>
    %220 = arith.addf %215, %219 : vector<8x128xf32>
    %221 = math.tanh %220 : vector<8x128xf32>
    %cst_50 = arith.constant 1.000000e+00 : f32
    %222 = vector.broadcast %cst_50 : f32 to vector<8x128xf32>
    %223 = arith.subf %222, %214 : vector<8x128xf32>
    %224 = arith.mulf %223, %221 : vector<8x128xf32>
    %225 = arith.mulf %214, %162 : vector<8x128xf32>
    %226 = arith.addf %224, %225 : vector<8x128xf32>
    %227 = arith.truncf %226 : vector<8x128xf32> to vector<8x128xbf16>
    %c0_51 = arith.constant 0 : index
    %c0_52 = arith.constant 0 : index
    %228 = vector.load %arg2[%c0_51, %c0_52] : memref<128x896xbf16, #tpu.memory_space<vmem>>, vector<128x896xbf16>
    %cst_53 = arith.constant dense<0.000000e+00> : vector<8x896xf32>
    %229 = tpu.matmul %227, %228, %cst_53 {dimension_numbers = #tpu.dot_dimension_numbers<[1], [0], [0], [1], [0, 0, 1, 1], [], []>} : vector<8x128xbf16>, vector<128x896xbf16>, vector<8x896xf32> -> vector<8x896xf32>
    %230 = arith.truncf %195 : vector<8x128xf32> to vector<8x128xbf16>
    %c0_54 = arith.constant 0 : index
    %c0_55 = arith.constant 0 : index
    %231 = vector.load %arg3[%c0_54, %c0_55] : memref<128x512xbf16, #tpu.memory_space<vmem>>, vector<128x512xbf16>
    %cst_56 = arith.constant dense<0.000000e+00> : vector<8x512xf32>
    %232 = tpu.matmul %230, %231, %cst_56 {dimension_numbers = #tpu.dot_dimension_numbers<[1], [0], [0], [1], [0, 0, 1, 1], [], []>} : vector<8x128xbf16>, vector<128x512xbf16>, vector<8x512xf32> -> vector<8x512xf32>
    %233 = vector.extract_strided_slice %229 {offsets = [0, 0], sizes = [8, 384], strides = [1, 1]} : vector<8x896xf32> to vector<8x384xf32>
    %234 = vector.extract_strided_slice %229 {offsets = [0, 384], sizes = [8, 512], strides = [1, 1]} : vector<8x896xf32> to vector<8x512xf32>
    %235 = arith.addf %234, %232 : vector<8x512xf32>
    %236 = vector.broadcast %1 : vector<1x512xf32> to vector<8x512xf32>
    %237 = arith.addf %235, %236 : vector<8x512xf32>
    %238 = vector.extract_strided_slice %237 {offsets = [0, 0], sizes = [8, 128], strides = [1, 1]} : vector<8x512xf32> to vector<8x128xf32>
    %239 = arith.negf %238 : vector<8x128xf32>
    %240 = math.exp %239 : vector<8x128xf32>
    %cst_57 = arith.constant 1.000000e+00 : f32
    %241 = vector.broadcast %cst_57 : f32 to vector<8x128xf32>
    %242 = arith.addf %241, %240 : vector<8x128xf32>
    %243 = arith.divf %241, %242 : vector<8x128xf32>
    %244 = vector.extract_strided_slice %237 {offsets = [0, 128], sizes = [8, 128], strides = [1, 1]} : vector<8x512xf32> to vector<8x128xf32>
    %245 = arith.negf %244 : vector<8x128xf32>
    %246 = math.exp %245 : vector<8x128xf32>
    %cst_58 = arith.constant 1.000000e+00 : f32
    %247 = vector.broadcast %cst_58 : f32 to vector<8x128xf32>
    %248 = arith.addf %247, %246 : vector<8x128xf32>
    %249 = arith.divf %247, %248 : vector<8x128xf32>
    %250 = vector.extract_strided_slice %237 {offsets = [0, 256], sizes = [8, 128], strides = [1, 1]} : vector<8x512xf32> to vector<8x128xf32>
    %251 = vector.extract_strided_slice %237 {offsets = [0, 384], sizes = [8, 128], strides = [1, 1]} : vector<8x512xf32> to vector<8x128xf32>
    %252 = arith.mulf %243, %251 : vector<8x128xf32>
    %253 = arith.addf %250, %252 : vector<8x128xf32>
    %254 = math.tanh %253 : vector<8x128xf32>
    %cst_59 = arith.constant 1.000000e+00 : f32
    %255 = vector.broadcast %cst_59 : f32 to vector<8x128xf32>
    %256 = arith.subf %255, %249 : vector<8x128xf32>
    %257 = arith.mulf %256, %254 : vector<8x128xf32>
    %258 = arith.mulf %249, %195 : vector<8x128xf32>
    %259 = arith.addf %257, %258 : vector<8x128xf32>
    %c4_i32 = arith.constant 4 : i32
    %260 = arith.index_cast %c4_i32 : i32 to index
    %c0_60 = arith.constant 0 : index
    %c0_61 = arith.constant 0 : index
    %261 = vector.load %arg1[%260, %c0_60, %c0_61] : memref<8x8x384xf32, #tpu.memory_space<vmem>>, vector<1x8x384xf32>
    %262 = vector.shape_cast %261 : vector<1x8x384xf32> to vector<8x384xf32>
    %263 = vector.extract_strided_slice %262 {offsets = [0, 0], sizes = [8, 128], strides = [1, 1]} : vector<8x384xf32> to vector<8x128xf32>
    %264 = vector.extract_strided_slice %233 {offsets = [0, 0], sizes = [8, 128], strides = [1, 1]} : vector<8x384xf32> to vector<8x128xf32>
    %265 = arith.addf %263, %264 : vector<8x128xf32>
    %266 = arith.negf %265 : vector<8x128xf32>
    %267 = math.exp %266 : vector<8x128xf32>
    %cst_62 = arith.constant 1.000000e+00 : f32
    %268 = vector.broadcast %cst_62 : f32 to vector<8x128xf32>
    %269 = arith.addf %268, %267 : vector<8x128xf32>
    %270 = arith.divf %268, %269 : vector<8x128xf32>
    %271 = vector.extract_strided_slice %262 {offsets = [0, 128], sizes = [8, 128], strides = [1, 1]} : vector<8x384xf32> to vector<8x128xf32>
    %272 = vector.extract_strided_slice %233 {offsets = [0, 128], sizes = [8, 128], strides = [1, 1]} : vector<8x384xf32> to vector<8x128xf32>
    %273 = arith.addf %271, %272 : vector<8x128xf32>
    %274 = arith.negf %273 : vector<8x128xf32>
    %275 = math.exp %274 : vector<8x128xf32>
    %cst_63 = arith.constant 1.000000e+00 : f32
    %276 = vector.broadcast %cst_63 : f32 to vector<8x128xf32>
    %277 = arith.addf %276, %275 : vector<8x128xf32>
    %278 = arith.divf %276, %277 : vector<8x128xf32>
    %279 = vector.extract_strided_slice %262 {offsets = [0, 256], sizes = [8, 128], strides = [1, 1]} : vector<8x384xf32> to vector<8x128xf32>
    %280 = vector.extract_strided_slice %233 {offsets = [0, 256], sizes = [8, 128], strides = [1, 1]} : vector<8x384xf32> to vector<8x128xf32>
    %281 = vector.broadcast %0 : vector<1x128xf32> to vector<8x128xf32>
    %282 = arith.addf %280, %281 : vector<8x128xf32>
    %283 = arith.mulf %270, %282 : vector<8x128xf32>
    %284 = arith.addf %279, %283 : vector<8x128xf32>
    %285 = math.tanh %284 : vector<8x128xf32>
    %cst_64 = arith.constant 1.000000e+00 : f32
    %286 = vector.broadcast %cst_64 : f32 to vector<8x128xf32>
    %287 = arith.subf %286, %278 : vector<8x128xf32>
    %288 = arith.mulf %287, %285 : vector<8x128xf32>
    %289 = arith.mulf %278, %226 : vector<8x128xf32>
    %290 = arith.addf %288, %289 : vector<8x128xf32>
    %291 = arith.truncf %290 : vector<8x128xf32> to vector<8x128xbf16>
    %c0_65 = arith.constant 0 : index
    %c0_66 = arith.constant 0 : index
    %292 = vector.load %arg2[%c0_65, %c0_66] : memref<128x896xbf16, #tpu.memory_space<vmem>>, vector<128x896xbf16>
    %cst_67 = arith.constant dense<0.000000e+00> : vector<8x896xf32>
    %293 = tpu.matmul %291, %292, %cst_67 {dimension_numbers = #tpu.dot_dimension_numbers<[1], [0], [0], [1], [0, 0, 1, 1], [], []>} : vector<8x128xbf16>, vector<128x896xbf16>, vector<8x896xf32> -> vector<8x896xf32>
    %294 = arith.truncf %259 : vector<8x128xf32> to vector<8x128xbf16>
    %c0_68 = arith.constant 0 : index
    %c0_69 = arith.constant 0 : index
    %295 = vector.load %arg3[%c0_68, %c0_69] : memref<128x512xbf16, #tpu.memory_space<vmem>>, vector<128x512xbf16>
    %cst_70 = arith.constant dense<0.000000e+00> : vector<8x512xf32>
    %296 = tpu.matmul %294, %295, %cst_70 {dimension_numbers = #tpu.dot_dimension_numbers<[1], [0], [0], [1], [0, 0, 1, 1], [], []>} : vector<8x128xbf16>, vector<128x512xbf16>, vector<8x512xf32> -> vector<8x512xf32>
    %297 = vector.extract_strided_slice %293 {offsets = [0, 0], sizes = [8, 384], strides = [1, 1]} : vector<8x896xf32> to vector<8x384xf32>
    %298 = vector.extract_strided_slice %293 {offsets = [0, 384], sizes = [8, 512], strides = [1, 1]} : vector<8x896xf32> to vector<8x512xf32>
    %299 = arith.addf %298, %296 : vector<8x512xf32>
    %300 = vector.broadcast %1 : vector<1x512xf32> to vector<8x512xf32>
    %301 = arith.addf %299, %300 : vector<8x512xf32>
    %302 = vector.extract_strided_slice %301 {offsets = [0, 0], sizes = [8, 128], strides = [1, 1]} : vector<8x512xf32> to vector<8x128xf32>
    %303 = arith.negf %302 : vector<8x128xf32>
    %304 = math.exp %303 : vector<8x128xf32>
    %cst_71 = arith.constant 1.000000e+00 : f32
    %305 = vector.broadcast %cst_71 : f32 to vector<8x128xf32>
    %306 = arith.addf %305, %304 : vector<8x128xf32>
    %307 = arith.divf %305, %306 : vector<8x128xf32>
    %308 = vector.extract_strided_slice %301 {offsets = [0, 128], sizes = [8, 128], strides = [1, 1]} : vector<8x512xf32> to vector<8x128xf32>
    %309 = arith.negf %308 : vector<8x128xf32>
    %310 = math.exp %309 : vector<8x128xf32>
    %cst_72 = arith.constant 1.000000e+00 : f32
    %311 = vector.broadcast %cst_72 : f32 to vector<8x128xf32>
    %312 = arith.addf %311, %310 : vector<8x128xf32>
    %313 = arith.divf %311, %312 : vector<8x128xf32>
    %314 = vector.extract_strided_slice %301 {offsets = [0, 256], sizes = [8, 128], strides = [1, 1]} : vector<8x512xf32> to vector<8x128xf32>
    %315 = vector.extract_strided_slice %301 {offsets = [0, 384], sizes = [8, 128], strides = [1, 1]} : vector<8x512xf32> to vector<8x128xf32>
    %316 = arith.mulf %307, %315 : vector<8x128xf32>
    %317 = arith.addf %314, %316 : vector<8x128xf32>
    %318 = math.tanh %317 : vector<8x128xf32>
    %cst_73 = arith.constant 1.000000e+00 : f32
    %319 = vector.broadcast %cst_73 : f32 to vector<8x128xf32>
    %320 = arith.subf %319, %313 : vector<8x128xf32>
    %321 = arith.mulf %320, %318 : vector<8x128xf32>
    %322 = arith.mulf %313, %259 : vector<8x128xf32>
    %323 = arith.addf %321, %322 : vector<8x128xf32>
    %c5_i32 = arith.constant 5 : i32
    %324 = arith.index_cast %c5_i32 : i32 to index
    %c0_74 = arith.constant 0 : index
    %c0_75 = arith.constant 0 : index
    %325 = vector.load %arg1[%324, %c0_74, %c0_75] : memref<8x8x384xf32, #tpu.memory_space<vmem>>, vector<1x8x384xf32>
    %326 = vector.shape_cast %325 : vector<1x8x384xf32> to vector<8x384xf32>
    %327 = vector.extract_strided_slice %326 {offsets = [0, 0], sizes = [8, 128], strides = [1, 1]} : vector<8x384xf32> to vector<8x128xf32>
    %328 = vector.extract_strided_slice %297 {offsets = [0, 0], sizes = [8, 128], strides = [1, 1]} : vector<8x384xf32> to vector<8x128xf32>
    %329 = arith.addf %327, %328 : vector<8x128xf32>
    %330 = arith.negf %329 : vector<8x128xf32>
    %331 = math.exp %330 : vector<8x128xf32>
    %cst_76 = arith.constant 1.000000e+00 : f32
    %332 = vector.broadcast %cst_76 : f32 to vector<8x128xf32>
    %333 = arith.addf %332, %331 : vector<8x128xf32>
    %334 = arith.divf %332, %333 : vector<8x128xf32>
    %335 = vector.extract_strided_slice %326 {offsets = [0, 128], sizes = [8, 128], strides = [1, 1]} : vector<8x384xf32> to vector<8x128xf32>
    %336 = vector.extract_strided_slice %297 {offsets = [0, 128], sizes = [8, 128], strides = [1, 1]} : vector<8x384xf32> to vector<8x128xf32>
    %337 = arith.addf %335, %336 : vector<8x128xf32>
    %338 = arith.negf %337 : vector<8x128xf32>
    %339 = math.exp %338 : vector<8x128xf32>
    %cst_77 = arith.constant 1.000000e+00 : f32
    %340 = vector.broadcast %cst_77 : f32 to vector<8x128xf32>
    %341 = arith.addf %340, %339 : vector<8x128xf32>
    %342 = arith.divf %340, %341 : vector<8x128xf32>
    %343 = vector.extract_strided_slice %326 {offsets = [0, 256], sizes = [8, 128], strides = [1, 1]} : vector<8x384xf32> to vector<8x128xf32>
    %344 = vector.extract_strided_slice %297 {offsets = [0, 256], sizes = [8, 128], strides = [1, 1]} : vector<8x384xf32> to vector<8x128xf32>
    %345 = vector.broadcast %0 : vector<1x128xf32> to vector<8x128xf32>
    %346 = arith.addf %344, %345 : vector<8x128xf32>
    %347 = arith.mulf %334, %346 : vector<8x128xf32>
    %348 = arith.addf %343, %347 : vector<8x128xf32>
    %349 = math.tanh %348 : vector<8x128xf32>
    %cst_78 = arith.constant 1.000000e+00 : f32
    %350 = vector.broadcast %cst_78 : f32 to vector<8x128xf32>
    %351 = arith.subf %350, %342 : vector<8x128xf32>
    %352 = arith.mulf %351, %349 : vector<8x128xf32>
    %353 = arith.mulf %342, %290 : vector<8x128xf32>
    %354 = arith.addf %352, %353 : vector<8x128xf32>
    %355 = arith.truncf %354 : vector<8x128xf32> to vector<8x128xbf16>
    %c0_79 = arith.constant 0 : index
    %c0_80 = arith.constant 0 : index
    %356 = vector.load %arg2[%c0_79, %c0_80] : memref<128x896xbf16, #tpu.memory_space<vmem>>, vector<128x896xbf16>
    %cst_81 = arith.constant dense<0.000000e+00> : vector<8x896xf32>
    %357 = tpu.matmul %355, %356, %cst_81 {dimension_numbers = #tpu.dot_dimension_numbers<[1], [0], [0], [1], [0, 0, 1, 1], [], []>} : vector<8x128xbf16>, vector<128x896xbf16>, vector<8x896xf32> -> vector<8x896xf32>
    %358 = arith.truncf %323 : vector<8x128xf32> to vector<8x128xbf16>
    %c0_82 = arith.constant 0 : index
    %c0_83 = arith.constant 0 : index
    %359 = vector.load %arg3[%c0_82, %c0_83] : memref<128x512xbf16, #tpu.memory_space<vmem>>, vector<128x512xbf16>
    %cst_84 = arith.constant dense<0.000000e+00> : vector<8x512xf32>
    %360 = tpu.matmul %358, %359, %cst_84 {dimension_numbers = #tpu.dot_dimension_numbers<[1], [0], [0], [1], [0, 0, 1, 1], [], []>} : vector<8x128xbf16>, vector<128x512xbf16>, vector<8x512xf32> -> vector<8x512xf32>
    %361 = vector.extract_strided_slice %357 {offsets = [0, 0], sizes = [8, 384], strides = [1, 1]} : vector<8x896xf32> to vector<8x384xf32>
    %362 = vector.extract_strided_slice %357 {offsets = [0, 384], sizes = [8, 512], strides = [1, 1]} : vector<8x896xf32> to vector<8x512xf32>
    %363 = arith.addf %362, %360 : vector<8x512xf32>
    %364 = vector.broadcast %1 : vector<1x512xf32> to vector<8x512xf32>
    %365 = arith.addf %363, %364 : vector<8x512xf32>
    %366 = vector.extract_strided_slice %365 {offsets = [0, 0], sizes = [8, 128], strides = [1, 1]} : vector<8x512xf32> to vector<8x128xf32>
    %367 = arith.negf %366 : vector<8x128xf32>
    %368 = math.exp %367 : vector<8x128xf32>
    %cst_85 = arith.constant 1.000000e+00 : f32
    %369 = vector.broadcast %cst_85 : f32 to vector<8x128xf32>
    %370 = arith.addf %369, %368 : vector<8x128xf32>
    %371 = arith.divf %369, %370 : vector<8x128xf32>
    %372 = vector.extract_strided_slice %365 {offsets = [0, 128], sizes = [8, 128], strides = [1, 1]} : vector<8x512xf32> to vector<8x128xf32>
    %373 = arith.negf %372 : vector<8x128xf32>
    %374 = math.exp %373 : vector<8x128xf32>
    %cst_86 = arith.constant 1.000000e+00 : f32
    %375 = vector.broadcast %cst_86 : f32 to vector<8x128xf32>
    %376 = arith.addf %375, %374 : vector<8x128xf32>
    %377 = arith.divf %375, %376 : vector<8x128xf32>
    %378 = vector.extract_strided_slice %365 {offsets = [0, 256], sizes = [8, 128], strides = [1, 1]} : vector<8x512xf32> to vector<8x128xf32>
    %379 = vector.extract_strided_slice %365 {offsets = [0, 384], sizes = [8, 128], strides = [1, 1]} : vector<8x512xf32> to vector<8x128xf32>
    %380 = arith.mulf %371, %379 : vector<8x128xf32>
    %381 = arith.addf %378, %380 : vector<8x128xf32>
    %382 = math.tanh %381 : vector<8x128xf32>
    %cst_87 = arith.constant 1.000000e+00 : f32
    %383 = vector.broadcast %cst_87 : f32 to vector<8x128xf32>
    %384 = arith.subf %383, %377 : vector<8x128xf32>
    %385 = arith.mulf %384, %382 : vector<8x128xf32>
    %386 = arith.mulf %377, %323 : vector<8x128xf32>
    %387 = arith.addf %385, %386 : vector<8x128xf32>
    %c6_i32 = arith.constant 6 : i32
    %388 = arith.index_cast %c6_i32 : i32 to index
    %c0_88 = arith.constant 0 : index
    %c0_89 = arith.constant 0 : index
    %389 = vector.load %arg1[%388, %c0_88, %c0_89] : memref<8x8x384xf32, #tpu.memory_space<vmem>>, vector<1x8x384xf32>
    %390 = vector.shape_cast %389 : vector<1x8x384xf32> to vector<8x384xf32>
    %391 = vector.extract_strided_slice %390 {offsets = [0, 0], sizes = [8, 128], strides = [1, 1]} : vector<8x384xf32> to vector<8x128xf32>
    %392 = vector.extract_strided_slice %361 {offsets = [0, 0], sizes = [8, 128], strides = [1, 1]} : vector<8x384xf32> to vector<8x128xf32>
    %393 = arith.addf %391, %392 : vector<8x128xf32>
    %394 = arith.negf %393 : vector<8x128xf32>
    %395 = math.exp %394 : vector<8x128xf32>
    %cst_90 = arith.constant 1.000000e+00 : f32
    %396 = vector.broadcast %cst_90 : f32 to vector<8x128xf32>
    %397 = arith.addf %396, %395 : vector<8x128xf32>
    %398 = arith.divf %396, %397 : vector<8x128xf32>
    %399 = vector.extract_strided_slice %390 {offsets = [0, 128], sizes = [8, 128], strides = [1, 1]} : vector<8x384xf32> to vector<8x128xf32>
    %400 = vector.extract_strided_slice %361 {offsets = [0, 128], sizes = [8, 128], strides = [1, 1]} : vector<8x384xf32> to vector<8x128xf32>
    %401 = arith.addf %399, %400 : vector<8x128xf32>
    %402 = arith.negf %401 : vector<8x128xf32>
    %403 = math.exp %402 : vector<8x128xf32>
    %cst_91 = arith.constant 1.000000e+00 : f32
    %404 = vector.broadcast %cst_91 : f32 to vector<8x128xf32>
    %405 = arith.addf %404, %403 : vector<8x128xf32>
    %406 = arith.divf %404, %405 : vector<8x128xf32>
    %407 = vector.extract_strided_slice %390 {offsets = [0, 256], sizes = [8, 128], strides = [1, 1]} : vector<8x384xf32> to vector<8x128xf32>
    %408 = vector.extract_strided_slice %361 {offsets = [0, 256], sizes = [8, 128], strides = [1, 1]} : vector<8x384xf32> to vector<8x128xf32>
    %409 = vector.broadcast %0 : vector<1x128xf32> to vector<8x128xf32>
    %410 = arith.addf %408, %409 : vector<8x128xf32>
    %411 = arith.mulf %398, %410 : vector<8x128xf32>
    %412 = arith.addf %407, %411 : vector<8x128xf32>
    %413 = math.tanh %412 : vector<8x128xf32>
    %cst_92 = arith.constant 1.000000e+00 : f32
    %414 = vector.broadcast %cst_92 : f32 to vector<8x128xf32>
    %415 = arith.subf %414, %406 : vector<8x128xf32>
    %416 = arith.mulf %415, %413 : vector<8x128xf32>
    %417 = arith.mulf %406, %354 : vector<8x128xf32>
    %418 = arith.addf %416, %417 : vector<8x128xf32>
    %419 = arith.truncf %418 : vector<8x128xf32> to vector<8x128xbf16>
    %c0_93 = arith.constant 0 : index
    %c0_94 = arith.constant 0 : index
    %420 = vector.load %arg2[%c0_93, %c0_94] : memref<128x896xbf16, #tpu.memory_space<vmem>>, vector<128x896xbf16>
    %cst_95 = arith.constant dense<0.000000e+00> : vector<8x896xf32>
    %421 = tpu.matmul %419, %420, %cst_95 {dimension_numbers = #tpu.dot_dimension_numbers<[1], [0], [0], [1], [0, 0, 1, 1], [], []>} : vector<8x128xbf16>, vector<128x896xbf16>, vector<8x896xf32> -> vector<8x896xf32>
    %422 = arith.truncf %387 : vector<8x128xf32> to vector<8x128xbf16>
    %c0_96 = arith.constant 0 : index
    %c0_97 = arith.constant 0 : index
    %423 = vector.load %arg3[%c0_96, %c0_97] : memref<128x512xbf16, #tpu.memory_space<vmem>>, vector<128x512xbf16>
    %cst_98 = arith.constant dense<0.000000e+00> : vector<8x512xf32>
    %424 = tpu.matmul %422, %423, %cst_98 {dimension_numbers = #tpu.dot_dimension_numbers<[1], [0], [0], [1], [0, 0, 1, 1], [], []>} : vector<8x128xbf16>, vector<128x512xbf16>, vector<8x512xf32> -> vector<8x512xf32>
    %425 = vector.extract_strided_slice %421 {offsets = [0, 0], sizes = [8, 384], strides = [1, 1]} : vector<8x896xf32> to vector<8x384xf32>
    %426 = vector.extract_strided_slice %421 {offsets = [0, 384], sizes = [8, 512], strides = [1, 1]} : vector<8x896xf32> to vector<8x512xf32>
    %427 = arith.addf %426, %424 : vector<8x512xf32>
    %428 = vector.broadcast %1 : vector<1x512xf32> to vector<8x512xf32>
    %429 = arith.addf %427, %428 : vector<8x512xf32>
    %430 = vector.extract_strided_slice %429 {offsets = [0, 0], sizes = [8, 128], strides = [1, 1]} : vector<8x512xf32> to vector<8x128xf32>
    %431 = arith.negf %430 : vector<8x128xf32>
    %432 = math.exp %431 : vector<8x128xf32>
    %cst_99 = arith.constant 1.000000e+00 : f32
    %433 = vector.broadcast %cst_99 : f32 to vector<8x128xf32>
    %434 = arith.addf %433, %432 : vector<8x128xf32>
    %435 = arith.divf %433, %434 : vector<8x128xf32>
    %436 = vector.extract_strided_slice %429 {offsets = [0, 128], sizes = [8, 128], strides = [1, 1]} : vector<8x512xf32> to vector<8x128xf32>
    %437 = arith.negf %436 : vector<8x128xf32>
    %438 = math.exp %437 : vector<8x128xf32>
    %cst_100 = arith.constant 1.000000e+00 : f32
    %439 = vector.broadcast %cst_100 : f32 to vector<8x128xf32>
    %440 = arith.addf %439, %438 : vector<8x128xf32>
    %441 = arith.divf %439, %440 : vector<8x128xf32>
    %442 = vector.extract_strided_slice %429 {offsets = [0, 256], sizes = [8, 128], strides = [1, 1]} : vector<8x512xf32> to vector<8x128xf32>
    %443 = vector.extract_strided_slice %429 {offsets = [0, 384], sizes = [8, 128], strides = [1, 1]} : vector<8x512xf32> to vector<8x128xf32>
    %444 = arith.mulf %435, %443 : vector<8x128xf32>
    %445 = arith.addf %442, %444 : vector<8x128xf32>
    %446 = math.tanh %445 : vector<8x128xf32>
    %cst_101 = arith.constant 1.000000e+00 : f32
    %447 = vector.broadcast %cst_101 : f32 to vector<8x128xf32>
    %448 = arith.subf %447, %441 : vector<8x128xf32>
    %449 = arith.mulf %448, %446 : vector<8x128xf32>
    %450 = arith.mulf %441, %387 : vector<8x128xf32>
    %451 = arith.addf %449, %450 : vector<8x128xf32>
    %c7_i32 = arith.constant 7 : i32
    %452 = arith.index_cast %c7_i32 : i32 to index
    %c0_102 = arith.constant 0 : index
    %c0_103 = arith.constant 0 : index
    %453 = vector.load %arg1[%452, %c0_102, %c0_103] : memref<8x8x384xf32, #tpu.memory_space<vmem>>, vector<1x8x384xf32>
    %454 = vector.shape_cast %453 : vector<1x8x384xf32> to vector<8x384xf32>
    %455 = vector.extract_strided_slice %454 {offsets = [0, 0], sizes = [8, 128], strides = [1, 1]} : vector<8x384xf32> to vector<8x128xf32>
    %456 = vector.extract_strided_slice %425 {offsets = [0, 0], sizes = [8, 128], strides = [1, 1]} : vector<8x384xf32> to vector<8x128xf32>
    %457 = arith.addf %455, %456 : vector<8x128xf32>
    %458 = arith.negf %457 : vector<8x128xf32>
    %459 = math.exp %458 : vector<8x128xf32>
    %cst_104 = arith.constant 1.000000e+00 : f32
    %460 = vector.broadcast %cst_104 : f32 to vector<8x128xf32>
    %461 = arith.addf %460, %459 : vector<8x128xf32>
    %462 = arith.divf %460, %461 : vector<8x128xf32>
    %463 = vector.extract_strided_slice %454 {offsets = [0, 128], sizes = [8, 128], strides = [1, 1]} : vector<8x384xf32> to vector<8x128xf32>
    %464 = vector.extract_strided_slice %425 {offsets = [0, 128], sizes = [8, 128], strides = [1, 1]} : vector<8x384xf32> to vector<8x128xf32>
    %465 = arith.addf %463, %464 : vector<8x128xf32>
    %466 = arith.negf %465 : vector<8x128xf32>
    %467 = math.exp %466 : vector<8x128xf32>
    %cst_105 = arith.constant 1.000000e+00 : f32
    %468 = vector.broadcast %cst_105 : f32 to vector<8x128xf32>
    %469 = arith.addf %468, %467 : vector<8x128xf32>
    %470 = arith.divf %468, %469 : vector<8x128xf32>
    %471 = vector.extract_strided_slice %454 {offsets = [0, 256], sizes = [8, 128], strides = [1, 1]} : vector<8x384xf32> to vector<8x128xf32>
    %472 = vector.extract_strided_slice %425 {offsets = [0, 256], sizes = [8, 128], strides = [1, 1]} : vector<8x384xf32> to vector<8x128xf32>
    %473 = vector.broadcast %0 : vector<1x128xf32> to vector<8x128xf32>
    %474 = arith.addf %472, %473 : vector<8x128xf32>
    %475 = arith.mulf %462, %474 : vector<8x128xf32>
    %476 = arith.addf %471, %475 : vector<8x128xf32>
    %477 = math.tanh %476 : vector<8x128xf32>
    %cst_106 = arith.constant 1.000000e+00 : f32
    %478 = vector.broadcast %cst_106 : f32 to vector<8x128xf32>
    %479 = arith.subf %478, %470 : vector<8x128xf32>
    %480 = arith.mulf %479, %477 : vector<8x128xf32>
    %481 = arith.mulf %470, %418 : vector<8x128xf32>
    %482 = arith.addf %480, %481 : vector<8x128xf32>
    %483 = arith.truncf %482 : vector<8x128xf32> to vector<8x128xbf16>
    %c0_107 = arith.constant 0 : index
    %c0_108 = arith.constant 0 : index
    %484 = vector.load %arg2[%c0_107, %c0_108] : memref<128x896xbf16, #tpu.memory_space<vmem>>, vector<128x896xbf16>
    %cst_109 = arith.constant dense<0.000000e+00> : vector<8x896xf32>
    %485 = tpu.matmul %483, %484, %cst_109 {dimension_numbers = #tpu.dot_dimension_numbers<[1], [0], [0], [1], [0, 0, 1, 1], [], []>} : vector<8x128xbf16>, vector<128x896xbf16>, vector<8x896xf32> -> vector<8x896xf32>
    %486 = arith.truncf %451 : vector<8x128xf32> to vector<8x128xbf16>
    %c0_110 = arith.constant 0 : index
    %c0_111 = arith.constant 0 : index
    %487 = vector.load %arg3[%c0_110, %c0_111] : memref<128x512xbf16, #tpu.memory_space<vmem>>, vector<128x512xbf16>
    %cst_112 = arith.constant dense<0.000000e+00> : vector<8x512xf32>
    %488 = tpu.matmul %486, %487, %cst_112 {dimension_numbers = #tpu.dot_dimension_numbers<[1], [0], [0], [1], [0, 0, 1, 1], [], []>} : vector<8x128xbf16>, vector<128x512xbf16>, vector<8x512xf32> -> vector<8x512xf32>
    %489 = vector.extract_strided_slice %485 {offsets = [0, 0], sizes = [8, 384], strides = [1, 1]} : vector<8x896xf32> to vector<8x384xf32>
    %490 = vector.extract_strided_slice %485 {offsets = [0, 384], sizes = [8, 512], strides = [1, 1]} : vector<8x896xf32> to vector<8x512xf32>
    %491 = arith.addf %490, %488 : vector<8x512xf32>
    %492 = vector.broadcast %1 : vector<1x512xf32> to vector<8x512xf32>
    %493 = arith.addf %491, %492 : vector<8x512xf32>
    %494 = vector.extract_strided_slice %493 {offsets = [0, 0], sizes = [8, 128], strides = [1, 1]} : vector<8x512xf32> to vector<8x128xf32>
    %495 = arith.negf %494 : vector<8x128xf32>
    %496 = math.exp %495 : vector<8x128xf32>
    %cst_113 = arith.constant 1.000000e+00 : f32
    %497 = vector.broadcast %cst_113 : f32 to vector<8x128xf32>
    %498 = arith.addf %497, %496 : vector<8x128xf32>
    %499 = arith.divf %497, %498 : vector<8x128xf32>
    %500 = vector.extract_strided_slice %493 {offsets = [0, 128], sizes = [8, 128], strides = [1, 1]} : vector<8x512xf32> to vector<8x128xf32>
    %501 = arith.negf %500 : vector<8x128xf32>
    %502 = math.exp %501 : vector<8x128xf32>
    %cst_114 = arith.constant 1.000000e+00 : f32
    %503 = vector.broadcast %cst_114 : f32 to vector<8x128xf32>
    %504 = arith.addf %503, %502 : vector<8x128xf32>
    %505 = arith.divf %503, %504 : vector<8x128xf32>
    %506 = vector.extract_strided_slice %493 {offsets = [0, 256], sizes = [8, 128], strides = [1, 1]} : vector<8x512xf32> to vector<8x128xf32>
    %507 = vector.extract_strided_slice %493 {offsets = [0, 384], sizes = [8, 128], strides = [1, 1]} : vector<8x512xf32> to vector<8x128xf32>
    %508 = arith.mulf %499, %507 : vector<8x128xf32>
    %509 = arith.addf %506, %508 : vector<8x128xf32>
    %510 = math.tanh %509 : vector<8x128xf32>
    %cst_115 = arith.constant 1.000000e+00 : f32
    %511 = vector.broadcast %cst_115 : f32 to vector<8x128xf32>
    %512 = arith.subf %511, %505 : vector<8x128xf32>
    %513 = arith.mulf %512, %510 : vector<8x128xf32>
    %514 = arith.mulf %505, %451 : vector<8x128xf32>
    %515 = arith.addf %513, %514 : vector<8x128xf32>
    %c8_i32 = arith.constant 8 : i32
    %c0_116 = arith.constant 0 : index
    %c0_117 = arith.constant 0 : index
    %516 = vector.load %arg6[%c0_116, %c0_117] : memref<8x128xf32, #tpu.memory_space<vmem>>, vector<8x128xf32>
    tpu.vector_store %arg6[%c0_116, %c0_117], %515 {strides = array<i32>} : memref<8x128xf32, #tpu.memory_space<vmem>>, vector<8x128xf32>,
    return
  }
  func.func @transform_0(%arg0: i32) -> (i32, i32, i32) {
    %c0_i32 = arith.constant 0 : i32
    %c0_i32_0 = arith.constant 0 : i32
    %c0_i32_1 = arith.constant 0 : i32
    return %c0_i32, %arg0, %c0_i32_0 : i32, i32, i32
  }
  func.func @transform_1(%arg0: i32) -> (i32, i32) {
    %c0_i32 = arith.constant 0 : i32
    %c0_i32_0 = arith.constant 0 : i32
    %c0_i32_1 = arith.constant 0 : i32
    return %c0_i32, %c0_i32_0 : i32, i32
  }
  func.func @transform_2(%arg0: i32) -> (i32, i32) {
    %c0_i32 = arith.constant 0 : i32
    %c0_i32_0 = arith.constant 0 : i32
    %c0_i32_1 = arith.constant 0 : i32
    return %c0_i32, %c0_i32_0 : i32, i32
  }
  func.func @transform_3(%arg0: i32) -> (i32, i32) {
    %c0_i32 = arith.constant 0 : i32
    %c0_i32_0 = arith.constant 0 : i32
    %c0_i32_1 = arith.constant 0 : i32
    return %c0_i32, %c0_i32_0 : i32, i32
  }
  func.func @transform_4(%arg0: i32) -> (i32, i32) {
    %c0_i32 = arith.constant 0 : i32
    %c0_i32_0 = arith.constant 0 : i32
    %c0_i32_1 = arith.constant 0 : i32
    return %c0_i32, %c0_i32_0 : i32, i32
  }
  func.func @transform_5(%arg0: i32) -> (i32, i32) {
    %c0_i32 = arith.constant 0 : i32
    %c0_i32_0 = arith.constant 0 : i32
    return %arg0, %c0_i32 : i32, i32
  }
}

</mosaic_0001>

<llo_original>
// kernel: tpu_custom_call.1
$region0: #{tpu_custom_call.1}
  #allocation0 [shape = 'u32[]', space=smem, size = 0x4, offset = 0x4, fixed_abs, tag = 'smem constant byte address 0x4 - core index']
  #allocation1 [shape = 'u32[72,128]{1,0:T(1,128)}', space=vmem, size = 0x9000, scoped, tag = 'internal scratch']
  %s0 = inlined_call_operand.hbm [shape: f32[8,8,384], index: 0, kind: input, shape index: {}]
  %s1 = inlined_call_operand.hbm [shape: bf16[128,896], index: 1, kind: input, shape index: {}]
  %s2 = inlined_call_operand.hbm [shape: bf16[128,512], index: 2, kind: input, shape index: {}]
  %s3 = inlined_call_operand.vmem [shape: f32[1,128], index: 3, kind: input, shape index: {}]
  %s4 = inlined_call_operand.hbm [shape: f32[1,512], index: 4, kind: input, shape index: {}]
  %s5 = inlined_call_operand.hbm [shape: f32[8,128], index: 5, kind: output, shape index: {}]
  %s6 = sld [smem:[#allocation0]]
  $region46: #{tpu_custom_call.1} parent=0
    _
  %s8 = ssub.s32 1, %s6
  %s9 = scalar_select 0, %s8, %s6
  $region1: #{tpu_custom_call.1} parent=0
    #allocation2 [shape = 'u8[98304]{0}', space=vmem, size = 0x18000, scoped, tag = 'input window, operand 0, single buffered']
    #allocation3 [shape = 's32[1]{0}', space=sflag, size = 0x4, scoped, tag = 'scoped memory for tpu_custom_call.1']
    #allocation4 [shape = 's32[1]{0}', space=sflag, size = 0x4, scoped, tag = 'scoped memory for tpu_custom_call.1']
    #allocation5 [shape = 'u8[229376]{0}', space=vmem, size = 0x38000, scoped, tag = 'input window, operand 1, single buffered']
    #allocation6 [shape = 's32[1]{0}', space=sflag, size = 0x4, scoped, tag = 'scoped memory for tpu_custom_call.1']
    #allocation7 [shape = 'u8[131072]{0}', space=vmem, size = 0x20000, scoped, tag = 'input window, operand 2, single buffered']
    #allocation8 [shape = 'u8[2048]{0}', space=vmem, size = 0x800, scoped, tag = 'input window, operand 4, single buffered']
    #allocation9 [shape = 's32[1]{0}', space=sflag, size = 0x4, scoped, tag = 'scoped memory for tpu_custom_call.1']
    #allocation10 [shape = 'u8[4096]{0}', space=vmem, size = 0x1000, scoped, tag = 'output window, operand 0, single buffered']
    %10 = vsyncpa [#allocation3], 0
    %11 = vsyncpa [#allocation6], 0
    %12 = vsyncpa [#allocation9], 0
    %13 = vsyncpa [#allocation4], 0
    // Predicated region
    $region2: #{tpu_custom_call.1} parent=1 // pred_check
      _
    $region3: #{tpu_custom_call.1} parent=1 // pred_check_branch
      %15 = sbr.rel (0) target = $region5
    $region4: #{tpu_custom_call.1} parent=1 // pred_region
      %17 = vsyncadd [#allocation3], 0
      %s18 = sshll.u32 %s0, 4
      %s19 = int_to_ptr.hbm [resolvable:$true] %s18
      %s20 = sshll.u32 [#allocation2], 4
      %s21 = int_to_ptr.vmem [resolvable:$true] %s20
      %26 = dma.hbm_to_vmem [thread:$0]  %s19, 3072, %s21, [#allocation3], 384, 384, 24
    $region5: #{tpu_custom_call.1} parent=1 // pred_fallthru
      _
    // Predicated region
    $region6: #{tpu_custom_call.1} parent=1 // pred_check
      _
    $region7: #{tpu_custom_call.1} parent=1 // pred_check_branch
      %28 = sbr.rel (0) target = $region9
    $region8: #{tpu_custom_call.1} parent=1 // pred_region
      %30 = vsyncadd [#allocation6], 0
      %s31 = sshll.u32 %s1, 4
      %s32 = int_to_ptr.hbm [resolvable:$true] %s31
      %s33 = sshll.u32 [#allocation5], 4
      %s34 = int_to_ptr.vmem [resolvable:$true] %s33
      %39 = dma.hbm_to_vmem [thread:$0]  %s32, 7168, %s34, [#allocation6], 448, 448, 28
    $region9: #{tpu_custom_call.1} parent=1 // pred_fallthru
      _
    // Predicated region
    $region10: #{tpu_custom_call.1} parent=1 // pred_check
      _
    $region11: #{tpu_custom_call.1} parent=1 // pred_check_branch
      %41 = sbr.rel (0) target = $region13
    $region12: #{tpu_custom_call.1} parent=1 // pred_region
      %43 = vsyncadd [#allocation6], 0
      %s44 = sshll.u32 %s2, 4
      %s45 = int_to_ptr.hbm [resolvable:$true] %s44
      %s46 = sshll.u32 [#allocation7], 4
      %s47 = int_to_ptr.vmem [resolvable:$true] %s46
      %52 = dma.hbm_to_vmem [thread:$0]  %s45, 4096, %s47, [#allocation6], 256, 256, 16
    $region13: #{tpu_custom_call.1} parent=1 // pred_fallthru
      _
    // Predicated region
    $region14: #{tpu_custom_call.1} parent=1 // pred_check
      _
    $region15: #{tpu_custom_call.1} parent=1 // pred_check_branch
      %54 = sbr.rel (0) target = $region17
    $region16: #{tpu_custom_call.1} parent=1 // pred_region
      _
    $region17: #{tpu_custom_call.1} parent=1 // pred_fallthru
      _
    // Predicated region
    $region18: #{tpu_custom_call.1} parent=1 // pred_check
      _
    $region19: #{tpu_custom_call.1} parent=1 // pred_check_branch
      %56 = sbr.rel (0) target = $region21
    $region20: #{tpu_custom_call.1} parent=1 // pred_region
      %58 = vsyncadd [#allocation9], 0
      %s60 = sshll.u32 %s4, 4
      %s61 = int_to_ptr.hbm [resolvable:$true] %s60
      %s62 = sshll.u32 [#allocation8], 4
      %s63 = int_to_ptr.vmem [resolvable:$true] %s62
      %65 = dma.hbm_to_vmem [thread:$0]  %s61, 64, %s63, [#allocation9]
    $region21: #{tpu_custom_call.1} parent=1 // pred_fallthru
      _
    // Predicated region
    $region22: #{tpu_custom_call.1} parent=1 // pred_check
      _
    $region23: #{tpu_custom_call.1} parent=1 // pred_check_branch
      %67 = sbr.rel (0) target = $region25
    $region24: #{tpu_custom_call.1} parent=1 // pred_region
      %69 = dma.done [#allocation3], 3072
    $region25: #{tpu_custom_call.1} parent=1 // pred_fallthru
      _
    // Predicated region
    $region26: #{tpu_custom_call.1} parent=1 // pred_check
      _
    $region27: #{tpu_custom_call.1} parent=1 // pred_check_branch
      %71 = sbr.rel (0) target = $region29
    $region28: #{tpu_custom_call.1} parent=1 // pred_region
      %73 = dma.done [#allocation6], 7168
    $region29: #{tpu_custom_call.1} parent=1 // pred_fallthru
      _
    // Predicated region
    $region30: #{tpu_custom_call.1} parent=1 // pred_check
      _
    $region31: #{tpu_custom_call.1} parent=1 // pred_check_branch
      %75 = sbr.rel (0) target = $region33
    $region32: #{tpu_custom_call.1} parent=1 // pred_region
      %77 = dma.done [#allocation6], 4096
    $region33: #{tpu_custom_call.1} parent=1 // pred_fallthru
      _
    // Predicated region
    $region34: #{tpu_custom_call.1} parent=1 // pred_check
      _
    $region35: #{tpu_custom_call.1} parent=1 // pred_check_branch
      %79 = sbr.rel (0) target = $region37
    $region36: #{tpu_custom_call.1} parent=1 // pred_region
      %81 = dma.done [#allocation9], 64
    $region37: #{tpu_custom_call.1} parent=1 // pred_fallthru
      _
    %v83 = vld [vmem:[%s3] sm:$0x1]
    %v84 = vld [vmem:[#allocation8] sm:$0xf]
    %v85 = vld [vmem:[#allocation2] sm:$0xff]
    %v86 = vld [vmem:[#allocation2 + $0x8] sm:$0xff]
    %v87 = vld [vmem:[#allocation2 + $0x10] sm:$0xff]
    %v88 = vadd.f32 %v85, 0.0
    %v89 = vxor.u32 %v88, 2147483648
    %v90 = vmul.f32 %v89, 1.442695
    %v91 = vpow.pop %v90
    %v92 = vadd.f32 %v91, 1.0
    %v93 = vrcp.pop %v92
    %v94 = vmul.f32 %v92, %v93
    %v95 = vsub.f32 1.0, %v94
    %v96 = vmul.f32 %v93, %v95
    %v97 = vadd.f32 %v93, %v96
    %vm98 = vweird.f32 %v92
    %vm99 = vweird.f32 %v93
    %vm100 = vmor %vm98, %vm99
    %v101 = vsel %vm100, %v93, %v97
    %v102 = vand.u32 2147483647, %v92
    %vm103 = vcmp.eq.f32.partialorder %v102, 8.507059e+37
    %v104 = vand.u32 %v92, 2147483648
    %v105 = vor.u32 1.1754944e-38, %v104
    %v106 = vsel %vm103, %v105, %v101
    %v107 = vmul.f32 1.0, %v106
    %v108 = vadd.f32 %v86, 0.0
    %v109 = vxor.u32 %v108, 2147483648
    %v110 = vmul.f32 %v109, 1.442695
    %v111 = vpow.pop %v110
    %v112 = vadd.f32 %v111, 1.0
    %v113 = vrcp.pop %v112
    %v114 = vmul.f32 %v112, %v113
    %v115 = vsub.f32 1.0, %v114
    %v116 = vmul.f32 %v113, %v115
    %v117 = vadd.f32 %v113, %v116
    %vm118 = vweird.f32 %v112
    %vm119 = vweird.f32 %v113
    %vm120 = vmor %vm118, %vm119
    %v121 = vsel %vm120, %v113, %v117
    %v122 = vand.u32 2147483647, %v112
    %vm123 = vcmp.eq.f32.partialorder %v122, 8.507059e+37
    %v124 = vand.u32 %v112, 2147483648
    %v125 = vor.u32 1.1754944e-38, %v124
    %v126 = vsel %vm123, %v125, %v121
    %v127 = vmul.f32 1.0, %v126
    %v129 = vperm.slane %v83, 0
    %v131 = vadd.f32 %v129, 0.0
    %v132 = vmul.f32 %v107, %v131
    %v133 = vadd.f32 %v87, %v132
    %v134 = vtanh.pop %v133
    %v135 = vsub.f32 1.0, %v127
    %v136 = vmul.f32 %v135, %v134
    %v137 = vmul.f32 %v127, 0.0
    %v138 = vadd.f32 %v136, %v137
    %v139 = vpack.c.bf16 %v138, %v138
    %v140 = vld [vmem:[#allocation5] sm:$0xff]
    %v141 = vld [vmem:[#allocation5 + $0x8] sm:$0xff]
    %v142 = vld [vmem:[#allocation5 + $0x10] sm:$0xff]
    %v143 = vld [vmem:[#allocation5 + $0x18] sm:$0xf]
    %v144 = vld [vmem:[#allocation5 + $0x1c] sm:$0xff]
    %v145 = vld [vmem:[#allocation5 + $0x24] sm:$0xff]
    %v146 = vld [vmem:[#allocation5 + $0x2c] sm:$0xff]
    %v147 = vld [vmem:[#allocation5 + $0x34] sm:$0xf]
    %v148 = vld [vmem:[#allocation5 + $0x38] sm:$0xff]
    %v149 = vld [vmem:[#allocation5 + $0x40] sm:$0xff]
    %v150 = vld [vmem:[#allocation5 + $0x48] sm:$0xff]
    %v151 = vld [vmem:[#allocation5 + $0x50] sm:$0xf]
    %v152 = vld [vmem:[#allocation5 + $0x54] sm:$0xff]
    %v153 = vld [vmem:[#allocation5 + $0x5c] sm:$0xff]
    %v154 = vld [vmem:[#allocation5 + $0x64] sm:$0xff]
    %v155 = vld [vmem:[#allocation5 + $0x6c] sm:$0xf]
    %v156 = vld [vmem:[#allocation5 + $0x70] sm:$0xff]
    %v157 = vld [vmem:[#allocation5 + $0x78] sm:$0xff]
    %v158 = vld [vmem:[#allocation5 + $0x80] sm:$0xff]
    %v159 = vld [vmem:[#allocation5 + $0x88] sm:$0xf]
    %v160 = vld [vmem:[#allocation5 + $0x8c] sm:$0xff]
    %v161 = vld [vmem:[#allocation5 + $0x94] sm:$0xff]
    %v162 = vld [vmem:[#allocation5 + $0x9c] sm:$0xff]
    %v163 = vld [vmem:[#allocation5 + $0xa4] sm:$0xf]
    %v164 = vld [vmem:[#allocation5 + $0xa8] sm:$0xff]
    %v165 = vld [vmem:[#allocation5 + $0xb0] sm:$0xff]
    %v166 = vld [vmem:[#allocation5 + $0xb8] sm:$0xff]
    %v167 = vld [vmem:[#allocation5 + $0xc0] sm:$0xf]
    %v168 = vld [vmem:[#allocation5 + $0xc4] sm:$0xff]
    %v169 = vld [vmem:[#allocation5 + $0xcc] sm:$0xff]
    %v170 = vld [vmem:[#allocation5 + $0xd4] sm:$0xff]
    %v171 = vld [vmem:[#allocation5 + $0xdc] sm:$0xf]
    %v172 = vld [vmem:[#allocation5 + $0xe0] sm:$0xff]
    %v173 = vld [vmem:[#allocation5 + $0xe8] sm:$0xff]
    %v174 = vld [vmem:[#allocation5 + $0xf0] sm:$0xff]
    %v175 = vld [vmem:[#allocation5 + $0xf8] sm:$0xf]
    %v176 = vld [vmem:[#allocation5 + $0xfc] sm:$0xff]
    %v177 = vld [vmem:[#allocation5 + $0x104] sm:$0xff]
    %v178 = vld [vmem:[#allocation5 + $0x10c] sm:$0xff]
    %v179 = vld [vmem:[#allocation5 + $0x114] sm:$0xf]
    %v180 = vld [vmem:[#allocation5 + $0x118] sm:$0xff]
    %v181 = vld [vmem:[#allocation5 + $0x120] sm:$0xff]
    %v182 = vld [vmem:[#allocation5 + $0x128] sm:$0xff]
    %v183 = vld [vmem:[#allocation5 + $0x130] sm:$0xf]
    %v184 = vld [vmem:[#allocation5 + $0x134] sm:$0xff]
    %v185 = vld [vmem:[#allocation5 + $0x13c] sm:$0xff]
    %v186 = vld [vmem:[#allocation5 + $0x144] sm:$0xff]
    %v187 = vld [vmem:[#allocation5 + $0x14c] sm:$0xf]
    %v188 = vld [vmem:[#allocation5 + $0x150] sm:$0xff]
    %v189 = vld [vmem:[#allocation5 + $0x158] sm:$0xff]
    %v190 = vld [vmem:[#allocation5 + $0x160] sm:$0xff]
    %v191 = vld [vmem:[#allocation5 + $0x168] sm:$0xf]
    %v192 = vld [vmem:[#allocation5 + $0x16c] sm:$0xff]
    %v193 = vld [vmem:[#allocation5 + $0x174] sm:$0xff]
    %v194 = vld [vmem:[#allocation5 + $0x17c] sm:$0xff]
    %v195 = vld [vmem:[#allocation5 + $0x184] sm:$0xf]
    %v196 = vld [vmem:[#allocation5 + $0x188] sm:$0xff]
    %v197 = vld [vmem:[#allocation5 + $0x190] sm:$0xff]
    %v198 = vld [vmem:[#allocation5 + $0x198] sm:$0xff]
    %v199 = vld [vmem:[#allocation5 + $0x1a0] sm:$0xf]
    %v200 = vld [vmem:[#allocation5 + $0x1a4] sm:$0xff]
    %v201 = vld [vmem:[#allocation5 + $0x1ac] sm:$0xff]
    %v202 = vld [vmem:[#allocation5 + $0x1b4] sm:$0xff]
    %v203 = vld [vmem:[#allocation5 + $0x1bc] sm:$0xf]
    %v268 = vunpack.c.l.b16 %v140
    %v269 = vunpack.c.h.b16 %v140
    %v270 = vunpack.c.l.b16 %v141
    %v271 = vunpack.c.h.b16 %v141
    %v272 = vunpack.c.l.b16 %v142
    %v273 = vunpack.c.h.b16 %v142
    %v274 = vunpack.c.l.b16 %v143
    %v275 = vunpack.c.l.b16 %v144
    %v276 = vunpack.c.h.b16 %v144
    %v277 = vunpack.c.l.b16 %v145
    %v278 = vunpack.c.h.b16 %v145
    %v279 = vunpack.c.l.b16 %v146
    %v280 = vunpack.c.h.b16 %v146
    %v281 = vunpack.c.l.b16 %v147
    %v282 = vunpack.c.l.b16 %v148
    %v283 = vunpack.c.h.b16 %v148
    %v284 = vunpack.c.l.b16 %v149
    %v285 = vunpack.c.h.b16 %v149
    %v286 = vunpack.c.l.b16 %v150
    %v287 = vunpack.c.h.b16 %v150
    %v288 = vunpack.c.l.b16 %v151
    %v289 = vunpack.c.l.b16 %v152
    %v290 = vunpack.c.h.b16 %v152
    %v291 = vunpack.c.l.b16 %v153
    %v292 = vunpack.c.h.b16 %v153
    %v293 = vunpack.c.l.b16 %v154
    %v294 = vunpack.c.h.b16 %v154
    %v295 = vunpack.c.l.b16 %v155
    %v296 = vunpack.c.l.b16 %v156
    %v297 = vunpack.c.h.b16 %v156
    %v298 = vunpack.c.l.b16 %v157
    %v299 = vunpack.c.h.b16 %v157
    %v300 = vunpack.c.l.b16 %v158
    %v301 = vunpack.c.h.b16 %v158
    %v302 = vunpack.c.l.b16 %v159
    %v303 = vunpack.c.l.b16 %v160
    %v304 = vunpack.c.h.b16 %v160
    %v305 = vunpack.c.l.b16 %v161
    %v306 = vunpack.c.h.b16 %v161
    %v307 = vunpack.c.l.b16 %v162
    %v308 = vunpack.c.h.b16 %v162
    %v309 = vunpack.c.l.b16 %v163
    %v310 = vunpack.c.l.b16 %v164
    %v311 = vunpack.c.h.b16 %v164
    %v312 = vunpack.c.l.b16 %v165
    %v313 = vunpack.c.h.b16 %v165
    %v314 = vunpack.c.l.b16 %v166
    %v315 = vunpack.c.h.b16 %v166
    %v316 = vunpack.c.l.b16 %v167
    %v317 = vunpack.c.l.b16 %v168
    %v318 = vunpack.c.h.b16 %v168
    %v319 = vunpack.c.l.b16 %v169
    %v320 = vunpack.c.h.b16 %v169
    %v321 = vunpack.c.l.b16 %v170
    %v322 = vunpack.c.h.b16 %v170
    %v323 = vunpack.c.l.b16 %v171
    %v324 = vunpack.c.l.b16 %v172
    %v325 = vunpack.c.h.b16 %v172
    %v326 = vunpack.c.l.b16 %v173
    %v327 = vunpack.c.h.b16 %v173
    %v328 = vunpack.c.l.b16 %v174
    %v329 = vunpack.c.h.b16 %v174
    %v330 = vunpack.c.l.b16 %v175
    %v331 = vunpack.c.l.b16 %v176
    %v332 = vunpack.c.h.b16 %v176
    %v333 = vunpack.c.l.b16 %v177
    %v334 = vunpack.c.h.b16 %v177
    %v335 = vunpack.c.l.b16 %v178
    %v336 = vunpack.c.h.b16 %v178
    %v337 = vunpack.c.l.b16 %v179
    %v338 = vunpack.c.l.b16 %v180
    %v339 = vunpack.c.h.b16 %v180
    %v340 = vunpack.c.l.b16 %v181
    %v341 = vunpack.c.h.b16 %v181
    %v342 = vunpack.c.l.b16 %v182
    %v343 = vunpack.c.h.b16 %v182
    %v344 = vunpack.c.l.b16 %v183
    %v345 = vunpack.c.l.b16 %v184
    %v346 = vunpack.c.h.b16 %v184
    %v347 = vunpack.c.l.b16 %v185
    %v348 = vunpack.c.h.b16 %v185
    %v349 = vunpack.c.l.b16 %v186
    %v350 = vunpack.c.h.b16 %v186
    %v351 = vunpack.c.l.b16 %v187
    %v352 = vunpack.c.l.b16 %v188
    %v353 = vunpack.c.h.b16 %v188
    %v354 = vunpack.c.l.b16 %v189
    %v355 = vunpack.c.h.b16 %v189
    %v356 = vunpack.c.l.b16 %v190
    %v357 = vunpack.c.h.b16 %v190
    %v358 = vunpack.c.l.b16 %v191
    %v359 = vunpack.c.l.b16 %v192
    %v360 = vunpack.c.h.b16 %v192
    %v361 = vunpack.c.l.b16 %v193
    %v362 = vunpack.c.h.b16 %v193
    %v363 = vunpack.c.l.b16 %v194
    %v364 = vunpack.c.h.b16 %v194
    %v365 = vunpack.c.l.b16 %v195
    %v366 = vunpack.c.l.b16 %v196
    %v367 = vunpack.c.h.b16 %v196
    %v368 = vunpack.c.l.b16 %v197
    %v369 = vunpack.c.h.b16 %v197
    %v370 = vunpack.c.l.b16 %v198
    %v371 = vunpack.c.h.b16 %v198
    %v372 = vunpack.c.l.b16 %v199
    %v373 = vunpack.c.l.b16 %v200
    %v374 = vunpack.c.h.b16 %v200
    %v375 = vunpack.c.l.b16 %v201
    %v376 = vunpack.c.h.b16 %v201
    %v377 = vunpack.c.l.b16 %v202
    %v378 = vunpack.c.h.b16 %v202
    %v379 = vunpack.c.l.b16 %v203
    %v380 = vpack.c.b16 %v275, %v268
    %v381 = vpack.c.b16 %v276, %v269
    %v382 = vpack.c.b16 %v277, %v270
    %v383 = vpack.c.b16 %v278, %v271
    %v384 = vpack.c.b16 %v279, %v272
    %v385 = vpack.c.b16 %v280, %v273
    %v386 = vpack.c.b16 %v281, %v274
    %v387 = vpack.c.b16 %v289, %v282
    %v388 = vpack.c.b16 %v290, %v283
    %v389 = vpack.c.b16 %v291, %v284
    %v390 = vpack.c.b16 %v292, %v285
    %v391 = vpack.c.b16 %v293, %v286
    %v392 = vpack.c.b16 %v294, %v287
    %v393 = vpack.c.b16 %v295, %v288
    %v394 = vpack.c.b16 %v303, %v296
    %v395 = vpack.c.b16 %v304, %v297
    %v396 = vpack.c.b16 %v305, %v298
    %v397 = vpack.c.b16 %v306, %v299
    %v398 = vpack.c.b16 %v307, %v300
    %v399 = vpack.c.b16 %v308, %v301
    %v400 = vpack.c.b16 %v309, %v302
    %v401 = vpack.c.b16 %v317, %v310
    %v402 = vpack.c.b16 %v318, %v311
    %v403 = vpack.c.b16 %v319, %v312
    %v404 = vpack.c.b16 %v320, %v313
    %v405 = vpack.c.b16 %v321, %v314
    %v406 = vpack.c.b16 %v322, %v315
    %v407 = vpack.c.b16 %v323, %v316
    %v408 = vpack.c.b16 %v331, %v324
    %v409 = vpack.c.b16 %v332, %v325
    %v410 = vpack.c.b16 %v333, %v326
    %v411 = vpack.c.b16 %v334, %v327
    %v412 = vpack.c.b16 %v335, %v328
    %v413 = vpack.c.b16 %v336, %v329
    %v414 = vpack.c.b16 %v337, %v330
    %v415 = vpack.c.b16 %v345, %v338
    %v416 = vpack.c.b16 %v346, %v339
    %v417 = vpack.c.b16 %v347, %v340
    %v418 = vpack.c.b16 %v348, %v341
    %v419 = vpack.c.b16 %v349, %v342
    %v420 = vpack.c.b16 %v350, %v343
    %v421 = vpack.c.b16 %v351, %v344
    %v422 = vpack.c.b16 %v359, %v352
    %v423 = vpack.c.b16 %v360, %v353
    %v424 = vpack.c.b16 %v361, %v354
    %v425 = vpack.c.b16 %v362, %v355
    %v426 = vpack.c.b16 %v363, %v356
    %v427 = vpack.c.b16 %v364, %v357
    %v428 = vpack.c.b16 %v365, %v358
    %v429 = vpack.c.b16 %v373, %v366
    %v430 = vpack.c.b16 %v374, %v367
    %v431 = vpack.c.b16 %v375, %v368
    %v432 = vpack.c.b16 %v376, %v369
    %v433 = vpack.c.b16 %v377, %v370
    %v434 = vpack.c.b16 %v378, %v371
    %v435 = vpack.c.b16 %v379, %v372
    %492 = vmatpush.bf16.msra.mxu0 %v429
    %493 = vmatpush.bf16.msra.mxu0 %v422
    %494 = vmatpush.bf16.msra.mxu0 %v415
    %495 = vmatpush.bf16.msra.mxu0 %v408
    %496 = vmatpush.bf16.msra.mxu0 %v401
    %497 = vmatpush.bf16.msra.mxu0 %v394
    %498 = vmatpush.bf16.msra.mxu0 %v387
    %499 = vmatpush.bf16.msra.mxu0 %v380
    %500 = vmatmul.bf16.gmra.mxu0 %v139
    %v501 = vpop.f32.mrf.mxu0
    %v502 = vadd.f32 0.0, %v501
    %v503 = vpop.f32.mrf.mxu0
    %504 = vdwg.mxu0
    %505 = vmatpush.bf16.msra.mxu0 %v430
    %506 = vmatpush.bf16.msra.mxu0 %v423
    %507 = vmatpush.bf16.msra.mxu0 %v416
    %508 = vmatpush.bf16.msra.mxu0 %v409
    %509 = vmatpush.bf16.msra.mxu0 %v402
    %510 = vmatpush.bf16.msra.mxu0 %v395
    %511 = vmatpush.bf16.msra.mxu0 %v388
    %512 = vmatpush.bf16.msra.mxu0 %v381
    %513 = vmatmul.bf16.gmra.mxu0 %v139
    %v514 = vpop.f32.mrf.mxu0
    %v515 = vadd.f32 0.0, %v514
    %v516 = vpop.f32.mrf.mxu0
    %517 = vdwg.mxu0
    %518 = vmatpush.bf16.msra.mxu0 %v431
    %519 = vmatpush.bf16.msra.mxu0 %v424
    %520 = vmatpush.bf16.msra.mxu0 %v417
    %521 = vmatpush.bf16.msra.mxu0 %v410
    %522 = vmatpush.bf16.msra.mxu0 %v403
    %523 = vmatpush.bf16.msra.mxu0 %v396
    %524 = vmatpush.bf16.msra.mxu0 %v389
    %525 = vmatpush.bf16.msra.mxu0 %v382
    %526 = vmatmul.bf16.gmra.mxu0 %v139
    %v527 = vpop.f32.mrf.mxu0
    %v528 = vadd.f32 0.0, %v527
    %v529 = vpop.f32.mrf.mxu0
    %530 = vdwg.mxu0
    %531 = vmatpush.bf16.msra.mxu0 %v432
    %532 = vmatpush.bf16.msra.mxu0 %v425
    %533 = vmatpush.bf16.msra.mxu0 %v418
    %534 = vmatpush.bf16.msra.mxu0 %v411
    %535 = vmatpush.bf16.msra.mxu0 %v404
    %536 = vmatpush.bf16.msra.mxu0 %v397
    %537 = vmatpush.bf16.msra.mxu0 %v390
    %538 = vmatpush.bf16.msra.mxu0 %v383
    %539 = vmatmul.bf16.gmra.mxu0 %v139
    %v540 = vpop.f32.mrf.mxu0
    %v541 = vadd.f32 0.0, %v540
    %v542 = vpop.f32.mrf.mxu0
    %543 = vdwg.mxu0
    %544 = vmatpush.bf16.msra.mxu0 %v433
    %545 = vmatpush.bf16.msra.mxu0 %v426
    %546 = vmatpush.bf16.msra.mxu0 %v419
    %547 = vmatpush.bf16.msra.mxu0 %v412
    %548 = vmatpush.bf16.msra.mxu0 %v405
    %549 = vmatpush.bf16.msra.mxu0 %v398
    %550 = vmatpush.bf16.msra.mxu0 %v391
    %551 = vmatpush.bf16.msra.mxu0 %v384
    %552 = vmatmul.bf16.gmra.mxu0 %v139
    %v553 = vpop.f32.mrf.mxu0
    %v554 = vadd.f32 0.0, %v553
    %v555 = vpop.f32.mrf.mxu0
    %556 = vdwg.mxu0
    %557 = vmatpush.bf16.msra.mxu0 %v434
    %558 = vmatpush.bf16.msra.mxu0 %v427
    %559 = vmatpush.bf16.msra.mxu0 %v420
    %560 = vmatpush.bf16.msra.mxu0 %v413
    %561 = vmatpush.bf16.msra.mxu0 %v406
    %562 = vmatpush.bf16.msra.mxu0 %v399
    %563 = vmatpush.bf16.msra.mxu0 %v392
    %564 = vmatpush.bf16.msra.mxu0 %v385
    %565 = vmatmul.bf16.gmra.mxu0 %v139
    %v566 = vpop.f32.mrf.mxu0
    %v567 = vadd.f32 0.0, %v566
    %v568 = vpop.f32.mrf.mxu0
    %569 = vdwg.mxu0
    %570 = vmatpush.bf16.msra.mxu0 %v435
    %571 = vmatpush.bf16.msra.mxu0 %v428
    %572 = vmatpush.bf16.msra.mxu0 %v421
    %573 = vmatpush.bf16.msra.mxu0 %v414
    %574 = vmatpush.bf16.msra.mxu0 %v407
    %575 = vmatpush.bf16.msra.mxu0 %v400
    %576 = vmatpush.bf16.msra.mxu0 %v393
    %577 = vmatpush.bf16.msra.mxu0 %v386
    %578 = vmatmul.bf16.gmra.mxu0 %v139
    %v579 = vpop.f32.mrf.mxu0
    %v580 = vadd.f32 0.0, %v579
    %v581 = vpop.f32.mrf.mxu0
    %582 = vdwg.mxu0
    %v583 = vld [vmem:[#allocation7] sm:$0xff]
    %v584 = vld [vmem:[#allocation7 + $0x8] sm:$0xff]
    %v585 = vld [vmem:[#allocation7 + $0x10] sm:$0xff]
    %v586 = vld [vmem:[#allocation7 + $0x18] sm:$0xff]
    %v587 = vld [vmem:[#allocation7 + $0x20] sm:$0xff]
    %v588 = vld [vmem:[#allocation7 + $0x28] sm:$0xff]
    %v589 = vld [vmem:[#allocation7 + $0x30] sm:$0xff]
    %v590 = vld [vmem:[#allocation7 + $0x38] sm:$0xff]
    %v591 = vld [vmem:[#allocation7 + $0x40] sm:$0xff]
    %v592 = vld [vmem:[#allocation7 + $0x48] sm:$0xff]
    %v593 = vld [vmem:[#allocation7 + $0x50] sm:$0xff]
    %v594 = vld [vmem:[#allocation7 + $0x58] sm:$0xff]
    %v595 = vld [vmem:[#allocation7 + $0x60] sm:$0xff]
    %v596 = vld [vmem:[#allocation7 + $0x68] sm:$0xff]
    %v597 = vld [vmem:[#allocation7 + $0x70] sm:$0xff]
    %v598 = vld [vmem:[#allocation7 + $0x78] sm:$0xff]
    %v599 = vld [vmem:[#allocation7 + $0x80] sm:$0xff]
    %v600 = vld [vmem:[#allocation7 + $0x88] sm:$0xff]
    %v601 = vld [vmem:[#allocation7 + $0x90] sm:$0xff]
    %v602 = vld [vmem:[#allocation7 + $0x98] sm:$0xff]
    %v603 = vld [vmem:[#allocation7 + $0xa0] sm:$0xff]
    %v604 = vld [vmem:[#allocation7 + $0xa8] sm:$0xff]
    %v605 = vld [vmem:[#allocation7 + $0xb0] sm:$0xff]
    %v606 = vld [vmem:[#allocation7 + $0xb8] sm:$0xff]
    %v607 = vld [vmem:[#allocation7 + $0xc0] sm:$0xff]
    %v608 = vld [vmem:[#allocation7 + $0xc8] sm:$0xff]
    %v609 = vld [vmem:[#allocation7 + $0xd0] sm:$0xff]
    %v610 = vld [vmem:[#allocation7 + $0xd8] sm:$0xff]
    %v611 = vld [vmem:[#allocation7 + $0xe0] sm:$0xff]
    %v612 = vld [vmem:[#allocation7 + $0xe8] sm:$0xff]
    %v613 = vld [vmem:[#allocation7 + $0xf0] sm:$0xff]
    %v614 = vld [vmem:[#allocation7 + $0xf8] sm:$0xff]
    %v647 = vunpack.c.l.b16 %v583
    %v648 = vunpack.c.h.b16 %v583
    %v649 = vunpack.c.l.b16 %v584
    %v650 = vunpack.c.h.b16 %v584
    %v651 = vunpack.c.l.b16 %v585
    %v652 = vunpack.c.h.b16 %v585
    %v653 = vunpack.c.l.b16 %v586
    %v654 = vunpack.c.h.b16 %v586
    %v655 = vunpack.c.l.b16 %v587
    %v656 = vunpack.c.h.b16 %v587
    %v657 = vunpack.c.l.b16 %v588
    %v658 = vunpack.c.h.b16 %v588
    %v659 = vunpack.c.l.b16 %v589
    %v660 = vunpack.c.h.b16 %v589
    %v661 = vunpack.c.l.b16 %v590
    %v662 = vunpack.c.h.b16 %v590
    %v663 = vunpack.c.l.b16 %v591
    %v664 = vunpack.c.h.b16 %v591
    %v665 = vunpack.c.l.b16 %v592
    %v666 = vunpack.c.h.b16 %v592
    %v667 = vunpack.c.l.b16 %v593
    %v668 = vunpack.c.h.b16 %v593
    %v669 = vunpack.c.l.b16 %v594
    %v670 = vunpack.c.h.b16 %v594
    %v671 = vunpack.c.l.b16 %v595
    %v672 = vunpack.c.h.b16 %v595
    %v673 = vunpack.c.l.b16 %v596
    %v674 = vunpack.c.h.b16 %v596
    %v675 = vunpack.c.l.b16 %v597
    %v676 = vunpack.c.h.b16 %v597
    %v677 = vunpack.c.l.b16 %v598
    %v678 = vunpack.c.h.b16 %v598
    %v679 = vunpack.c.l.b16 %v599
    %v680 = vunpack.c.h.b16 %v599
    %v681 = vunpack.c.l.b16 %v600
    %v682 = vunpack.c.h.b16 %v600
    %v683 = vunpack.c.l.b16 %v601
    %v684 = vunpack.c.h.b16 %v601
    %v685 = vunpack.c.l.b16 %v602
    %v686 = vunpack.c.h.b16 %v602
    %v687 = vunpack.c.l.b16 %v603
    %v688 = vunpack.c.h.b16 %v603
    %v689 = vunpack.c.l.b16 %v604
    %v690 = vunpack.c.h.b16 %v604
    %v691 = vunpack.c.l.b16 %v605
    %v692 = vunpack.c.h.b16 %v605
    %v693 = vunpack.c.l.b16 %v606
    %v694 = vunpack.c.h.b16 %v606
    %v695 = vunpack.c.l.b16 %v607
    %v696 = vunpack.c.h.b16 %v607
    %v697 = vunpack.c.l.b16 %v608
    %v698 = vunpack.c.h.b16 %v608
    %v699 = vunpack.c.l.b16 %v609
    %v700 = vunpack.c.h.b16 %v609
    %v701 = vunpack.c.l.b16 %v610
    %v702 = vunpack.c.h.b16 %v610
    %v703 = vunpack.c.l.b16 %v611
    %v704 = vunpack.c.h.b16 %v611
    %v705 = vunpack.c.l.b16 %v612
    %v706 = vunpack.c.h.b16 %v612
    %v707 = vunpack.c.l.b16 %v613
    %v708 = vunpack.c.h.b16 %v613
    %v709 = vunpack.c.l.b16 %v614
    %v710 = vunpack.c.h.b16 %v614
    %v711 = vpack.c.b16 %v651, %v647
    %v712 = vpack.c.b16 %v652, %v648
    %v713 = vpack.c.b16 %v653, %v649
    %v714 = vpack.c.b16 %v654, %v650
    %v715 = vpack.c.b16 %v659, %v655
    %v716 = vpack.c.b16 %v660, %v656
    %v717 = vpack.c.b16 %v661, %v657
    %v718 = vpack.c.b16 %v662, %v658
    %v719 = vpack.c.b16 %v667, %v663
    %v720 = vpack.c.b16 %v668, %v664
    %v721 = vpack.c.b16 %v669, %v665
    %v722 = vpack.c.b16 %v670, %v666
    %v723 = vpack.c.b16 %v675, %v671
    %v724 = vpack.c.b16 %v676, %v672
    %v725 = vpack.c.b16 %v677, %v673
    %v726 = vpack.c.b16 %v678, %v674
    %v727 = vpack.c.b16 %v683, %v679
    %v728 = vpack.c.b16 %v684, %v680
    %v729 = vpack.c.b16 %v685, %v681
    %v730 = vpack.c.b16 %v686, %v682
    %v731 = vpack.c.b16 %v691, %v687
    %v732 = vpack.c.b16 %v692, %v688
    %v733 = vpack.c.b16 %v693, %v689
    %v734 = vpack.c.b16 %v694, %v690
    %v735 = vpack.c.b16 %v699, %v695
    %v736 = vpack.c.b16 %v700, %v696
    %v737 = vpack.c.b16 %v701, %v697
    %v738 = vpack.c.b16 %v702, %v698
    %v739 = vpack.c.b16 %v707, %v703
    %v740 = vpack.c.b16 %v708, %v704
    %v741 = vpack.c.b16 %v709, %v705
    %v742 = vpack.c.b16 %v710, %v706
    %775 = vmatpush.bf16.msra.mxu0 %v739
    %776 = vmatpush.bf16.msra.mxu0 %v735
    %777 = vmatpush.bf16.msra.mxu0 %v731
    %778 = vmatpush.bf16.msra.mxu0 %v727
    %779 = vmatpush.bf16.msra.mxu0 %v723
    %780 = vmatpush.bf16.msra.mxu0 %v719
    %781 = vmatpush.bf16.msra.mxu0 %v715
    %782 = vmatpush.bf16.msra.mxu0 %v711
    %783 = vmatmul.bf16.gmra.mxu0 0
    %v784 = vpop.f32.mrf.mxu0
    %v785 = vadd.f32 0.0, %v784
    %v786 = vpop.f32.mrf.mxu0
    %787 = vdwg.mxu0
    %788 = vmatpush.bf16.msra.mxu0 %v740
    %789 = vmatpush.bf16.msra.mxu0 %v736
    %790 = vmatpush.bf16.msra.mxu0 %v732
    %791 = vmatpush.bf16.msra.mxu0 %v728
    %792 = vmatpush.bf16.msra.mxu0 %v724
    %793 = vmatpush.bf16.msra.mxu0 %v720
    %794 = vmatpush.bf16.msra.mxu0 %v716
    %795 = vmatpush.bf16.msra.mxu0 %v712
    %796 = vmatmul.bf16.gmra.mxu0 0
    %v797 = vpop.f32.mrf.mxu0
    %v798 = vadd.f32 0.0, %v797
    %v799 = vpop.f32.mrf.mxu0
    %800 = vdwg.mxu0
    %801 = vmatpush.bf16.msra.mxu0 %v741
    %802 = vmatpush.bf16.msra.mxu0 %v737
    %803 = vmatpush.bf16.msra.mxu0 %v733
    %804 = vmatpush.bf16.msra.mxu0 %v729
    %805 = vmatpush.bf16.msra.mxu0 %v725
    %806 = vmatpush.bf16.msra.mxu0 %v721
    %807 = vmatpush.bf16.msra.mxu0 %v717
    %808 = vmatpush.bf16.msra.mxu0 %v713
    %809 = vmatmul.bf16.gmra.mxu0 0
    %v810 = vpop.f32.mrf.mxu0
    %v811 = vadd.f32 0.0, %v810
    %v812 = vpop.f32.mrf.mxu0
    %813 = vdwg.mxu0
    %814 = vmatpush.bf16.msra.mxu0 %v742
    %815 = vmatpush.bf16.msra.mxu0 %v738
    %816 = vmatpush.bf16.msra.mxu0 %v734
    %817 = vmatpush.bf16.msra.mxu0 %v730
    %818 = vmatpush.bf16.msra.mxu0 %v726
    %819 = vmatpush.bf16.msra.mxu0 %v722
    %820 = vmatpush.bf16.msra.mxu0 %v718
    %821 = vmatpush.bf16.msra.mxu0 %v714
    %822 = vmatmul.bf16.gmra.mxu0 0
    %v823 = vpop.f32.mrf.mxu0
    %v824 = vadd.f32 0.0, %v823
    %v825 = vpop.f32.mrf.mxu0
    %826 = vdwg.mxu0
    %v827 = vadd.f32 %v541, %v785
    %v828 = vadd.f32 %v554, %v798
    %v829 = vadd.f32 %v567, %v811
    %v830 = vadd.f32 %v580, %v824
    %v832 = vperm.slane %v84, 0
    %v833 = vperm.slane %v84, 1
    %v834 = vperm.slane %v84, 2
    %v835 = vperm.slane %v84, 3
    %v840 = vadd.f32 %v827, %v832
    %v841 = vadd.f32 %v828, %v833
    %v842 = vadd.f32 %v829, %v834
    %v843 = vadd.f32 %v830, %v835
    %v844 = vxor.u32 %v840, 2147483648
    %v845 = vmul.f32 %v844, 1.442695
    %v846 = vpow.pop %v845
    %v847 = vadd.f32 %v846, 1.0
    %v848 = vrcp.pop %v847
    %v849 = vmul.f32 %v847, %v848
    %v850 = vsub.f32 1.0, %v849
    %v851 = vmul.f32 %v848, %v850
    %v852 = vadd.f32 %v848, %v851
    %vm853 = vweird.f32 %v847
    %vm854 = vweird.f32 %v848
    %vm855 = vmor %vm853, %vm854
    %v856 = vsel %vm855, %v848, %v852
    %v857 = vand.u32 2147483647, %v847
    %vm858 = vcmp.eq.f32.partialorder %v857, 8.507059e+37
    %v859 = vand.u32 %v847, 2147483648
    %v860 = vor.u32 1.1754944e-38, %v859
    %v861 = vsel %vm858, %v860, %v856
    %v862 = vmul.f32 1.0, %v861
    %v863 = vxor.u32 %v841, 2147483648
    %v864 = vmul.f32 %v863, 1.442695
    %v865 = vpow.pop %v864
    %v866 = vadd.f32 %v865, 1.0
    %v867 = vrcp.pop %v866
    %v868 = vmul.f32 %v866, %v867
    %v869 = vsub.f32 1.0, %v868
    %v870 = vmul.f32 %v867, %v869
    %v871 = vadd.f32 %v867, %v870
    %vm872 = vweird.f32 %v866
    %vm873 = vweird.f32 %v867
    %vm874 = vmor %vm872, %vm873
    %v875 = vsel %vm874, %v867, %v871
    %v876 = vand.u32 2147483647, %v866
    %vm877 = vcmp.eq.f32.partialorder %v876, 8.507059e+37
    %v878 = vand.u32 %v866, 2147483648
    %v879 = vor.u32 1.1754944e-38, %v878
    %v880 = vsel %vm877, %v879, %v875
    %v881 = vmul.f32 1.0, %v880
    %v882 = vmul.f32 %v862, %v843
    %v883 = vadd.f32 %v842, %v882
    %v884 = vtanh.pop %v883
    %v885 = vsub.f32 1.0, %v881
    %v886 = vmul.f32 %v885, %v884
    %v887 = vmul.f32 %v881, 0.0
    %v888 = vadd.f32 %v886, %v887
    %s889 = scalar_lea.vmem [#allocation2], 24
    %v890 = vld [vmem:[%s889] sm:$0xff]
    %v891 = vld [vmem:[%s889 + $0x8] sm:$0xff]
    %v892 = vld [vmem:[%s889 + $0x10] sm:$0xff]
    %v893 = vadd.f32 %v890, %v502
    %v894 = vxor.u32 %v893, 2147483648
    %v895 = vmul.f32 %v894, 1.442695
    %v896 = vpow.pop %v895
    %v897 = vadd.f32 %v896, 1.0
    %v898 = vrcp.pop %v897
    %v899 = vmul.f32 %v897, %v898
    %v900 = vsub.f32 1.0, %v899
    %v901 = vmul.f32 %v898, %v900
    %v902 = vadd.f32 %v898, %v901
    %vm903 = vweird.f32 %v897
    %vm904 = vweird.f32 %v898
    %vm905 = vmor %vm903, %vm904
    %v906 = vsel %vm905, %v898, %v902
    %v907 = vand.u32 2147483647, %v897
    %vm908 = vcmp.eq.f32.partialorder %v907, 8.507059e+37
    %v909 = vand.u32 %v897, 2147483648
    %v910 = vor.u32 1.1754944e-38, %v909
    %v911 = vsel %vm908, %v910, %v906
    %v912 = vmul.f32 1.0, %v911
    %v913 = vadd.f32 %v891, %v515
    %v914 = vxor.u32 %v913, 2147483648
    %v915 = vmul.f32 %v914, 1.442695
    %v916 = vpow.pop %v915
    %v917 = vadd.f32 %v916, 1.0
    %v918 = vrcp.pop %v917
    %v919 = vmul.f32 %v917, %v918
    %v920 = vsub.f32 1.0, %v919
    %v921 = vmul.f32 %v918, %v920
    %v922 = vadd.f32 %v918, %v921
    %vm923 = vweird.f32 %v917
    %vm924 = vweird.f32 %v918
    %vm925 = vmor %vm923, %vm924
    %v926 = vsel %vm925, %v918, %v922
    %v927 = vand.u32 2147483647, %v917
    %vm928 = vcmp.eq.f32.partialorder %v927, 8.507059e+37
    %v929 = vand.u32 %v917, 2147483648
    %v930 = vor.u32 1.1754944e-38, %v929
    %v931 = vsel %vm928, %v930, %v926
    %v932 = vmul.f32 1.0, %v931
    %v933 = vadd.f32 %v528, %v129
    %v934 = vmul.f32 %v912, %v933
    %v935 = vadd.f32 %v892, %v934
    %v936 = vtanh.pop %v935
    %v937 = vsub.f32 1.0, %v932
    %v938 = vmul.f32 %v937, %v936
    %v939 = vmul.f32 %v932, %v138
    %v940 = vadd.f32 %v938, %v939
    %v941 = vpack.c.bf16 %v940, %v940
    %942 = vmatpush.bf16.msra.mxu0 %v429
    %943 = vmatpush.bf16.msra.mxu0 %v422
    %944 = vmatpush.bf16.msra.mxu0 %v415
    %945 = vmatpush.bf16.msra.mxu0 %v408
    %946 = vmatpush.bf16.msra.mxu0 %v401
    %947 = vmatpush.bf16.msra.mxu0 %v394
    %948 = vmatpush.bf16.msra.mxu0 %v387
    %949 = vmatpush.bf16.msra.mxu0 %v380
    %950 = vmatmul.bf16.gmra.mxu0 %v941
    %v951 = vpop.f32.mrf.mxu0
    %v952 = vadd.f32 0.0, %v951
    %v953 = vpop.f32.mrf.mxu0
    %954 = vdwg.mxu0
    %955 = vmatpush.bf16.msra.mxu0 %v430
    %956 = vmatpush.bf16.msra.mxu0 %v423
    %957 = vmatpush.bf16.msra.mxu0 %v416
    %958 = vmatpush.bf16.msra.mxu0 %v409
    %959 = vmatpush.bf16.msra.mxu0 %v402
    %960 = vmatpush.bf16.msra.mxu0 %v395
    %961 = vmatpush.bf16.msra.mxu0 %v388
    %962 = vmatpush.bf16.msra.mxu0 %v381
    %963 = vmatmul.bf16.gmra.mxu0 %v941
    %v964 = vpop.f32.mrf.mxu0
    %v965 = vadd.f32 0.0, %v964
    %v966 = vpop.f32.mrf.mxu0
    %967 = vdwg.mxu0
    %968 = vmatpush.bf16.msra.mxu0 %v431
    %969 = vmatpush.bf16.msra.mxu0 %v424
    %970 = vmatpush.bf16.msra.mxu0 %v417
    %971 = vmatpush.bf16.msra.mxu0 %v410
    %972 = vmatpush.bf16.msra.mxu0 %v403
    %973 = vmatpush.bf16.msra.mxu0 %v396
    %974 = vmatpush.bf16.msra.mxu0 %v389
    %975 = vmatpush.bf16.msra.mxu0 %v382
    %976 = vmatmul.bf16.gmra.mxu0 %v941
    %v977 = vpop.f32.mrf.mxu0
    %v978 = vadd.f32 0.0, %v977
    %v979 = vpop.f32.mrf.mxu0
    %980 = vdwg.mxu0
    %981 = vmatpush.bf16.msra.mxu0 %v432
    %982 = vmatpush.bf16.msra.mxu0 %v425
    %983 = vmatpush.bf16.msra.mxu0 %v418
    %984 = vmatpush.bf16.msra.mxu0 %v411
    %985 = vmatpush.bf16.msra.mxu0 %v404
    %986 = vmatpush.bf16.msra.mxu0 %v397
    %987 = vmatpush.bf16.msra.mxu0 %v390
    %988 = vmatpush.bf16.msra.mxu0 %v383
    %989 = vmatmul.bf16.gmra.mxu0 %v941
    %v990 = vpop.f32.mrf.mxu0
    %v991 = vadd.f32 0.0, %v990
    %v992 = vpop.f32.mrf.mxu0
    %993 = vdwg.mxu0
    %994 = vmatpush.bf16.msra.mxu0 %v433
    %995 = vmatpush.bf16.msra.mxu0 %v426
    %996 = vmatpush.bf16.msra.mxu0 %v419
    %997 = vmatpush.bf16.msra.mxu0 %v412
    %998 = vmatpush.bf16.msra.mxu0 %v405
    %999 = vmatpush.bf16.msra.mxu0 %v398
    %1000 = vmatpush.bf16.msra.mxu0 %v391
    %1001 = vmatpush.bf16.msra.mxu0 %v384
    %1002 = vmatmul.bf16.gmra.mxu0 %v941
    %v1003 = vpop.f32.mrf.mxu0
    %v1004 = vadd.f32 0.0, %v1003
    %v1005 = vpop.f32.mrf.mxu0
    %1006 = vdwg.mxu0
    %1007 = vmatpush.bf16.msra.mxu0 %v434
    %1008 = vmatpush.bf16.msra.mxu0 %v427
    %1009 = vmatpush.bf16.msra.mxu0 %v420
    %1010 = vmatpush.bf16.msra.mxu0 %v413
    %1011 = vmatpush.bf16.msra.mxu0 %v406
    %1012 = vmatpush.bf16.msra.mxu0 %v399
    %1013 = vmatpush.bf16.msra.mxu0 %v392
    %1014 = vmatpush.bf16.msra.mxu0 %v385
    %1015 = vmatmul.bf16.gmra.mxu0 %v941
    %v1016 = vpop.f32.mrf.mxu0
    %v1017 = vadd.f32 0.0, %v1016
    %v1018 = vpop.f32.mrf.mxu0
    %1019 = vdwg.mxu0
    %1020 = vmatpush.bf16.msra.mxu0 %v435
    %1021 = vmatpush.bf16.msra.mxu0 %v428
    %1022 = vmatpush.bf16.msra.mxu0 %v421
    %1023 = vmatpush.bf16.msra.mxu0 %v414
    %1024 = vmatpush.bf16.msra.mxu0 %v407
    %1025 = vmatpush.bf16.msra.mxu0 %v400
    %1026 = vmatpush.bf16.msra.mxu0 %v393
    %1027 = vmatpush.bf16.msra.mxu0 %v386
    %1028 = vmatmul.bf16.gmra.mxu0 %v941
    %v1029 = vpop.f32.mrf.mxu0
    %v1030 = vadd.f32 0.0, %v1029
    %v1031 = vpop.f32.mrf.mxu0
    %1032 = vdwg.mxu0
    %v1033 = vpack.c.bf16 %v888, %v888
    %1034 = vmatpush.bf16.msra.mxu0 %v739
    %1035 = vmatpush.bf16.msra.mxu0 %v735
    %1036 = vmatpush.bf16.msra.mxu0 %v731
    %1037 = vmatpush.bf16.msra.mxu0 %v727
    %1038 = vmatpush.bf16.msra.mxu0 %v723
    %1039 = vmatpush.bf16.msra.mxu0 %v719
    %1040 = vmatpush.bf16.msra.mxu0 %v715
    %1041 = vmatpush.bf16.msra.mxu0 %v711
    %1042 = vmatmul.bf16.gmra.mxu0 %v1033
    %v1043 = vpop.f32.mrf.mxu0
    %v1044 = vadd.f32 0.0, %v1043
    %v1045 = vpop.f32.mrf.mxu0
    %1046 = vdwg.mxu0
    %1047 = vmatpush.bf16.msra.mxu0 %v740
    %1048 = vmatpush.bf16.msra.mxu0 %v736
    %1049 = vmatpush.bf16.msra.mxu0 %v732
    %1050 = vmatpush.bf16.msra.mxu0 %v728
    %1051 = vmatpush.bf16.msra.mxu0 %v724
    %1052 = vmatpush.bf16.msra.mxu0 %v720
    %1053 = vmatpush.bf16.msra.mxu0 %v716
    %1054 = vmatpush.bf16.msra.mxu0 %v712
    %1055 = vmatmul.bf16.gmra.mxu0 %v1033
    %v1056 = vpop.f32.mrf.mxu0
    %v1057 = vadd.f32 0.0, %v1056
    %v1058 = vpop.f32.mrf.mxu0
    %1059 = vdwg.mxu0
    %1060 = vmatpush.bf16.msra.mxu0 %v741
    %1061 = vmatpush.bf16.msra.mxu0 %v737
    %1062 = vmatpush.bf16.msra.mxu0 %v733
    %1063 = vmatpush.bf16.msra.mxu0 %v729
    %1064 = vmatpush.bf16.msra.mxu0 %v725
    %1065 = vmatpush.bf16.msra.mxu0 %v721
    %1066 = vmatpush.bf16.msra.mxu0 %v717
    %1067 = vmatpush.bf16.msra.mxu0 %v713
    %1068 = vmatmul.bf16.gmra.mxu0 %v1033
    %v1069 = vpop.f32.mrf.mxu0
    %v1070 = vadd.f32 0.0, %v1069
    %v1071 = vpop.f32.mrf.mxu0
    %1072 = vdwg.mxu0
    %1073 = vmatpush.bf16.msra.mxu0 %v742
    %1074 = vmatpush.bf16.msra.mxu0 %v738
    %1075 = vmatpush.bf16.msra.mxu0 %v734
    %1076 = vmatpush.bf16.msra.mxu0 %v730
    %1077 = vmatpush.bf16.msra.mxu0 %v726
    %1078 = vmatpush.bf16.msra.mxu0 %v722
    %1079 = vmatpush.bf16.msra.mxu0 %v718
    %1080 = vmatpush.bf16.msra.mxu0 %v714
    %1081 = vmatmul.bf16.gmra.mxu0 %v1033
    %v1082 = vpop.f32.mrf.mxu0
    %v1083 = vadd.f32 0.0, %v1082
    %v1084 = vpop.f32.mrf.mxu0
    %1085 = vdwg.mxu0
    %v1086 = vadd.f32 %v991, %v1044
    %v1087 = vadd.f32 %v1004, %v1057
    %v1088 = vadd.f32 %v1017, %v1070
    %v1089 = vadd.f32 %v1030, %v1083
    %v1090 = vadd.f32 %v1086, %v832
    %v1091 = vadd.f32 %v1087, %v833
    %v1092 = vadd.f32 %v1088, %v834
    %v1093 = vadd.f32 %v1089, %v835
    %v1094 = vxor.u32 %v1090, 2147483648
    %v1095 = vmul.f32 %v1094, 1.442695
    %v1096 = vpow.pop %v1095
    %v1097 = vadd.f32 %v1096, 1.0
    %v1098 = vrcp.pop %v1097
    %v1099 = vmul.f32 %v1097, %v1098
    %v1100 = vsub.f32 1.0, %v1099
    %v1101 = vmul.f32 %v1098, %v1100
    %v1102 = vadd.f32 %v1098, %v1101
    %vm1103 = vweird.f32 %v1097
    %vm1104 = vweird.f32 %v1098
    %vm1105 = vmor %vm1103, %vm1104
    %v1106 = vsel %vm1105, %v1098, %v1102
    %v1107 = vand.u32 2147483647, %v1097
    %vm1108 = vcmp.eq.f32.partialorder %v1107, 8.507059e+37
    %v1109 = vand.u32 %v1097, 2147483648
    %v1110 = vor.u32 1.1754944e-38, %v1109
    %v1111 = vsel %vm1108, %v1110, %v1106
    %v1112 = vmul.f32 1.0, %v1111
    %v1113 = vxor.u32 %v1091, 2147483648
    %v1114 = vmul.f32 %v1113, 1.442695
    %v1115 = vpow.pop %v1114
    %v1116 = vadd.f32 %v1115, 1.0
    %v1117 = vrcp.pop %v1116
    %v1118 = vmul.f32 %v1116, %v1117
    %v1119 = vsub.f32 1.0, %v1118
    %v1120 = vmul.f32 %v1117, %v1119
    %v1121 = vadd.f32 %v1117, %v1120
    %vm1122 = vweird.f32 %v1116
    %vm1123 = vweird.f32 %v1117
    %vm1124 = vmor %vm1122, %vm1123
    %v1125 = vsel %vm1124, %v1117, %v1121
    %v1126 = vand.u32 2147483647, %v1116
    %vm1127 = vcmp.eq.f32.partialorder %v1126, 8.507059e+37
    %v1128 = vand.u32 %v1116, 2147483648
    %v1129 = vor.u32 1.1754944e-38, %v1128
    %v1130 = vsel %vm1127, %v1129, %v1125
    %v1131 = vmul.f32 1.0, %v1130
    %v1132 = vmul.f32 %v1112, %v1093
    %v1133 = vadd.f32 %v1092, %v1132
    %v1134 = vtanh.pop %v1133
    %v1135 = vsub.f32 1.0, %v1131
    %v1136 = vmul.f32 %v1135, %v1134
    %v1137 = vmul.f32 %v1131, %v888
    %v1138 = vadd.f32 %v1136, %v1137
    %s1139 = scalar_lea.vmem [#allocation2], 48
    %v1140 = vld [vmem:[%s1139] sm:$0xff]
    %v1141 = vld [vmem:[%s1139 + $0x8] sm:$0xff]
    %v1142 = vld [vmem:[%s1139 + $0x10] sm:$0xff]
    %v1143 = vadd.f32 %v1140, %v952
    %v1144 = vxor.u32 %v1143, 2147483648
    %v1145 = vmul.f32 %v1144, 1.442695
    %v1146 = vpow.pop %v1145
    %v1147 = vadd.f32 %v1146, 1.0
    %v1148 = vrcp.pop %v1147
    %v1149 = vmul.f32 %v1147, %v1148
    %v1150 = vsub.f32 1.0, %v1149
    %v1151 = vmul.f32 %v1148, %v1150
    %v1152 = vadd.f32 %v1148, %v1151
    %vm1153 = vweird.f32 %v1147
    %vm1154 = vweird.f32 %v1148
    %vm1155 = vmor %vm1153, %vm1154
    %v1156 = vsel %vm1155, %v1148, %v1152
    %v1157 = vand.u32 2147483647, %v1147
    %vm1158 = vcmp.eq.f32.partialorder %v1157, 8.507059e+37
    %v1159 = vand.u32 %v1147, 2147483648
    %v1160 = vor.u32 1.1754944e-38, %v1159
    %v1161 = vsel %vm1158, %v1160, %v1156
    %v1162 = vmul.f32 1.0, %v1161
    %v1163 = vadd.f32 %v1141, %v965
    %v1164 = vxor.u32 %v1163, 2147483648
    %v1165 = vmul.f32 %v1164, 1.442695
    %v1166 = vpow.pop %v1165
    %v1167 = vadd.f32 %v1166, 1.0
    %v1168 = vrcp.pop %v1167
    %v1169 = vmul.f32 %v1167, %v1168
    %v1170 = vsub.f32 1.0, %v1169
    %v1171 = vmul.f32 %v1168, %v1170
    %v1172 = vadd.f32 %v1168, %v1171
    %vm1173 = vweird.f32 %v1167
    %vm1174 = vweird.f32 %v1168
    %vm1175 = vmor %vm1173, %vm1174
    %v1176 = vsel %vm1175, %v1168, %v1172
    %v1177 = vand.u32 2147483647, %v1167
    %vm1178 = vcmp.eq.f32.partialorder %v1177, 8.507059e+37
    %v1179 = vand.u32 %v1167, 2147483648
    %v1180 = vor.u32 1.1754944e-38, %v1179
    %v1181 = vsel %vm1178, %v1180, %v1176
    %v1182 = vmul.f32 1.0, %v1181
    %v1183 = vadd.f32 %v978, %v129
    %v1184 = vmul.f32 %v1162, %v1183
    %v1185 = vadd.f32 %v1142, %v1184
    %v1186 = vtanh.pop %v1185
    %v1187 = vsub.f32 1.0, %v1182
    %v1188 = vmul.f32 %v1187, %v1186
    %v1189 = vmul.f32 %v1182, %v940
    %v1190 = vadd.f32 %v1188, %v1189
    %v1191 = vpack.c.bf16 %v1190, %v1190
    %1192 = vmatpush.bf16.msra.mxu0 %v429
    %1193 = vmatpush.bf16.msra.mxu0 %v422
    %1194 = vmatpush.bf16.msra.mxu0 %v415
    %1195 = vmatpush.bf16.msra.mxu0 %v408
    %1196 = vmatpush.bf16.msra.mxu0 %v401
    %1197 = vmatpush.bf16.msra.mxu0 %v394
    %1198 = vmatpush.bf16.msra.mxu0 %v387
    %1199 = vmatpush.bf16.msra.mxu0 %v380
    %1200 = vmatmul.bf16.gmra.mxu0 %v1191
    %v1201 = vpop.f32.mrf.mxu0
    %v1202 = vadd.f32 0.0, %v1201
    %v1203 = vpop.f32.mrf.mxu0
    %1204 = vdwg.mxu0
    %1205 = vmatpush.bf16.msra.mxu0 %v430
    %1206 = vmatpush.bf16.msra.mxu0 %v423
    %1207 = vmatpush.bf16.msra.mxu0 %v416
    %1208 = vmatpush.bf16.msra.mxu0 %v409
    %1209 = vmatpush.bf16.msra.mxu0 %v402
    %1210 = vmatpush.bf16.msra.mxu0 %v395
    %1211 = vmatpush.bf16.msra.mxu0 %v388
    %1212 = vmatpush.bf16.msra.mxu0 %v381
    %1213 = vmatmul.bf16.gmra.mxu0 %v1191
    %v1214 = vpop.f32.mrf.mxu0
    %v1215 = vadd.f32 0.0, %v1214
    %v1216 = vpop.f32.mrf.mxu0
    %1217 = vdwg.mxu0
    %1218 = vmatpush.bf16.msra.mxu0 %v431
    %1219 = vmatpush.bf16.msra.mxu0 %v424
    %1220 = vmatpush.bf16.msra.mxu0 %v417
    %1221 = vmatpush.bf16.msra.mxu0 %v410
    %1222 = vmatpush.bf16.msra.mxu0 %v403
    %1223 = vmatpush.bf16.msra.mxu0 %v396
    %1224 = vmatpush.bf16.msra.mxu0 %v389
    %1225 = vmatpush.bf16.msra.mxu0 %v382
    %1226 = vmatmul.bf16.gmra.mxu0 %v1191
    %v1227 = vpop.f32.mrf.mxu0
    %v1228 = vadd.f32 0.0, %v1227
    %v1229 = vpop.f32.mrf.mxu0
    %1230 = vdwg.mxu0
    %1231 = vmatpush.bf16.msra.mxu0 %v432
    %1232 = vmatpush.bf16.msra.mxu0 %v425
    %1233 = vmatpush.bf16.msra.mxu0 %v418
    %1234 = vmatpush.bf16.msra.mxu0 %v411
    %1235 = vmatpush.bf16.msra.mxu0 %v404
    %1236 = vmatpush.bf16.msra.mxu0 %v397
    %1237 = vmatpush.bf16.msra.mxu0 %v390
    %1238 = vmatpush.bf16.msra.mxu0 %v383
    %1239 = vmatmul.bf16.gmra.mxu0 %v1191
    %v1240 = vpop.f32.mrf.mxu0
    %v1241 = vadd.f32 0.0, %v1240
    %v1242 = vpop.f32.mrf.mxu0
    %1243 = vdwg.mxu0
    %1244 = vmatpush.bf16.msra.mxu0 %v433
    %1245 = vmatpush.bf16.msra.mxu0 %v426
    %1246 = vmatpush.bf16.msra.mxu0 %v419
    %1247 = vmatpush.bf16.msra.mxu0 %v412
    %1248 = vmatpush.bf16.msra.mxu0 %v405
    %1249 = vmatpush.bf16.msra.mxu0 %v398
    %1250 = vmatpush.bf16.msra.mxu0 %v391
    %1251 = vmatpush.bf16.msra.mxu0 %v384
    %1252 = vmatmul.bf16.gmra.mxu0 %v1191
    %v1253 = vpop.f32.mrf.mxu0
    %v1254 = vadd.f32 0.0, %v1253
    %v1255 = vpop.f32.mrf.mxu0
    %1256 = vdwg.mxu0
    %1257 = vmatpush.bf16.msra.mxu0 %v434
    %1258 = vmatpush.bf16.msra.mxu0 %v427
    %1259 = vmatpush.bf16.msra.mxu0 %v420
    %1260 = vmatpush.bf16.msra.mxu0 %v413
    %1261 = vmatpush.bf16.msra.mxu0 %v406
    %1262 = vmatpush.bf16.msra.mxu0 %v399
    %1263 = vmatpush.bf16.msra.mxu0 %v392
    %1264 = vmatpush.bf16.msra.mxu0 %v385
    %1265 = vmatmul.bf16.gmra.mxu0 %v1191
    %v1266 = vpop.f32.mrf.mxu0
    %v1267 = vadd.f32 0.0, %v1266
    %v1268 = vpop.f32.mrf.mxu0
    %1269 = vdwg.mxu0
    %1270 = vmatpush.bf16.msra.mxu0 %v435
    %1271 = vmatpush.bf16.msra.mxu0 %v428
    %1272 = vmatpush.bf16.msra.mxu0 %v421
    %1273 = vmatpush.bf16.msra.mxu0 %v414
    %1274 = vmatpush.bf16.msra.mxu0 %v407
    %1275 = vmatpush.bf16.msra.mxu0 %v400
    %1276 = vmatpush.bf16.msra.mxu0 %v393
    %1277 = vmatpush.bf16.msra.mxu0 %v386
    %1278 = vmatmul.bf16.gmra.mxu0 %v1191
    %v1279 = vpop.f32.mrf.mxu0
    %v1280 = vadd.f32 0.0, %v1279
    %v1281 = vpop.f32.mrf.mxu0
    %1282 = vdwg.mxu0
    %v1283 = vpack.c.bf16 %v1138, %v1138
    %1284 = vmatpush.bf16.msra.mxu0 %v739
    %1285 = vmatpush.bf16.msra.mxu0 %v735
    %1286 = vmatpush.bf16.msra.mxu0 %v731
    %1287 = vmatpush.bf16.msra.mxu0 %v727
    %1288 = vmatpush.bf16.msra.mxu0 %v723
    %1289 = vmatpush.bf16.msra.mxu0 %v719
    %1290 = vmatpush.bf16.msra.mxu0 %v715
    %1291 = vmatpush.bf16.msra.mxu0 %v711
    %1292 = vmatmul.bf16.gmra.mxu0 %v1283
    %v1293 = vpop.f32.mrf.mxu0
    %v1294 = vadd.f32 0.0, %v1293
    %v1295 = vpop.f32.mrf.mxu0
    %1296 = vdwg.mxu0
    %1297 = vmatpush.bf16.msra.mxu0 %v740
    %1298 = vmatpush.bf16.msra.mxu0 %v736
    %1299 = vmatpush.bf16.msra.mxu0 %v732
    %1300 = vmatpush.bf16.msra.mxu0 %v728
    %1301 = vmatpush.bf16.msra.mxu0 %v724
    %1302 = vmatpush.bf16.msra.mxu0 %v720
    %1303 = vmatpush.bf16.msra.mxu0 %v716
    %1304 = vmatpush.bf16.msra.mxu0 %v712
    %1305 = vmatmul.bf16.gmra.mxu0 %v1283
    %v1306 = vpop.f32.mrf.mxu0
    %v1307 = vadd.f32 0.0, %v1306
    %v1308 = vpop.f32.mrf.mxu0
    %1309 = vdwg.mxu0
    %1310 = vmatpush.bf16.msra.mxu0 %v741
    %1311 = vmatpush.bf16.msra.mxu0 %v737
    %1312 = vmatpush.bf16.msra.mxu0 %v733
    %1313 = vmatpush.bf16.msra.mxu0 %v729
    %1314 = vmatpush.bf16.msra.mxu0 %v725
    %1315 = vmatpush.bf16.msra.mxu0 %v721
    %1316 = vmatpush.bf16.msra.mxu0 %v717
    %1317 = vmatpush.bf16.msra.mxu0 %v713
    %1318 = vmatmul.bf16.gmra.mxu0 %v1283
    %v1319 = vpop.f32.mrf.mxu0
    %v1320 = vadd.f32 0.0, %v1319
    %v1321 = vpop.f32.mrf.mxu0
    %1322 = vdwg.mxu0
    %1323 = vmatpush.bf16.msra.mxu0 %v742
    %1324 = vmatpush.bf16.msra.mxu0 %v738
    %1325 = vmatpush.bf16.msra.mxu0 %v734
    %1326 = vmatpush.bf16.msra.mxu0 %v730
    %1327 = vmatpush.bf16.msra.mxu0 %v726
    %1328 = vmatpush.bf16.msra.mxu0 %v722
    %1329 = vmatpush.bf16.msra.mxu0 %v718
    %1330 = vmatpush.bf16.msra.mxu0 %v714
    %1331 = vmatmul.bf16.gmra.mxu0 %v1283
    %v1332 = vpop.f32.mrf.mxu0
    %v1333 = vadd.f32 0.0, %v1332
    %v1334 = vpop.f32.mrf.mxu0
    %1335 = vdwg.mxu0
    %v1336 = vadd.f32 %v1241, %v1294
    %v1337 = vadd.f32 %v1254, %v1307
    %v1338 = vadd.f32 %v1267, %v1320
    %v1339 = vadd.f32 %v1280, %v1333
    %v1340 = vadd.f32 %v1336, %v832
    %v1341 = vadd.f32 %v1337, %v833
    %v1342 = vadd.f32 %v1338, %v834
    %v1343 = vadd.f32 %v1339, %v835
    %v1344 = vxor.u32 %v1340, 2147483648
    %v1345 = vmul.f32 %v1344, 1.442695
    %v1346 = vpow.pop %v1345
    %v1347 = vadd.f32 %v1346, 1.0
    %v1348 = vrcp.pop %v1347
    %v1349 = vmul.f32 %v1347, %v1348
    %v1350 = vsub.f32 1.0, %v1349
    %v1351 = vmul.f32 %v1348, %v1350
    %v1352 = vadd.f32 %v1348, %v1351
    %vm1353 = vweird.f32 %v1347
    %vm1354 = vweird.f32 %v1348
    %vm1355 = vmor %vm1353, %vm1354
    %v1356 = vsel %vm1355, %v1348, %v1352
    %v1357 = vand.u32 2147483647, %v1347
    %vm1358 = vcmp.eq.f32.partialorder %v1357, 8.507059e+37
    %v1359 = vand.u32 %v1347, 2147483648
    %v1360 = vor.u32 1.1754944e-38, %v1359
    %v1361 = vsel %vm1358, %v1360, %v1356
    %v1362 = vmul.f32 1.0, %v1361
    %v1363 = vxor.u32 %v1341, 2147483648
    %v1364 = vmul.f32 %v1363, 1.442695
    %v1365 = vpow.pop %v1364
    %v1366 = vadd.f32 %v1365, 1.0
    %v1367 = vrcp.pop %v1366
    %v1368 = vmul.f32 %v1366, %v1367
    %v1369 = vsub.f32 1.0, %v1368
    %v1370 = vmul.f32 %v1367, %v1369
    %v1371 = vadd.f32 %v1367, %v1370
    %vm1372 = vweird.f32 %v1366
    %vm1373 = vweird.f32 %v1367
    %vm1374 = vmor %vm1372, %vm1373
    %v1375 = vsel %vm1374, %v1367, %v1371
    %v1376 = vand.u32 2147483647, %v1366
    %vm1377 = vcmp.eq.f32.partialorder %v1376, 8.507059e+37
    %v1378 = vand.u32 %v1366, 2147483648
    %v1379 = vor.u32 1.1754944e-38, %v1378
    %v1380 = vsel %vm1377, %v1379, %v1375
    %v1381 = vmul.f32 1.0, %v1380
    %v1382 = vmul.f32 %v1362, %v1343
    %v1383 = vadd.f32 %v1342, %v1382
    %v1384 = vtanh.pop %v1383
    %v1385 = vsub.f32 1.0, %v1381
    %v1386 = vmul.f32 %v1385, %v1384
    %v1387 = vmul.f32 %v1381, %v1138
    %v1388 = vadd.f32 %v1386, %v1387
    %s1389 = scalar_lea.vmem [#allocation2], 72
    %v1390 = vld [vmem:[%s1389] sm:$0xff]
    %v1391 = vld [vmem:[%s1389 + $0x8] sm:$0xff]
    %v1392 = vld [vmem:[%s1389 + $0x10] sm:$0xff]
    %v1393 = vadd.f32 %v1390, %v1202
    %v1394 = vxor.u32 %v1393, 2147483648
    %v1395 = vmul.f32 %v1394, 1.442695
    %v1396 = vpow.pop %v1395
    %v1397 = vadd.f32 %v1396, 1.0
    %v1398 = vrcp.pop %v1397
    %v1399 = vmul.f32 %v1397, %v1398
    %v1400 = vsub.f32 1.0, %v1399
    %v1401 = vmul.f32 %v1398, %v1400
    %v1402 = vadd.f32 %v1398, %v1401
    %vm1403 = vweird.f32 %v1397
    %vm1404 = vweird.f32 %v1398
    %vm1405 = vmor %vm1403, %vm1404
    %v1406 = vsel %vm1405, %v1398, %v1402
    %v1407 = vand.u32 2147483647, %v1397
    %vm1408 = vcmp.eq.f32.partialorder %v1407, 8.507059e+37
    %v1409 = vand.u32 %v1397, 2147483648
    %v1410 = vor.u32 1.1754944e-38, %v1409
    %v1411 = vsel %vm1408, %v1410, %v1406
    %v1412 = vmul.f32 1.0, %v1411
    %v1413 = vadd.f32 %v1391, %v1215
    %v1414 = vxor.u32 %v1413, 2147483648
    %v1415 = vmul.f32 %v1414, 1.442695
    %v1416 = vpow.pop %v1415
    %v1417 = vadd.f32 %v1416, 1.0
    %v1418 = vrcp.pop %v1417
    %v1419 = vmul.f32 %v1417, %v1418
    %v1420 = vsub.f32 1.0, %v1419
    %v1421 = vmul.f32 %v1418, %v1420
    %v1422 = vadd.f32 %v1418, %v1421
    %vm1423 = vweird.f32 %v1417
    %vm1424 = vweird.f32 %v1418
    %vm1425 = vmor %vm1423, %vm1424
    %v1426 = vsel %vm1425, %v1418, %v1422
    %v1427 = vand.u32 2147483647, %v1417
    %vm1428 = vcmp.eq.f32.partialorder %v1427, 8.507059e+37
    %v1429 = vand.u32 %v1417, 2147483648
    %v1430 = vor.u32 1.1754944e-38, %v1429
    %v1431 = vsel %vm1428, %v1430, %v1426
    %v1432 = vmul.f32 1.0, %v1431
    %v1433 = vadd.f32 %v1228, %v129
    %v1434 = vmul.f32 %v1412, %v1433
    %v1435 = vadd.f32 %v1392, %v1434
    %v1436 = vtanh.pop %v1435
    %v1437 = vsub.f32 1.0, %v1432
    %v1438 = vmul.f32 %v1437, %v1436
    %v1439 = vmul.f32 %v1432, %v1190
    %v1440 = vadd.f32 %v1438, %v1439
    %v1441 = vpack.c.bf16 %v1440, %v1440
    %1442 = vmatpush.bf16.msra.mxu0 %v429
    %1443 = vmatpush.bf16.msra.mxu0 %v422
    %1444 = vmatpush.bf16.msra.mxu0 %v415
    %1445 = vmatpush.bf16.msra.mxu0 %v408
    %1446 = vmatpush.bf16.msra.mxu0 %v401
    %1447 = vmatpush.bf16.msra.mxu0 %v394
    %1448 = vmatpush.bf16.msra.mxu0 %v387
    %1449 = vmatpush.bf16.msra.mxu0 %v380
    %1450 = vmatmul.bf16.gmra.mxu0 %v1441
    %v1451 = vpop.f32.mrf.mxu0
    %v1452 = vadd.f32 0.0, %v1451
    %v1453 = vpop.f32.mrf.mxu0
    %1454 = vdwg.mxu0
    %1455 = vmatpush.bf16.msra.mxu0 %v430
    %1456 = vmatpush.bf16.msra.mxu0 %v423
    %1457 = vmatpush.bf16.msra.mxu0 %v416
    %1458 = vmatpush.bf16.msra.mxu0 %v409
    %1459 = vmatpush.bf16.msra.mxu0 %v402
    %1460 = vmatpush.bf16.msra.mxu0 %v395
    %1461 = vmatpush.bf16.msra.mxu0 %v388
    %1462 = vmatpush.bf16.msra.mxu0 %v381
    %1463 = vmatmul.bf16.gmra.mxu0 %v1441
    %v1464 = vpop.f32.mrf.mxu0
    %v1465 = vadd.f32 0.0, %v1464
    %v1466 = vpop.f32.mrf.mxu0
    %1467 = vdwg.mxu0
    %1468 = vmatpush.bf16.msra.mxu0 %v431
    %1469 = vmatpush.bf16.msra.mxu0 %v424
    %1470 = vmatpush.bf16.msra.mxu0 %v417
    %1471 = vmatpush.bf16.msra.mxu0 %v410
    %1472 = vmatpush.bf16.msra.mxu0 %v403
    %1473 = vmatpush.bf16.msra.mxu0 %v396
    %1474 = vmatpush.bf16.msra.mxu0 %v389
    %1475 = vmatpush.bf16.msra.mxu0 %v382
    %1476 = vmatmul.bf16.gmra.mxu0 %v1441
    %v1477 = vpop.f32.mrf.mxu0
    %v1478 = vadd.f32 0.0, %v1477
    %v1479 = vpop.f32.mrf.mxu0
    %1480 = vdwg.mxu0
    %1481 = vmatpush.bf16.msra.mxu0 %v432
    %1482 = vmatpush.bf16.msra.mxu0 %v425
    %1483 = vmatpush.bf16.msra.mxu0 %v418
    %1484 = vmatpush.bf16.msra.mxu0 %v411
    %1485 = vmatpush.bf16.msra.mxu0 %v404
    %1486 = vmatpush.bf16.msra.mxu0 %v397
    %1487 = vmatpush.bf16.msra.mxu0 %v390
    %1488 = vmatpush.bf16.msra.mxu0 %v383
    %1489 = vmatmul.bf16.gmra.mxu0 %v1441
    %v1490 = vpop.f32.mrf.mxu0
    %v1491 = vadd.f32 0.0, %v1490
    %v1492 = vpop.f32.mrf.mxu0
    %1493 = vdwg.mxu0
    %1494 = vmatpush.bf16.msra.mxu0 %v433
    %1495 = vmatpush.bf16.msra.mxu0 %v426
    %1496 = vmatpush.bf16.msra.mxu0 %v419
    %1497 = vmatpush.bf16.msra.mxu0 %v412
    %1498 = vmatpush.bf16.msra.mxu0 %v405
    %1499 = vmatpush.bf16.msra.mxu0 %v398
    %1500 = vmatpush.bf16.msra.mxu0 %v391
    %1501 = vmatpush.bf16.msra.mxu0 %v384
    %1502 = vmatmul.bf16.gmra.mxu0 %v1441
    %v1503 = vpop.f32.mrf.mxu0
    %v1504 = vadd.f32 0.0, %v1503
    %v1505 = vpop.f32.mrf.mxu0
    %1506 = vdwg.mxu0
    %1507 = vmatpush.bf16.msra.mxu0 %v434
    %1508 = vmatpush.bf16.msra.mxu0 %v427
    %1509 = vmatpush.bf16.msra.mxu0 %v420
    %1510 = vmatpush.bf16.msra.mxu0 %v413
    %1511 = vmatpush.bf16.msra.mxu0 %v406
    %1512 = vmatpush.bf16.msra.mxu0 %v399
    %1513 = vmatpush.bf16.msra.mxu0 %v392
    %1514 = vmatpush.bf16.msra.mxu0 %v385
    %1515 = vmatmul.bf16.gmra.mxu0 %v1441
    %v1516 = vpop.f32.mrf.mxu0
    %v1517 = vadd.f32 0.0, %v1516
    %v1518 = vpop.f32.mrf.mxu0
    %1519 = vdwg.mxu0
    %1520 = vmatpush.bf16.msra.mxu0 %v435
    %1521 = vmatpush.bf16.msra.mxu0 %v428
    %1522 = vmatpush.bf16.msra.mxu0 %v421
    %1523 = vmatpush.bf16.msra.mxu0 %v414
    %1524 = vmatpush.bf16.msra.mxu0 %v407
    %1525 = vmatpush.bf16.msra.mxu0 %v400
    %1526 = vmatpush.bf16.msra.mxu0 %v393
    %1527 = vmatpush.bf16.msra.mxu0 %v386
    %1528 = vmatmul.bf16.gmra.mxu0 %v1441
    %v1529 = vpop.f32.mrf.mxu0
    %v1530 = vadd.f32 0.0, %v1529
    %v1531 = vpop.f32.mrf.mxu0
    %1532 = vdwg.mxu0
    %v1533 = vpack.c.bf16 %v1388, %v1388
    %1534 = vmatpush.bf16.msra.mxu0 %v739
    %1535 = vmatpush.bf16.msra.mxu0 %v735
    %1536 = vmatpush.bf16.msra.mxu0 %v731
    %1537 = vmatpush.bf16.msra.mxu0 %v727
    %1538 = vmatpush.bf16.msra.mxu0 %v723
    %1539 = vmatpush.bf16.msra.mxu0 %v719
    %1540 = vmatpush.bf16.msra.mxu0 %v715
    %1541 = vmatpush.bf16.msra.mxu0 %v711
    %1542 = vmatmul.bf16.gmra.mxu0 %v1533
    %v1543 = vpop.f32.mrf.mxu0
    %v1544 = vadd.f32 0.0, %v1543
    %v1545 = vpop.f32.mrf.mxu0
    %1546 = vdwg.mxu0
    %1547 = vmatpush.bf16.msra.mxu0 %v740
    %1548 = vmatpush.bf16.msra.mxu0 %v736
    %1549 = vmatpush.bf16.msra.mxu0 %v732
    %1550 = vmatpush.bf16.msra.mxu0 %v728
    %1551 = vmatpush.bf16.msra.mxu0 %v724
    %1552 = vmatpush.bf16.msra.mxu0 %v720
    %1553 = vmatpush.bf16.msra.mxu0 %v716
    %1554 = vmatpush.bf16.msra.mxu0 %v712
    %1555 = vmatmul.bf16.gmra.mxu0 %v1533
    %v1556 = vpop.f32.mrf.mxu0
    %v1557 = vadd.f32 0.0, %v1556
    %v1558 = vpop.f32.mrf.mxu0
    %1559 = vdwg.mxu0
    %1560 = vmatpush.bf16.msra.mxu0 %v741
    %1561 = vmatpush.bf16.msra.mxu0 %v737
    %1562 = vmatpush.bf16.msra.mxu0 %v733
    %1563 = vmatpush.bf16.msra.mxu0 %v729
    %1564 = vmatpush.bf16.msra.mxu0 %v725
    %1565 = vmatpush.bf16.msra.mxu0 %v721
    %1566 = vmatpush.bf16.msra.mxu0 %v717
    %1567 = vmatpush.bf16.msra.mxu0 %v713
    %1568 = vmatmul.bf16.gmra.mxu0 %v1533
    %v1569 = vpop.f32.mrf.mxu0
    %v1570 = vadd.f32 0.0, %v1569
    %v1571 = vpop.f32.mrf.mxu0
    %1572 = vdwg.mxu0
    %1573 = vmatpush.bf16.msra.mxu0 %v742
    %1574 = vmatpush.bf16.msra.mxu0 %v738
    %1575 = vmatpush.bf16.msra.mxu0 %v734
    %1576 = vmatpush.bf16.msra.mxu0 %v730
    %1577 = vmatpush.bf16.msra.mxu0 %v726
    %1578 = vmatpush.bf16.msra.mxu0 %v722
    %1579 = vmatpush.bf16.msra.mxu0 %v718
    %1580 = vmatpush.bf16.msra.mxu0 %v714
    %1581 = vmatmul.bf16.gmra.mxu0 %v1533
    %v1582 = vpop.f32.mrf.mxu0
    %v1583 = vadd.f32 0.0, %v1582
    %v1584 = vpop.f32.mrf.mxu0
    %1585 = vdwg.mxu0
    %v1586 = vadd.f32 %v1491, %v1544
    %v1587 = vadd.f32 %v1504, %v1557
    %v1588 = vadd.f32 %v1517, %v1570
    %v1589 = vadd.f32 %v1530, %v1583
    %v1590 = vadd.f32 %v1586, %v832
    %v1591 = vadd.f32 %v1587, %v833
    %v1592 = vadd.f32 %v1588, %v834
    %v1593 = vadd.f32 %v1589, %v835
    %v1594 = vxor.u32 %v1590, 2147483648
    %v1595 = vmul.f32 %v1594, 1.442695
    %v1596 = vpow.pop %v1595
    %v1597 = vadd.f32 %v1596, 1.0
    %v1598 = vrcp.pop %v1597
    %v1599 = vmul.f32 %v1597, %v1598
    %v1600 = vsub.f32 1.0, %v1599
    %v1601 = vmul.f32 %v1598, %v1600
    %v1602 = vadd.f32 %v1598, %v1601
    %vm1603 = vweird.f32 %v1597
    %vm1604 = vweird.f32 %v1598
    %vm1605 = vmor %vm1603, %vm1604
    %v1606 = vsel %vm1605, %v1598, %v1602
    %v1607 = vand.u32 2147483647, %v1597
    %vm1608 = vcmp.eq.f32.partialorder %v1607, 8.507059e+37
    %v1609 = vand.u32 %v1597, 2147483648
    %v1610 = vor.u32 1.1754944e-38, %v1609
    %v1611 = vsel %vm1608, %v1610, %v1606
    %v1612 = vmul.f32 1.0, %v1611
    %v1613 = vxor.u32 %v1591, 2147483648
    %v1614 = vmul.f32 %v1613, 1.442695
    %v1615 = vpow.pop %v1614
    %v1616 = vadd.f32 %v1615, 1.0
    %v1617 = vrcp.pop %v1616
    %v1618 = vmul.f32 %v1616, %v1617
    %v1619 = vsub.f32 1.0, %v1618
    %v1620 = vmul.f32 %v1617, %v1619
    %v1621 = vadd.f32 %v1617, %v1620
    %vm1622 = vweird.f32 %v1616
    %vm1623 = vweird.f32 %v1617
    %vm1624 = vmor %vm1622, %vm1623
    %v1625 = vsel %vm1624, %v1617, %v1621
    %v1626 = vand.u32 2147483647, %v1616
    %vm1627 = vcmp.eq.f32.partialorder %v1626, 8.507059e+37
    %v1628 = vand.u32 %v1616, 2147483648
    %v1629 = vor.u32 1.1754944e-38, %v1628
    %v1630 = vsel %vm1627, %v1629, %v1625
    %v1631 = vmul.f32 1.0, %v1630
    %v1632 = vmul.f32 %v1612, %v1593
    %v1633 = vadd.f32 %v1592, %v1632
    %v1634 = vtanh.pop %v1633
    %v1635 = vsub.f32 1.0, %v1631
    %v1636 = vmul.f32 %v1635, %v1634
    %v1637 = vmul.f32 %v1631, %v1388
    %v1638 = vadd.f32 %v1636, %v1637
    %s1639 = scalar_lea.vmem [#allocation2], 96
    %v1640 = vld [vmem:[%s1639] sm:$0xff]
    %v1641 = vld [vmem:[%s1639 + $0x8] sm:$0xff]
    %v1642 = vld [vmem:[%s1639 + $0x10] sm:$0xff]
    %v1643 = vadd.f32 %v1640, %v1452
    %v1644 = vxor.u32 %v1643, 2147483648
    %v1645 = vmul.f32 %v1644, 1.442695
    %v1646 = vpow.pop %v1645
    %v1647 = vadd.f32 %v1646, 1.0
    %v1648 = vrcp.pop %v1647
    %v1649 = vmul.f32 %v1647, %v1648
    %v1650 = vsub.f32 1.0, %v1649
    %v1651 = vmul.f32 %v1648, %v1650
    %v1652 = vadd.f32 %v1648, %v1651
    %vm1653 = vweird.f32 %v1647
    %vm1654 = vweird.f32 %v1648
    %vm1655 = vmor %vm1653, %vm1654
    %v1656 = vsel %vm1655, %v1648, %v1652
    %v1657 = vand.u32 2147483647, %v1647
    %vm1658 = vcmp.eq.f32.partialorder %v1657, 8.507059e+37
    %v1659 = vand.u32 %v1647, 2147483648
    %v1660 = vor.u32 1.1754944e-38, %v1659
    %v1661 = vsel %vm1658, %v1660, %v1656
    %v1662 = vmul.f32 1.0, %v1661
    %v1663 = vadd.f32 %v1641, %v1465
    %v1664 = vxor.u32 %v1663, 2147483648
    %v1665 = vmul.f32 %v1664, 1.442695
    %v1666 = vpow.pop %v1665
    %v1667 = vadd.f32 %v1666, 1.0
    %v1668 = vrcp.pop %v1667
    %v1669 = vmul.f32 %v1667, %v1668
    %v1670 = vsub.f32 1.0, %v1669
    %v1671 = vmul.f32 %v1668, %v1670
    %v1672 = vadd.f32 %v1668, %v1671
    %vm1673 = vweird.f32 %v1667
    %vm1674 = vweird.f32 %v1668
    %vm1675 = vmor %vm1673, %vm1674
    %v1676 = vsel %vm1675, %v1668, %v1672
    %v1677 = vand.u32 2147483647, %v1667
    %vm1678 = vcmp.eq.f32.partialorder %v1677, 8.507059e+37
    %v1679 = vand.u32 %v1667, 2147483648
    %v1680 = vor.u32 1.1754944e-38, %v1679
    %v1681 = vsel %vm1678, %v1680, %v1676
    %v1682 = vmul.f32 1.0, %v1681
    %v1683 = vadd.f32 %v1478, %v129
    %v1684 = vmul.f32 %v1662, %v1683
    %v1685 = vadd.f32 %v1642, %v1684
    %v1686 = vtanh.pop %v1685
    %v1687 = vsub.f32 1.0, %v1682
    %v1688 = vmul.f32 %v1687, %v1686
    %v1689 = vmul.f32 %v1682, %v1440
    %v1690 = vadd.f32 %v1688, %v1689
    %v1691 = vpack.c.bf16 %v1690, %v1690
    %1692 = vmatpush.bf16.msra.mxu0 %v429
    %1693 = vmatpush.bf16.msra.mxu0 %v422
    %1694 = vmatpush.bf16.msra.mxu0 %v415
    %1695 = vmatpush.bf16.msra.mxu0 %v408
    %1696 = vmatpush.bf16.msra.mxu0 %v401
    %1697 = vmatpush.bf16.msra.mxu0 %v394
    %1698 = vmatpush.bf16.msra.mxu0 %v387
    %1699 = vmatpush.bf16.msra.mxu0 %v380
    %1700 = vmatmul.bf16.gmra.mxu0 %v1691
    %v1701 = vpop.f32.mrf.mxu0
    %v1702 = vadd.f32 0.0, %v1701
    %v1703 = vpop.f32.mrf.mxu0
    %1704 = vdwg.mxu0
    %1705 = vmatpush.bf16.msra.mxu0 %v430
    %1706 = vmatpush.bf16.msra.mxu0 %v423
    %1707 = vmatpush.bf16.msra.mxu0 %v416
    %1708 = vmatpush.bf16.msra.mxu0 %v409
    %1709 = vmatpush.bf16.msra.mxu0 %v402
    %1710 = vmatpush.bf16.msra.mxu0 %v395
    %1711 = vmatpush.bf16.msra.mxu0 %v388
    %1712 = vmatpush.bf16.msra.mxu0 %v381
    %1713 = vmatmul.bf16.gmra.mxu0 %v1691
    %v1714 = vpop.f32.mrf.mxu0
    %v1715 = vadd.f32 0.0, %v1714
    %v1716 = vpop.f32.mrf.mxu0
    %1717 = vdwg.mxu0
    %1718 = vmatpush.bf16.msra.mxu0 %v431
    %1719 = vmatpush.bf16.msra.mxu0 %v424
    %1720 = vmatpush.bf16.msra.mxu0 %v417
    %1721 = vmatpush.bf16.msra.mxu0 %v410
    %1722 = vmatpush.bf16.msra.mxu0 %v403
    %1723 = vmatpush.bf16.msra.mxu0 %v396
    %1724 = vmatpush.bf16.msra.mxu0 %v389
    %1725 = vmatpush.bf16.msra.mxu0 %v382
    %1726 = vmatmul.bf16.gmra.mxu0 %v1691
    %v1727 = vpop.f32.mrf.mxu0
    %v1728 = vadd.f32 0.0, %v1727
    %v1729 = vpop.f32.mrf.mxu0
    %1730 = vdwg.mxu0
    %1731 = vmatpush.bf16.msra.mxu0 %v432
    %1732 = vmatpush.bf16.msra.mxu0 %v425
    %1733 = vmatpush.bf16.msra.mxu0 %v418
    %1734 = vmatpush.bf16.msra.mxu0 %v411
    %1735 = vmatpush.bf16.msra.mxu0 %v404
    %1736 = vmatpush.bf16.msra.mxu0 %v397
    %1737 = vmatpush.bf16.msra.mxu0 %v390
    %1738 = vmatpush.bf16.msra.mxu0 %v383
    %1739 = vmatmul.bf16.gmra.mxu0 %v1691
    %v1740 = vpop.f32.mrf.mxu0
    %v1741 = vadd.f32 0.0, %v1740
    %v1742 = vpop.f32.mrf.mxu0
    %1743 = vdwg.mxu0
    %1744 = vmatpush.bf16.msra.mxu0 %v433
    %1745 = vmatpush.bf16.msra.mxu0 %v426
    %1746 = vmatpush.bf16.msra.mxu0 %v419
    %1747 = vmatpush.bf16.msra.mxu0 %v412
    %1748 = vmatpush.bf16.msra.mxu0 %v405
    %1749 = vmatpush.bf16.msra.mxu0 %v398
    %1750 = vmatpush.bf16.msra.mxu0 %v391
    %1751 = vmatpush.bf16.msra.mxu0 %v384
    %1752 = vmatmul.bf16.gmra.mxu0 %v1691
    %v1753 = vpop.f32.mrf.mxu0
    %v1754 = vadd.f32 0.0, %v1753
    %v1755 = vpop.f32.mrf.mxu0
    %1756 = vdwg.mxu0
    %1757 = vmatpush.bf16.msra.mxu0 %v434
    %1758 = vmatpush.bf16.msra.mxu0 %v427
    %1759 = vmatpush.bf16.msra.mxu0 %v420
    %1760 = vmatpush.bf16.msra.mxu0 %v413
    %1761 = vmatpush.bf16.msra.mxu0 %v406
    %1762 = vmatpush.bf16.msra.mxu0 %v399
    %1763 = vmatpush.bf16.msra.mxu0 %v392
    %1764 = vmatpush.bf16.msra.mxu0 %v385
    %1765 = vmatmul.bf16.gmra.mxu0 %v1691
    %v1766 = vpop.f32.mrf.mxu0
    %v1767 = vadd.f32 0.0, %v1766
    %v1768 = vpop.f32.mrf.mxu0
    %1769 = vdwg.mxu0
    %1770 = vmatpush.bf16.msra.mxu0 %v435
    %1771 = vmatpush.bf16.msra.mxu0 %v428
    %1772 = vmatpush.bf16.msra.mxu0 %v421
    %1773 = vmatpush.bf16.msra.mxu0 %v414
    %1774 = vmatpush.bf16.msra.mxu0 %v407
    %1775 = vmatpush.bf16.msra.mxu0 %v400
    %1776 = vmatpush.bf16.msra.mxu0 %v393
    %1777 = vmatpush.bf16.msra.mxu0 %v386
    %1778 = vmatmul.bf16.gmra.mxu0 %v1691
    %v1779 = vpop.f32.mrf.mxu0
    %v1780 = vadd.f32 0.0, %v1779
    %v1781 = vpop.f32.mrf.mxu0
    %1782 = vdwg.mxu0
    %v1783 = vpack.c.bf16 %v1638, %v1638
    %1784 = vmatpush.bf16.msra.mxu0 %v739
    %1785 = vmatpush.bf16.msra.mxu0 %v735
    %1786 = vmatpush.bf16.msra.mxu0 %v731
    %1787 = vmatpush.bf16.msra.mxu0 %v727
    %1788 = vmatpush.bf16.msra.mxu0 %v723
    %1789 = vmatpush.bf16.msra.mxu0 %v719
    %1790 = vmatpush.bf16.msra.mxu0 %v715
    %1791 = vmatpush.bf16.msra.mxu0 %v711
    %1792 = vmatmul.bf16.gmra.mxu0 %v1783
    %v1793 = vpop.f32.mrf.mxu0
    %v1794 = vadd.f32 0.0, %v1793
    %v1795 = vpop.f32.mrf.mxu0
    %1796 = vdwg.mxu0
    %1797 = vmatpush.bf16.msra.mxu0 %v740
    %1798 = vmatpush.bf16.msra.mxu0 %v736
    %1799 = vmatpush.bf16.msra.mxu0 %v732
    %1800 = vmatpush.bf16.msra.mxu0 %v728
    %1801 = vmatpush.bf16.msra.mxu0 %v724
    %1802 = vmatpush.bf16.msra.mxu0 %v720
    %1803 = vmatpush.bf16.msra.mxu0 %v716
    %1804 = vmatpush.bf16.msra.mxu0 %v712
    %1805 = vmatmul.bf16.gmra.mxu0 %v1783
    %v1806 = vpop.f32.mrf.mxu0
    %v1807 = vadd.f32 0.0, %v1806
    %v1808 = vpop.f32.mrf.mxu0
    %1809 = vdwg.mxu0
    %1810 = vmatpush.bf16.msra.mxu0 %v741
    %1811 = vmatpush.bf16.msra.mxu0 %v737
    %1812 = vmatpush.bf16.msra.mxu0 %v733
    %1813 = vmatpush.bf16.msra.mxu0 %v729
    %1814 = vmatpush.bf16.msra.mxu0 %v725
    %1815 = vmatpush.bf16.msra.mxu0 %v721
    %1816 = vmatpush.bf16.msra.mxu0 %v717
    %1817 = vmatpush.bf16.msra.mxu0 %v713
    %1818 = vmatmul.bf16.gmra.mxu0 %v1783
    %v1819 = vpop.f32.mrf.mxu0
    %v1820 = vadd.f32 0.0, %v1819
    %v1821 = vpop.f32.mrf.mxu0
    %1822 = vdwg.mxu0
    %1823 = vmatpush.bf16.msra.mxu0 %v742
    %1824 = vmatpush.bf16.msra.mxu0 %v738
    %1825 = vmatpush.bf16.msra.mxu0 %v734
    %1826 = vmatpush.bf16.msra.mxu0 %v730
    %1827 = vmatpush.bf16.msra.mxu0 %v726
    %1828 = vmatpush.bf16.msra.mxu0 %v722
    %1829 = vmatpush.bf16.msra.mxu0 %v718
    %1830 = vmatpush.bf16.msra.mxu0 %v714
    %1831 = vmatmul.bf16.gmra.mxu0 %v1783
    %v1832 = vpop.f32.mrf.mxu0
    %v1833 = vadd.f32 0.0, %v1832
    %v1834 = vpop.f32.mrf.mxu0
    %1835 = vdwg.mxu0
    %v1836 = vadd.f32 %v1741, %v1794
    %v1837 = vadd.f32 %v1754, %v1807
    %v1838 = vadd.f32 %v1767, %v1820
    %v1839 = vadd.f32 %v1780, %v1833
    %v1840 = vadd.f32 %v1836, %v832
    %v1841 = vadd.f32 %v1837, %v833
    %v1842 = vadd.f32 %v1838, %v834
    %v1843 = vadd.f32 %v1839, %v835
    %v1844 = vxor.u32 %v1840, 2147483648
    %v1845 = vmul.f32 %v1844, 1.442695
    %v1846 = vpow.pop %v1845
    %v1847 = vadd.f32 %v1846, 1.0
    %v1848 = vrcp.pop %v1847
    %v1849 = vmul.f32 %v1847, %v1848
    %v1850 = vsub.f32 1.0, %v1849
    %v1851 = vmul.f32 %v1848, %v1850
    %v1852 = vadd.f32 %v1848, %v1851
    %vm1853 = vweird.f32 %v1847
    %vm1854 = vweird.f32 %v1848
    %vm1855 = vmor %vm1853, %vm1854
    %v1856 = vsel %vm1855, %v1848, %v1852
    %v1857 = vand.u32 2147483647, %v1847
    %vm1858 = vcmp.eq.f32.partialorder %v1857, 8.507059e+37
    %v1859 = vand.u32 %v1847, 2147483648
    %v1860 = vor.u32 1.1754944e-38, %v1859
    %v1861 = vsel %vm1858, %v1860, %v1856
    %v1862 = vmul.f32 1.0, %v1861
    %v1863 = vxor.u32 %v1841, 2147483648
    %v1864 = vmul.f32 %v1863, 1.442695
    %v1865 = vpow.pop %v1864
    %v1866 = vadd.f32 %v1865, 1.0
    %v1867 = vrcp.pop %v1866
    %v1868 = vmul.f32 %v1866, %v1867
    %v1869 = vsub.f32 1.0, %v1868
    %v1870 = vmul.f32 %v1867, %v1869
    %v1871 = vadd.f32 %v1867, %v1870
    %vm1872 = vweird.f32 %v1866
    %vm1873 = vweird.f32 %v1867
    %vm1874 = vmor %vm1872, %vm1873
    %v1875 = vsel %vm1874, %v1867, %v1871
    %v1876 = vand.u32 2147483647, %v1866
    %vm1877 = vcmp.eq.f32.partialorder %v1876, 8.507059e+37
    %v1878 = vand.u32 %v1866, 2147483648
    %v1879 = vor.u32 1.1754944e-38, %v1878
    %v1880 = vsel %vm1877, %v1879, %v1875
    %v1881 = vmul.f32 1.0, %v1880
    %v1882 = vmul.f32 %v1862, %v1843
    %v1883 = vadd.f32 %v1842, %v1882
    %v1884 = vtanh.pop %v1883
    %v1885 = vsub.f32 1.0, %v1881
    %v1886 = vmul.f32 %v1885, %v1884
    %v1887 = vmul.f32 %v1881, %v1638
    %v1888 = vadd.f32 %v1886, %v1887
    %s1889 = scalar_lea.vmem [#allocation2], 120
    %v1890 = vld [vmem:[%s1889] sm:$0xff]
    %v1891 = vld [vmem:[%s1889 + $0x8] sm:$0xff]
    %v1892 = vld [vmem:[%s1889 + $0x10] sm:$0xff]
    %v1893 = vadd.f32 %v1890, %v1702
    %v1894 = vxor.u32 %v1893, 2147483648
    %v1895 = vmul.f32 %v1894, 1.442695
    %v1896 = vpow.pop %v1895
    %v1897 = vadd.f32 %v1896, 1.0
    %v1898 = vrcp.pop %v1897
    %v1899 = vmul.f32 %v1897, %v1898
    %v1900 = vsub.f32 1.0, %v1899
    %v1901 = vmul.f32 %v1898, %v1900
    %v1902 = vadd.f32 %v1898, %v1901
    %vm1903 = vweird.f32 %v1897
    %vm1904 = vweird.f32 %v1898
    %vm1905 = vmor %vm1903, %vm1904
    %v1906 = vsel %vm1905, %v1898, %v1902
    %v1907 = vand.u32 2147483647, %v1897
    %vm1908 = vcmp.eq.f32.partialorder %v1907, 8.507059e+37
    %v1909 = vand.u32 %v1897, 2147483648
    %v1910 = vor.u32 1.1754944e-38, %v1909
    %v1911 = vsel %vm1908, %v1910, %v1906
    %v1912 = vmul.f32 1.0, %v1911
    %v1913 = vadd.f32 %v1891, %v1715
    %v1914 = vxor.u32 %v1913, 2147483648
    %v1915 = vmul.f32 %v1914, 1.442695
    %v1916 = vpow.pop %v1915
    %v1917 = vadd.f32 %v1916, 1.0
    %v1918 = vrcp.pop %v1917
    %v1919 = vmul.f32 %v1917, %v1918
    %v1920 = vsub.f32 1.0, %v1919
    %v1921 = vmul.f32 %v1918, %v1920
    %v1922 = vadd.f32 %v1918, %v1921
    %vm1923 = vweird.f32 %v1917
    %vm1924 = vweird.f32 %v1918
    %vm1925 = vmor %vm1923, %vm1924
    %v1926 = vsel %vm1925, %v1918, %v1922
    %v1927 = vand.u32 2147483647, %v1917
    %vm1928 = vcmp.eq.f32.partialorder %v1927, 8.507059e+37
    %v1929 = vand.u32 %v1917, 2147483648
    %v1930 = vor.u32 1.1754944e-38, %v1929
    %v1931 = vsel %vm1928, %v1930, %v1926
    %v1932 = vmul.f32 1.0, %v1931
    %v1933 = vadd.f32 %v1728, %v129
    %v1934 = vmul.f32 %v1912, %v1933
    %v1935 = vadd.f32 %v1892, %v1934
    %v1936 = vtanh.pop %v1935
    %v1937 = vsub.f32 1.0, %v1932
    %v1938 = vmul.f32 %v1937, %v1936
    %v1939 = vmul.f32 %v1932, %v1690
    %v1940 = vadd.f32 %v1938, %v1939
    %v1941 = vpack.c.bf16 %v1940, %v1940
    %1942 = vmatpush.bf16.msra.mxu0 %v429
    %1943 = vmatpush.bf16.msra.mxu0 %v422
    %1944 = vmatpush.bf16.msra.mxu0 %v415
    %1945 = vmatpush.bf16.msra.mxu0 %v408
    %1946 = vmatpush.bf16.msra.mxu0 %v401
    %1947 = vmatpush.bf16.msra.mxu0 %v394
    %1948 = vmatpush.bf16.msra.mxu0 %v387
    %1949 = vmatpush.bf16.msra.mxu0 %v380
    %1950 = vmatmul.bf16.gmra.mxu0 %v1941
    %v1951 = vpop.f32.mrf.mxu0
    %v1952 = vadd.f32 0.0, %v1951
    %v1953 = vpop.f32.mrf.mxu0
    %1954 = vdwg.mxu0
    %1955 = vmatpush.bf16.msra.mxu0 %v430
    %1956 = vmatpush.bf16.msra.mxu0 %v423
    %1957 = vmatpush.bf16.msra.mxu0 %v416
    %1958 = vmatpush.bf16.msra.mxu0 %v409
    %1959 = vmatpush.bf16.msra.mxu0 %v402
    %1960 = vmatpush.bf16.msra.mxu0 %v395
    %1961 = vmatpush.bf16.msra.mxu0 %v388
    %1962 = vmatpush.bf16.msra.mxu0 %v381
    %1963 = vmatmul.bf16.gmra.mxu0 %v1941
    %v1964 = vpop.f32.mrf.mxu0
    %v1965 = vadd.f32 0.0, %v1964
    %v1966 = vpop.f32.mrf.mxu0
    %1967 = vdwg.mxu0
    %1968 = vmatpush.bf16.msra.mxu0 %v431
    %1969 = vmatpush.bf16.msra.mxu0 %v424
    %1970 = vmatpush.bf16.msra.mxu0 %v417
    %1971 = vmatpush.bf16.msra.mxu0 %v410
    %1972 = vmatpush.bf16.msra.mxu0 %v403
    %1973 = vmatpush.bf16.msra.mxu0 %v396
    %1974 = vmatpush.bf16.msra.mxu0 %v389
    %1975 = vmatpush.bf16.msra.mxu0 %v382
    %1976 = vmatmul.bf16.gmra.mxu0 %v1941
    %v1977 = vpop.f32.mrf.mxu0
    %v1978 = vadd.f32 0.0, %v1977
    %v1979 = vpop.f32.mrf.mxu0
    %1980 = vdwg.mxu0
    %1981 = vmatpush.bf16.msra.mxu0 %v432
    %1982 = vmatpush.bf16.msra.mxu0 %v425
    %1983 = vmatpush.bf16.msra.mxu0 %v418
    %1984 = vmatpush.bf16.msra.mxu0 %v411
    %1985 = vmatpush.bf16.msra.mxu0 %v404
    %1986 = vmatpush.bf16.msra.mxu0 %v397
    %1987 = vmatpush.bf16.msra.mxu0 %v390
    %1988 = vmatpush.bf16.msra.mxu0 %v383
    %1989 = vmatmul.bf16.gmra.mxu0 %v1941
    %v1990 = vpop.f32.mrf.mxu0
    %v1991 = vadd.f32 0.0, %v1990
    %v1992 = vpop.f32.mrf.mxu0
    %1993 = vdwg.mxu0
    %1994 = vmatpush.bf16.msra.mxu0 %v433
    %1995 = vmatpush.bf16.msra.mxu0 %v426
    %1996 = vmatpush.bf16.msra.mxu0 %v419
    %1997 = vmatpush.bf16.msra.mxu0 %v412
    %1998 = vmatpush.bf16.msra.mxu0 %v405
    %1999 = vmatpush.bf16.msra.mxu0 %v398
    %2000 = vmatpush.bf16.msra.mxu0 %v391
    %2001 = vmatpush.bf16.msra.mxu0 %v384
    %2002 = vmatmul.bf16.gmra.mxu0 %v1941
    %v2003 = vpop.f32.mrf.mxu0
    %v2004 = vadd.f32 0.0, %v2003
    %v2005 = vpop.f32.mrf.mxu0
    %2006 = vdwg.mxu0
    %2007 = vmatpush.bf16.msra.mxu0 %v434
    %2008 = vmatpush.bf16.msra.mxu0 %v427
    %2009 = vmatpush.bf16.msra.mxu0 %v420
    %2010 = vmatpush.bf16.msra.mxu0 %v413
    %2011 = vmatpush.bf16.msra.mxu0 %v406
    %2012 = vmatpush.bf16.msra.mxu0 %v399
    %2013 = vmatpush.bf16.msra.mxu0 %v392
    %2014 = vmatpush.bf16.msra.mxu0 %v385
    %2015 = vmatmul.bf16.gmra.mxu0 %v1941
    %v2016 = vpop.f32.mrf.mxu0
    %v2017 = vadd.f32 0.0, %v2016
    %v2018 = vpop.f32.mrf.mxu0
    %2019 = vdwg.mxu0
    %2020 = vmatpush.bf16.msra.mxu0 %v435
    %2021 = vmatpush.bf16.msra.mxu0 %v428
    %2022 = vmatpush.bf16.msra.mxu0 %v421
    %2023 = vmatpush.bf16.msra.mxu0 %v414
    %2024 = vmatpush.bf16.msra.mxu0 %v407
    %2025 = vmatpush.bf16.msra.mxu0 %v400
    %2026 = vmatpush.bf16.msra.mxu0 %v393
    %2027 = vmatpush.bf16.msra.mxu0 %v386
    %2028 = vmatmul.bf16.gmra.mxu0 %v1941
    %v2029 = vpop.f32.mrf.mxu0
    %v2030 = vadd.f32 0.0, %v2029
    %v2031 = vpop.f32.mrf.mxu0
    %2032 = vdwg.mxu0
    %v2033 = vpack.c.bf16 %v1888, %v1888
    %2034 = vmatpush.bf16.msra.mxu0 %v739
    %2035 = vmatpush.bf16.msra.mxu0 %v735
    %2036 = vmatpush.bf16.msra.mxu0 %v731
    %2037 = vmatpush.bf16.msra.mxu0 %v727
    %2038 = vmatpush.bf16.msra.mxu0 %v723
    %2039 = vmatpush.bf16.msra.mxu0 %v719
    %2040 = vmatpush.bf16.msra.mxu0 %v715
    %2041 = vmatpush.bf16.msra.mxu0 %v711
    %2042 = vmatmul.bf16.gmra.mxu0 %v2033
    %v2043 = vpop.f32.mrf.mxu0
    %v2044 = vadd.f32 0.0, %v2043
    %v2045 = vpop.f32.mrf.mxu0
    %2046 = vdwg.mxu0
    %2047 = vmatpush.bf16.msra.mxu0 %v740
    %2048 = vmatpush.bf16.msra.mxu0 %v736
    %2049 = vmatpush.bf16.msra.mxu0 %v732
    %2050 = vmatpush.bf16.msra.mxu0 %v728
    %2051 = vmatpush.bf16.msra.mxu0 %v724
    %2052 = vmatpush.bf16.msra.mxu0 %v720
    %2053 = vmatpush.bf16.msra.mxu0 %v716
    %2054 = vmatpush.bf16.msra.mxu0 %v712
    %2055 = vmatmul.bf16.gmra.mxu0 %v2033
    %v2056 = vpop.f32.mrf.mxu0
    %v2057 = vadd.f32 0.0, %v2056
    %v2058 = vpop.f32.mrf.mxu0
    %2059 = vdwg.mxu0
    %2060 = vmatpush.bf16.msra.mxu0 %v741
    %2061 = vmatpush.bf16.msra.mxu0 %v737
    %2062 = vmatpush.bf16.msra.mxu0 %v733
    %2063 = vmatpush.bf16.msra.mxu0 %v729
    %2064 = vmatpush.bf16.msra.mxu0 %v725
    %2065 = vmatpush.bf16.msra.mxu0 %v721
    %2066 = vmatpush.bf16.msra.mxu0 %v717
    %2067 = vmatpush.bf16.msra.mxu0 %v713
    %2068 = vmatmul.bf16.gmra.mxu0 %v2033
    %v2069 = vpop.f32.mrf.mxu0
    %v2070 = vadd.f32 0.0, %v2069
    %v2071 = vpop.f32.mrf.mxu0
    %2072 = vdwg.mxu0
    %2073 = vmatpush.bf16.msra.mxu0 %v742
    %2074 = vmatpush.bf16.msra.mxu0 %v738
    %2075 = vmatpush.bf16.msra.mxu0 %v734
    %2076 = vmatpush.bf16.msra.mxu0 %v730
    %2077 = vmatpush.bf16.msra.mxu0 %v726
    %2078 = vmatpush.bf16.msra.mxu0 %v722
    %2079 = vmatpush.bf16.msra.mxu0 %v718
    %2080 = vmatpush.bf16.msra.mxu0 %v714
    %2081 = vmatmul.bf16.gmra.mxu0 %v2033
    %v2082 = vpop.f32.mrf.mxu0
    %v2083 = vadd.f32 0.0, %v2082
    %v2084 = vpop.f32.mrf.mxu0
    %2085 = vdwg.mxu0
    %v2086 = vadd.f32 %v1991, %v2044
    %v2087 = vadd.f32 %v2004, %v2057
    %v2088 = vadd.f32 %v2017, %v2070
    %v2089 = vadd.f32 %v2030, %v2083
    %v2090 = vadd.f32 %v2086, %v832
    %v2091 = vadd.f32 %v2087, %v833
    %v2092 = vadd.f32 %v2088, %v834
    %v2093 = vadd.f32 %v2089, %v835
    %v2094 = vxor.u32 %v2090, 2147483648
    %v2095 = vmul.f32 %v2094, 1.442695
    %v2096 = vpow.pop %v2095
    %v2097 = vadd.f32 %v2096, 1.0
    %v2098 = vrcp.pop %v2097
    %v2099 = vmul.f32 %v2097, %v2098
    %v2100 = vsub.f32 1.0, %v2099
    %v2101 = vmul.f32 %v2098, %v2100
    %v2102 = vadd.f32 %v2098, %v2101
    %vm2103 = vweird.f32 %v2097
    %vm2104 = vweird.f32 %v2098
    %vm2105 = vmor %vm2103, %vm2104
    %v2106 = vsel %vm2105, %v2098, %v2102
    %v2107 = vand.u32 2147483647, %v2097
    %vm2108 = vcmp.eq.f32.partialorder %v2107, 8.507059e+37
    %v2109 = vand.u32 %v2097, 2147483648
    %v2110 = vor.u32 1.1754944e-38, %v2109
    %v2111 = vsel %vm2108, %v2110, %v2106
    %v2112 = vmul.f32 1.0, %v2111
    %v2113 = vxor.u32 %v2091, 2147483648
    %v2114 = vmul.f32 %v2113, 1.442695
    %v2115 = vpow.pop %v2114
    %v2116 = vadd.f32 %v2115, 1.0
    %v2117 = vrcp.pop %v2116
    %v2118 = vmul.f32 %v2116, %v2117
    %v2119 = vsub.f32 1.0, %v2118
    %v2120 = vmul.f32 %v2117, %v2119
    %v2121 = vadd.f32 %v2117, %v2120
    %vm2122 = vweird.f32 %v2116
    %vm2123 = vweird.f32 %v2117
    %vm2124 = vmor %vm2122, %vm2123
    %v2125 = vsel %vm2124, %v2117, %v2121
    %v2126 = vand.u32 2147483647, %v2116
    %vm2127 = vcmp.eq.f32.partialorder %v2126, 8.507059e+37
    %v2128 = vand.u32 %v2116, 2147483648
    %v2129 = vor.u32 1.1754944e-38, %v2128
    %v2130 = vsel %vm2127, %v2129, %v2125
    %v2131 = vmul.f32 1.0, %v2130
    %v2132 = vmul.f32 %v2112, %v2093
    %v2133 = vadd.f32 %v2092, %v2132
    %v2134 = vtanh.pop %v2133
    %v2135 = vsub.f32 1.0, %v2131
    %v2136 = vmul.f32 %v2135, %v2134
    %v2137 = vmul.f32 %v2131, %v1888
    %v2138 = vadd.f32 %v2136, %v2137
    %s2139 = scalar_lea.vmem [#allocation2], 144
    %v2140 = vld [vmem:[%s2139] sm:$0xff]
    %v2141 = vld [vmem:[%s2139 + $0x8] sm:$0xff]
    %v2142 = vld [vmem:[%s2139 + $0x10] sm:$0xff]
    %v2143 = vadd.f32 %v2140, %v1952
    %v2144 = vxor.u32 %v2143, 2147483648
    %v2145 = vmul.f32 %v2144, 1.442695
    %v2146 = vpow.pop %v2145
    %v2147 = vadd.f32 %v2146, 1.0
    %v2148 = vrcp.pop %v2147
    %v2149 = vmul.f32 %v2147, %v2148
    %v2150 = vsub.f32 1.0, %v2149
    %v2151 = vmul.f32 %v2148, %v2150
    %v2152 = vadd.f32 %v2148, %v2151
    %vm2153 = vweird.f32 %v2147
    %vm2154 = vweird.f32 %v2148
    %vm2155 = vmor %vm2153, %vm2154
    %v2156 = vsel %vm2155, %v2148, %v2152
    %v2157 = vand.u32 2147483647, %v2147
    %vm2158 = vcmp.eq.f32.partialorder %v2157, 8.507059e+37
    %v2159 = vand.u32 %v2147, 2147483648
    %v2160 = vor.u32 1.1754944e-38, %v2159
    %v2161 = vsel %vm2158, %v2160, %v2156
    %v2162 = vmul.f32 1.0, %v2161
    %v2163 = vadd.f32 %v2141, %v1965
    %v2164 = vxor.u32 %v2163, 2147483648
    %v2165 = vmul.f32 %v2164, 1.442695
    %v2166 = vpow.pop %v2165
    %v2167 = vadd.f32 %v2166, 1.0
    %v2168 = vrcp.pop %v2167
    %v2169 = vmul.f32 %v2167, %v2168
    %v2170 = vsub.f32 1.0, %v2169
    %v2171 = vmul.f32 %v2168, %v2170
    %v2172 = vadd.f32 %v2168, %v2171
    %vm2173 = vweird.f32 %v2167
    %vm2174 = vweird.f32 %v2168
    %vm2175 = vmor %vm2173, %vm2174
    %v2176 = vsel %vm2175, %v2168, %v2172
    %v2177 = vand.u32 2147483647, %v2167
    %vm2178 = vcmp.eq.f32.partialorder %v2177, 8.507059e+37
    %v2179 = vand.u32 %v2167, 2147483648
    %v2180 = vor.u32 1.1754944e-38, %v2179
    %v2181 = vsel %vm2178, %v2180, %v2176
    %v2182 = vmul.f32 1.0, %v2181
    %v2183 = vadd.f32 %v1978, %v129
    %v2184 = vmul.f32 %v2162, %v2183
    %v2185 = vadd.f32 %v2142, %v2184
    %v2186 = vtanh.pop %v2185
    %v2187 = vsub.f32 1.0, %v2182
    %v2188 = vmul.f32 %v2187, %v2186
    %v2189 = vmul.f32 %v2182, %v1940
    %v2190 = vadd.f32 %v2188, %v2189
    %v2191 = vpack.c.bf16 %v2190, %v2190
    %2192 = vmatpush.bf16.msra.mxu0 %v429
    %2193 = vmatpush.bf16.msra.mxu0 %v422
    %2194 = vmatpush.bf16.msra.mxu0 %v415
    %2195 = vmatpush.bf16.msra.mxu0 %v408
    %2196 = vmatpush.bf16.msra.mxu0 %v401
    %2197 = vmatpush.bf16.msra.mxu0 %v394
    %2198 = vmatpush.bf16.msra.mxu0 %v387
    %2199 = vmatpush.bf16.msra.mxu0 %v380
    %2200 = vmatmul.bf16.gmra.mxu0 %v2191
    %v2201 = vpop.f32.mrf.mxu0
    %v2202 = vadd.f32 0.0, %v2201
    %v2203 = vpop.f32.mrf.mxu0
    %2204 = vdwg.mxu0
    %2205 = vmatpush.bf16.msra.mxu0 %v430
    %2206 = vmatpush.bf16.msra.mxu0 %v423
    %2207 = vmatpush.bf16.msra.mxu0 %v416
    %2208 = vmatpush.bf16.msra.mxu0 %v409
    %2209 = vmatpush.bf16.msra.mxu0 %v402
    %2210 = vmatpush.bf16.msra.mxu0 %v395
    %2211 = vmatpush.bf16.msra.mxu0 %v388
    %2212 = vmatpush.bf16.msra.mxu0 %v381
    %2213 = vmatmul.bf16.gmra.mxu0 %v2191
    %v2214 = vpop.f32.mrf.mxu0
    %v2215 = vadd.f32 0.0, %v2214
    %v2216 = vpop.f32.mrf.mxu0
    %2217 = vdwg.mxu0
    %2218 = vmatpush.bf16.msra.mxu0 %v431
    %2219 = vmatpush.bf16.msra.mxu0 %v424
    %2220 = vmatpush.bf16.msra.mxu0 %v417
    %2221 = vmatpush.bf16.msra.mxu0 %v410
    %2222 = vmatpush.bf16.msra.mxu0 %v403
    %2223 = vmatpush.bf16.msra.mxu0 %v396
    %2224 = vmatpush.bf16.msra.mxu0 %v389
    %2225 = vmatpush.bf16.msra.mxu0 %v382
    %2226 = vmatmul.bf16.gmra.mxu0 %v2191
    %v2227 = vpop.f32.mrf.mxu0
    %v2228 = vadd.f32 0.0, %v2227
    %v2229 = vpop.f32.mrf.mxu0
    %2230 = vdwg.mxu0
    %2231 = vmatpush.bf16.msra.mxu0 %v432
    %2232 = vmatpush.bf16.msra.mxu0 %v425
    %2233 = vmatpush.bf16.msra.mxu0 %v418
    %2234 = vmatpush.bf16.msra.mxu0 %v411
    %2235 = vmatpush.bf16.msra.mxu0 %v404
    %2236 = vmatpush.bf16.msra.mxu0 %v397
    %2237 = vmatpush.bf16.msra.mxu0 %v390
    %2238 = vmatpush.bf16.msra.mxu0 %v383
    %2239 = vmatmul.bf16.gmra.mxu0 %v2191
    %v2240 = vpop.f32.mrf.mxu0
    %v2241 = vadd.f32 0.0, %v2240
    %v2242 = vpop.f32.mrf.mxu0
    %2243 = vdwg.mxu0
    %2244 = vmatpush.bf16.msra.mxu0 %v433
    %2245 = vmatpush.bf16.msra.mxu0 %v426
    %2246 = vmatpush.bf16.msra.mxu0 %v419
    %2247 = vmatpush.bf16.msra.mxu0 %v412
    %2248 = vmatpush.bf16.msra.mxu0 %v405
    %2249 = vmatpush.bf16.msra.mxu0 %v398
    %2250 = vmatpush.bf16.msra.mxu0 %v391
    %2251 = vmatpush.bf16.msra.mxu0 %v384
    %2252 = vmatmul.bf16.gmra.mxu0 %v2191
    %v2253 = vpop.f32.mrf.mxu0
    %v2254 = vadd.f32 0.0, %v2253
    %v2255 = vpop.f32.mrf.mxu0
    %2256 = vdwg.mxu0
    %2257 = vmatpush.bf16.msra.mxu0 %v434
    %2258 = vmatpush.bf16.msra.mxu0 %v427
    %2259 = vmatpush.bf16.msra.mxu0 %v420
    %2260 = vmatpush.bf16.msra.mxu0 %v413
    %2261 = vmatpush.bf16.msra.mxu0 %v406
    %2262 = vmatpush.bf16.msra.mxu0 %v399
    %2263 = vmatpush.bf16.msra.mxu0 %v392
    %2264 = vmatpush.bf16.msra.mxu0 %v385
    %2265 = vmatmul.bf16.gmra.mxu0 %v2191
    %v2266 = vpop.f32.mrf.mxu0
    %v2267 = vadd.f32 0.0, %v2266
    %v2268 = vpop.f32.mrf.mxu0
    %2269 = vdwg.mxu0
    %2270 = vmatpush.bf16.msra.mxu0 %v435
    %2271 = vmatpush.bf16.msra.mxu0 %v428
    %2272 = vmatpush.bf16.msra.mxu0 %v421
    %2273 = vmatpush.bf16.msra.mxu0 %v414
    %2274 = vmatpush.bf16.msra.mxu0 %v407
    %2275 = vmatpush.bf16.msra.mxu0 %v400
    %2276 = vmatpush.bf16.msra.mxu0 %v393
    %2277 = vmatpush.bf16.msra.mxu0 %v386
    %2278 = vmatmul.bf16.gmra.mxu0 %v2191
    %v2279 = vpop.f32.mrf.mxu0
    %v2280 = vadd.f32 0.0, %v2279
    %v2281 = vpop.f32.mrf.mxu0
    %2282 = vdwg.mxu0
    %v2283 = vpack.c.bf16 %v2138, %v2138
    %2284 = vmatpush.bf16.msra.mxu0 %v739
    %2285 = vmatpush.bf16.msra.mxu0 %v735
    %2286 = vmatpush.bf16.msra.mxu0 %v731
    %2287 = vmatpush.bf16.msra.mxu0 %v727
    %2288 = vmatpush.bf16.msra.mxu0 %v723
    %2289 = vmatpush.bf16.msra.mxu0 %v719
    %2290 = vmatpush.bf16.msra.mxu0 %v715
    %2291 = vmatpush.bf16.msra.mxu0 %v711
    %2292 = vmatmul.bf16.gmra.mxu0 %v2283
    %v2293 = vpop.f32.mrf.mxu0
    %v2294 = vadd.f32 0.0, %v2293
    %v2295 = vpop.f32.mrf.mxu0
    %2296 = vdwg.mxu0
    %2297 = vmatpush.bf16.msra.mxu0 %v740
    %2298 = vmatpush.bf16.msra.mxu0 %v736
    %2299 = vmatpush.bf16.msra.mxu0 %v732
    %2300 = vmatpush.bf16.msra.mxu0 %v728
    %2301 = vmatpush.bf16.msra.mxu0 %v724
    %2302 = vmatpush.bf16.msra.mxu0 %v720
    %2303 = vmatpush.bf16.msra.mxu0 %v716
    %2304 = vmatpush.bf16.msra.mxu0 %v712
    %2305 = vmatmul.bf16.gmra.mxu0 %v2283
    %v2306 = vpop.f32.mrf.mxu0
    %v2307 = vadd.f32 0.0, %v2306
    %v2308 = vpop.f32.mrf.mxu0
    %2309 = vdwg.mxu0
    %2310 = vmatpush.bf16.msra.mxu0 %v741
    %2311 = vmatpush.bf16.msra.mxu0 %v737
    %2312 = vmatpush.bf16.msra.mxu0 %v733
    %2313 = vmatpush.bf16.msra.mxu0 %v729
    %2314 = vmatpush.bf16.msra.mxu0 %v725
    %2315 = vmatpush.bf16.msra.mxu0 %v721
    %2316 = vmatpush.bf16.msra.mxu0 %v717
    %2317 = vmatpush.bf16.msra.mxu0 %v713
    %2318 = vmatmul.bf16.gmra.mxu0 %v2283
    %v2319 = vpop.f32.mrf.mxu0
    %v2320 = vadd.f32 0.0, %v2319
    %v2321 = vpop.f32.mrf.mxu0
    %2322 = vdwg.mxu0
    %2323 = vmatpush.bf16.msra.mxu0 %v742
    %2324 = vmatpush.bf16.msra.mxu0 %v738
    %2325 = vmatpush.bf16.msra.mxu0 %v734
    %2326 = vmatpush.bf16.msra.mxu0 %v730
    %2327 = vmatpush.bf16.msra.mxu0 %v726
    %2328 = vmatpush.bf16.msra.mxu0 %v722
    %2329 = vmatpush.bf16.msra.mxu0 %v718
    %2330 = vmatpush.bf16.msra.mxu0 %v714
    %2331 = vmatmul.bf16.gmra.mxu0 %v2283
    %v2332 = vpop.f32.mrf.mxu0
    %v2333 = vadd.f32 0.0, %v2332
    %v2334 = vpop.f32.mrf.mxu0
    %2335 = vdwg.mxu0
    %v2336 = vadd.f32 %v2241, %v2294
    %v2337 = vadd.f32 %v2254, %v2307
    %v2338 = vadd.f32 %v2267, %v2320
    %v2339 = vadd.f32 %v2280, %v2333
    %v2340 = vadd.f32 %v2336, %v832
    %v2341 = vadd.f32 %v2337, %v833
    %v2342 = vadd.f32 %v2338, %v834
    %v2343 = vadd.f32 %v2339, %v835
    %v2344 = vxor.u32 %v2340, 2147483648
    %v2345 = vmul.f32 %v2344, 1.442695
    %v2346 = vpow.pop %v2345
    %v2347 = vadd.f32 %v2346, 1.0
    %v2348 = vrcp.pop %v2347
    %v2349 = vmul.f32 %v2347, %v2348
    %v2350 = vsub.f32 1.0, %v2349
    %v2351 = vmul.f32 %v2348, %v2350
    %v2352 = vadd.f32 %v2348, %v2351
    %vm2353 = vweird.f32 %v2347
    %vm2354 = vweird.f32 %v2348
    %vm2355 = vmor %vm2353, %vm2354
    %v2356 = vsel %vm2355, %v2348, %v2352
    %v2357 = vand.u32 2147483647, %v2347
    %vm2358 = vcmp.eq.f32.partialorder %v2357, 8.507059e+37
    %v2359 = vand.u32 %v2347, 2147483648
    %v2360 = vor.u32 1.1754944e-38, %v2359
    %v2361 = vsel %vm2358, %v2360, %v2356
    %v2362 = vmul.f32 1.0, %v2361
    %v2363 = vxor.u32 %v2341, 2147483648
    %v2364 = vmul.f32 %v2363, 1.442695
    %v2365 = vpow.pop %v2364
    %v2366 = vadd.f32 %v2365, 1.0
    %v2367 = vrcp.pop %v2366
    %v2368 = vmul.f32 %v2366, %v2367
    %v2369 = vsub.f32 1.0, %v2368
    %v2370 = vmul.f32 %v2367, %v2369
    %v2371 = vadd.f32 %v2367, %v2370
    %vm2372 = vweird.f32 %v2366
    %vm2373 = vweird.f32 %v2367
    %vm2374 = vmor %vm2372, %vm2373
    %v2375 = vsel %vm2374, %v2367, %v2371
    %v2376 = vand.u32 2147483647, %v2366
    %vm2377 = vcmp.eq.f32.partialorder %v2376, 8.507059e+37
    %v2378 = vand.u32 %v2366, 2147483648
    %v2379 = vor.u32 1.1754944e-38, %v2378
    %v2380 = vsel %vm2377, %v2379, %v2375
    %v2381 = vmul.f32 1.0, %v2380
    %v2382 = vmul.f32 %v2362, %v2343
    %v2383 = vadd.f32 %v2342, %v2382
    %v2384 = vtanh.pop %v2383
    %v2385 = vsub.f32 1.0, %v2381
    %v2386 = vmul.f32 %v2385, %v2384
    %v2387 = vmul.f32 %v2381, %v2138
    %v2388 = vadd.f32 %v2386, %v2387
    %s2389 = scalar_lea.vmem [#allocation2], 168
    %v2390 = vld [vmem:[%s2389] sm:$0xff]
    %v2391 = vld [vmem:[%s2389 + $0x8] sm:$0xff]
    %v2392 = vld [vmem:[%s2389 + $0x10] sm:$0xff]
    %v2393 = vadd.f32 %v2390, %v2202
    %v2394 = vxor.u32 %v2393, 2147483648
    %v2395 = vmul.f32 %v2394, 1.442695
    %v2396 = vpow.pop %v2395
    %v2397 = vadd.f32 %v2396, 1.0
    %v2398 = vrcp.pop %v2397
    %v2399 = vmul.f32 %v2397, %v2398
    %v2400 = vsub.f32 1.0, %v2399
    %v2401 = vmul.f32 %v2398, %v2400
    %v2402 = vadd.f32 %v2398, %v2401
    %vm2403 = vweird.f32 %v2397
    %vm2404 = vweird.f32 %v2398
    %vm2405 = vmor %vm2403, %vm2404
    %v2406 = vsel %vm2405, %v2398, %v2402
    %v2407 = vand.u32 2147483647, %v2397
    %vm2408 = vcmp.eq.f32.partialorder %v2407, 8.507059e+37
    %v2409 = vand.u32 %v2397, 2147483648
    %v2410 = vor.u32 1.1754944e-38, %v2409
    %v2411 = vsel %vm2408, %v2410, %v2406
    %v2412 = vmul.f32 1.0, %v2411
    %v2413 = vadd.f32 %v2391, %v2215
    %v2414 = vxor.u32 %v2413, 2147483648
    %v2415 = vmul.f32 %v2414, 1.442695
    %v2416 = vpow.pop %v2415
    %v2417 = vadd.f32 %v2416, 1.0
    %v2418 = vrcp.pop %v2417
    %v2419 = vmul.f32 %v2417, %v2418
    %v2420 = vsub.f32 1.0, %v2419
    %v2421 = vmul.f32 %v2418, %v2420
    %v2422 = vadd.f32 %v2418, %v2421
    %vm2423 = vweird.f32 %v2417
    %vm2424 = vweird.f32 %v2418
    %vm2425 = vmor %vm2423, %vm2424
    %v2426 = vsel %vm2425, %v2418, %v2422
    %v2427 = vand.u32 2147483647, %v2417
    %vm2428 = vcmp.eq.f32.partialorder %v2427, 8.507059e+37
    %v2429 = vand.u32 %v2417, 2147483648
    %v2430 = vor.u32 1.1754944e-38, %v2429
    %v2431 = vsel %vm2428, %v2430, %v2426
    %v2432 = vmul.f32 1.0, %v2431
    %v2433 = vadd.f32 %v2228, %v129
    %v2434 = vmul.f32 %v2412, %v2433
    %v2435 = vadd.f32 %v2392, %v2434
    %v2436 = vtanh.pop %v2435
    %v2437 = vsub.f32 1.0, %v2432
    %v2438 = vmul.f32 %v2437, %v2436
    %v2439 = vmul.f32 %v2432, %v2190
    %v2440 = vadd.f32 %v2438, %v2439
    %v2441 = vpack.c.bf16 %v2440, %v2440
    %2442 = vmatpush.bf16.msra.mxu0 %v432
    %2443 = vmatpush.bf16.msra.mxu0 %v425
    %2444 = vmatpush.bf16.msra.mxu0 %v418
    %2445 = vmatpush.bf16.msra.mxu0 %v411
    %2446 = vmatpush.bf16.msra.mxu0 %v404
    %2447 = vmatpush.bf16.msra.mxu0 %v397
    %2448 = vmatpush.bf16.msra.mxu0 %v390
    %2449 = vmatpush.bf16.msra.mxu0 %v383
    %2450 = vmatmul.bf16.gmra.mxu0 %v2441
    %v2451 = vpop.f32.mrf.mxu0
    %v2452 = vadd.f32 0.0, %v2451
    %v2453 = vpop.f32.mrf.mxu0
    %2454 = vdwg.mxu0
    %2455 = vmatpush.bf16.msra.mxu0 %v433
    %2456 = vmatpush.bf16.msra.mxu0 %v426
    %2457 = vmatpush.bf16.msra.mxu0 %v419
    %2458 = vmatpush.bf16.msra.mxu0 %v412
    %2459 = vmatpush.bf16.msra.mxu0 %v405
    %2460 = vmatpush.bf16.msra.mxu0 %v398
    %2461 = vmatpush.bf16.msra.mxu0 %v391
    %2462 = vmatpush.bf16.msra.mxu0 %v384
    %2463 = vmatmul.bf16.gmra.mxu0 %v2441
    %v2464 = vpop.f32.mrf.mxu0
    %v2465 = vadd.f32 0.0, %v2464
    %v2466 = vpop.f32.mrf.mxu0
    %2467 = vdwg.mxu0
    %2468 = vmatpush.bf16.msra.mxu0 %v434
    %2469 = vmatpush.bf16.msra.mxu0 %v427
    %2470 = vmatpush.bf16.msra.mxu0 %v420
    %2471 = vmatpush.bf16.msra.mxu0 %v413
    %2472 = vmatpush.bf16.msra.mxu0 %v406
    %2473 = vmatpush.bf16.msra.mxu0 %v399
    %2474 = vmatpush.bf16.msra.mxu0 %v392
    %2475 = vmatpush.bf16.msra.mxu0 %v385
    %2476 = vmatmul.bf16.gmra.mxu0 %v2441
    %v2477 = vpop.f32.mrf.mxu0
    %v2478 = vadd.f32 0.0, %v2477
    %v2479 = vpop.f32.mrf.mxu0
    %2480 = vdwg.mxu0
    %2481 = vmatpush.bf16.msra.mxu0 %v435
    %2482 = vmatpush.bf16.msra.mxu0 %v428
    %2483 = vmatpush.bf16.msra.mxu0 %v421
    %2484 = vmatpush.bf16.msra.mxu0 %v414
    %2485 = vmatpush.bf16.msra.mxu0 %v407
    %2486 = vmatpush.bf16.msra.mxu0 %v400
    %2487 = vmatpush.bf16.msra.mxu0 %v393
    %2488 = vmatpush.bf16.msra.mxu0 %v386
    %2489 = vmatmul.bf16.gmra.mxu0 %v2441
    %v2490 = vpop.f32.mrf.mxu0
    %v2491 = vadd.f32 0.0, %v2490
    %v2492 = vpop.f32.mrf.mxu0
    %2493 = vdwg.mxu0
    %v2494 = vpack.c.bf16 %v2388, %v2388
    %2495 = vmatpush.bf16.msra.mxu0 %v739
    %2496 = vmatpush.bf16.msra.mxu0 %v735
    %2497 = vmatpush.bf16.msra.mxu0 %v731
    %2498 = vmatpush.bf16.msra.mxu0 %v727
    %2499 = vmatpush.bf16.msra.mxu0 %v723
    %2500 = vmatpush.bf16.msra.mxu0 %v719
    %2501 = vmatpush.bf16.msra.mxu0 %v715
    %2502 = vmatpush.bf16.msra.mxu0 %v711
    %2503 = vmatmul.bf16.gmra.mxu0 %v2494
    %v2504 = vpop.f32.mrf.mxu0
    %v2505 = vadd.f32 0.0, %v2504
    %v2506 = vpop.f32.mrf.mxu0
    %2507 = vdwg.mxu0
    %2508 = vmatpush.bf16.msra.mxu0 %v740
    %2509 = vmatpush.bf16.msra.mxu0 %v736
    %2510 = vmatpush.bf16.msra.mxu0 %v732
    %2511 = vmatpush.bf16.msra.mxu0 %v728
    %2512 = vmatpush.bf16.msra.mxu0 %v724
    %2513 = vmatpush.bf16.msra.mxu0 %v720
    %2514 = vmatpush.bf16.msra.mxu0 %v716
    %2515 = vmatpush.bf16.msra.mxu0 %v712
    %2516 = vmatmul.bf16.gmra.mxu0 %v2494
    %v2517 = vpop.f32.mrf.mxu0
    %v2518 = vadd.f32 0.0, %v2517
    %v2519 = vpop.f32.mrf.mxu0
    %2520 = vdwg.mxu0
    %2521 = vmatpush.bf16.msra.mxu0 %v741
    %2522 = vmatpush.bf16.msra.mxu0 %v737
    %2523 = vmatpush.bf16.msra.mxu0 %v733
    %2524 = vmatpush.bf16.msra.mxu0 %v729
    %2525 = vmatpush.bf16.msra.mxu0 %v725
    %2526 = vmatpush.bf16.msra.mxu0 %v721
    %2527 = vmatpush.bf16.msra.mxu0 %v717
    %2528 = vmatpush.bf16.msra.mxu0 %v713
    %2529 = vmatmul.bf16.gmra.mxu0 %v2494
    %v2530 = vpop.f32.mrf.mxu0
    %v2531 = vadd.f32 0.0, %v2530
    %v2532 = vpop.f32.mrf.mxu0
    %2533 = vdwg.mxu0
    %2534 = vmatpush.bf16.msra.mxu0 %v742
    %2535 = vmatpush.bf16.msra.mxu0 %v738
    %2536 = vmatpush.bf16.msra.mxu0 %v734
    %2537 = vmatpush.bf16.msra.mxu0 %v730
    %2538 = vmatpush.bf16.msra.mxu0 %v726
    %2539 = vmatpush.bf16.msra.mxu0 %v722
    %2540 = vmatpush.bf16.msra.mxu0 %v718
    %2541 = vmatpush.bf16.msra.mxu0 %v714
    %2542 = vmatmul.bf16.gmra.mxu0 %v2494
    %v2543 = vpop.f32.mrf.mxu0
    %v2544 = vadd.f32 0.0, %v2543
    %v2545 = vpop.f32.mrf.mxu0
    %2546 = vdwg.mxu0
    %v2547 = vadd.f32 %v2452, %v2505
    %v2548 = vadd.f32 %v2465, %v2518
    %v2549 = vadd.f32 %v2478, %v2531
    %v2550 = vadd.f32 %v2491, %v2544
    %v2551 = vadd.f32 %v2547, %v832
    %v2552 = vadd.f32 %v2548, %v833
    %v2553 = vadd.f32 %v2549, %v834
    %v2554 = vadd.f32 %v2550, %v835
    %v2555 = vxor.u32 %v2551, 2147483648
    %v2556 = vmul.f32 %v2555, 1.442695
    %v2557 = vpow.pop %v2556
    %v2558 = vadd.f32 %v2557, 1.0
    %v2559 = vrcp.pop %v2558
    %v2560 = vmul.f32 %v2558, %v2559
    %v2561 = vsub.f32 1.0, %v2560
    %v2562 = vmul.f32 %v2559, %v2561
    %v2563 = vadd.f32 %v2559, %v2562
    %vm2564 = vweird.f32 %v2558
    %vm2565 = vweird.f32 %v2559
    %vm2566 = vmor %vm2564, %vm2565
    %v2567 = vsel %vm2566, %v2559, %v2563
    %v2568 = vand.u32 2147483647, %v2558
    %vm2569 = vcmp.eq.f32.partialorder %v2568, 8.507059e+37
    %v2570 = vand.u32 %v2558, 2147483648
    %v2571 = vor.u32 1.1754944e-38, %v2570
    %v2572 = vsel %vm2569, %v2571, %v2567
    %v2573 = vmul.f32 1.0, %v2572
    %v2574 = vxor.u32 %v2552, 2147483648
    %v2575 = vmul.f32 %v2574, 1.442695
    %v2576 = vpow.pop %v2575
    %v2577 = vadd.f32 %v2576, 1.0
    %v2578 = vrcp.pop %v2577
    %v2579 = vmul.f32 %v2577, %v2578
    %v2580 = vsub.f32 1.0, %v2579
    %v2581 = vmul.f32 %v2578, %v2580
    %v2582 = vadd.f32 %v2578, %v2581
    %vm2583 = vweird.f32 %v2577
    %vm2584 = vweird.f32 %v2578
    %vm2585 = vmor %vm2583, %vm2584
    %v2586 = vsel %vm2585, %v2578, %v2582
    %v2587 = vand.u32 2147483647, %v2577
    %vm2588 = vcmp.eq.f32.partialorder %v2587, 8.507059e+37
    %v2589 = vand.u32 %v2577, 2147483648
    %v2590 = vor.u32 1.1754944e-38, %v2589
    %v2591 = vsel %vm2588, %v2590, %v2586
    %v2592 = vmul.f32 1.0, %v2591
    %v2593 = vmul.f32 %v2573, %v2554
    %v2594 = vadd.f32 %v2553, %v2593
    %v2595 = vtanh.pop %v2594
    %v2596 = vsub.f32 1.0, %v2592
    %v2597 = vmul.f32 %v2596, %v2595
    %v2598 = vmul.f32 %v2592, %v2388
    %v2599 = vadd.f32 %v2597, %v2598
    %2600 = vst [vmem:[#allocation10] sm:$0xff] %v2599
    // Predicated region
    $region38: #{tpu_custom_call.1} parent=1 // pred_check
      _
    $region39: #{tpu_custom_call.1} parent=1 // pred_check_branch
      %2602 = sbr.rel (0) target = $region41
    $region40: #{tpu_custom_call.1} parent=1 // pred_region
      %2604 = vsyncadd [#allocation4], 0
      %s2606 = sshll.u32 [#allocation10], 4
      %s2607 = int_to_ptr.vmem [resolvable:$true] %s2606
      %s2608 = sshll.u32 %s5, 4
      %s2609 = int_to_ptr.hbm [resolvable:$true] %s2608
      %2611 = dma.vmem_to_hbm [thread:$0]  %s2607, 128, %s2609, [#allocation4]
    $region41: #{tpu_custom_call.1} parent=1 // pred_fallthru
      _
    // Predicated region
    $region42: #{tpu_custom_call.1} parent=1 // pred_check
      _
    $region43: #{tpu_custom_call.1} parent=1 // pred_check_branch
      %2613 = sbr.rel (0) target = $region45
    $region44: #{tpu_custom_call.1} parent=1 // pred_region
      %2615 = dma.done [#allocation4], 128
    $region45: #{tpu_custom_call.1} parent=1 // pred_fallthru
      _
    %2616 = vsyncpa [#allocation3], 1
    %2617 = vsyncpa [#allocation6], 1
    %2618 = vsyncpa [#allocation9], 1
    %2619 = vsyncpa [#allocation4], 1

</llo_original>
